<compile_context>
chip_gen: v7x
topology: tpu7x:2x2x1
jax: 0.10.0
libtpu: 0.0.40
codegen_flags: <defaults>
</compile_context>

<pallas_src>
import functools

import jax
import jax.numpy as jnp
from jax.experimental import pallas as pl
from jax.experimental.pallas import tpu as pltpu


def _round_up(n, m):
    return (n + m - 1) // m * m


# ----------------------------------------------------------------------------
# Kernel
# ----------------------------------------------------------------------------
def _armodel_kernel(
        x_ref, tgt_ref,
        w_ih_ref, b_ih_ref, w_hh_ref, b_hh_ref,
        w_dec_ref, b_dec_ref, w_lin_ref, b_lin_ref, w_gt_ref, b_gt_ref,
        out_ref,
        gi_enc_ref, gi_dec_ref, gtp_ref, hs_ref,
        *, T, L, Hp, tf, ch, unroll):
    f32 = jnp.float32
    B = x_ref.shape[1]            # batch tile (sublane-padded)
    H3 = 3 * Hp

    w_ih = w_ih_ref[...]          # (Ip, 3Hp)  gate blocks at 128-aligned cols
    b_ih = b_ih_ref[...]          # (1, 3Hp)
    w_hh = w_hh_ref[...]          # (Hp, 3Hp)
    b_hh_b = jnp.broadcast_to(b_hh_ref[...], (B, H3))   # hoisted broadcast

    def gru(gi, gh, h_cell):
        r = jax.nn.sigmoid(gi[:, 0:Hp] + gh[:, 0:Hp])
        z = jax.nn.sigmoid(gi[:, Hp:2 * Hp] + gh[:, Hp:2 * Hp])
        n = jnp.tanh(gi[:, 2 * Hp:H3] + r * gh[:, 2 * Hp:H3])
        return (1.0 - z) * n + z * h_cell

    # ---- encoder: all input-side projections in ONE matmul -----------------
    x_all = x_ref[...].reshape(T * B, -1)                       # (T*B, Ip)
    gi_enc_ref[...] = (jnp.dot(x_all, w_ih, preferred_element_type=f32)
                       + b_ih).reshape(T, B, H3)

    def enc_body(t, h):
        gh = jnp.dot(h, w_hh, preferred_element_type=f32) + b_hh_b
        return gru(gi_enc_ref[t], gh, h)

    h = jax.lax.fori_loop(0, T, enc_body, jnp.zeros((B, Hp), f32),
                          unroll=unroll)

    # ---- decoder: hoist target-side projections out of the recurrence ------
    if tf or ch:
        Lt = tgt_ref.shape[0]
        tgt_all = tgt_ref[...].reshape(Lt * B, -1)              # (Lt*B, Ip)
        if tf:
            gi_dec_ref[...] = (jnp.dot(tgt_all, w_ih, preferred_element_type=f32)
                               + b_ih).reshape(Lt, B, H3)
        if ch:
            gtp_ref[...] = (jnp.dot(tgt_all, w_gt_ref[...],
                                    preferred_element_type=f32)
                            + b_gt_ref[...]).reshape(Lt, B, Hp)

    w_dec = w_dec_ref[...]                                      # (Hp, 6Hp)
    b_dec_b = jnp.broadcast_to(b_dec_ref[...], (B, 2 * H3))

    def free_step(h):
        # Fused: [gi | gh] = h @ [W_lin@W_ih | W_hh]  (one MXU push per step).
        g = jnp.dot(h, w_dec, preferred_element_type=f32) + b_dec_b
        return gru(g[:, 0:H3], g[:, H3:2 * H3], h)

    if tf or ch:
        def dec_body(i, h):
            if tf:
                gi = gi_dec_ref[i]
            else:
                gi = (jnp.dot(h, w_dec[:, 0:H3], preferred_element_type=f32)
                      + b_dec_b[:, 0:H3])
            if ch:
                h_cell = h + gtp_ref[i]
            else:
                h_cell = h
            gh = jnp.dot(h_cell, w_hh, preferred_element_type=f32) + b_hh_b
            h_new = gru(gi, gh, h_cell)
            hs_ref[i] = h_new
            return h_new

        h = jax.lax.fori_loop(0, L - 1, dec_body, h, unroll=unroll)
        h = free_step(h)                  # last step never uses the target
        hs_ref[L - 1] = h
    else:
        def dec_body(i, h):
            h_new = free_step(h)
            hs_ref[i] = h_new
            return h_new
        h = jax.lax.fori_loop(0, L, dec_body, h, unroll=unroll)

    # ---- output head: one batched matmul + one lane-dense store ------------
    hs_all = hs_ref[...].reshape(L * B, Hp)
    outs = (jnp.dot(hs_all, w_lin_ref[...], preferred_element_type=f32)
            + b_lin_ref[...])                                    # (L*B, Ip)
    out_ref[...] = outs.reshape(L, B, -1)


# ----------------------------------------------------------------------------
# Wrapper
# ----------------------------------------------------------------------------
def _prep_params(params, I, H, Ip, Hp):
    """Pad weights to lane-aligned tiles and build fused decoder matrices."""
    f32 = jnp.float32

    def pad2(a, rows, cols):
        a = a.astype(f32)
        return jnp.pad(a, ((0, rows - a.shape[0]), (0, cols - a.shape[1])))

    def pad_gate_cols(a, rows):
        # a: (r, 3H) in PyTorch gate order [r|z|n] -> (rows, 3*Hp) where each
        # gate block starts at a lane-tile-aligned offset (multiple of Hp).
        a = a.astype(f32)
        out = jnp.zeros((rows, 3 * Hp), f32)
        for g in range(3):
            out = out.at[:a.shape[0], g * Hp:g * Hp + H].set(
                a[:, g * H:(g + 1) * H])
        return out

    w_ih = pad_gate_cols(params["w_ih"], Ip)        # (Ip, 3Hp)
    w_hh = pad_gate_cols(params["w_hh"], Hp)        # (Hp, 3Hp)
    b_ih = pad_gate_cols(params["b_ih"], 1)         # (1, 3Hp)
    b_hh = pad_gate_cols(params["b_hh"], 1)         # (1, 3Hp)
    w_lin = pad2(params["w_lin"], Hp, Ip)           # (Hp, Ip)
    b_lin = pad2(params["b_lin"], 1, Ip)            # (1, Ip)
    w_gt = pad2(params["w_gt"], Ip, Hp)             # (Ip, Hp)
    b_gt = pad2(params["b_gt"], 1, Hp)              # (1, Hp)

    hi = jax.lax.Precision.HIGHEST
    # Fold the output Linear into the next-step input projection so the
    # free-running decoder carries only h, then fuse with W_hh.
    w_li = jnp.dot(w_lin, w_ih, precision=hi)                   # (Hp, 3Hp)
    b_li = jnp.dot(b_lin, w_ih, precision=hi) + b_ih            # (1, 3Hp)
    w_dec = jnp.concatenate([w_li, w_hh], axis=1)               # (Hp, 6Hp)
    b_dec = jnp.concatenate([b_li, b_hh], axis=1)               # (1, 6Hp)
    return (w_ih, b_ih, w_hh, b_hh, w_dec, b_dec, w_lin, b_lin, w_gt, b_gt)


def armodel_forward(x, params, target_seq_len, target_seq=None,
                    teacher_forcing=False, combine_hidden_states=False,
                    batch_tile=None):
    """Pallas-backed equivalent of ARModel.forward (batch_first layout)."""
    B, T, I = x.shape
    H = params["w_hh"].shape[0]            # w_hh stored as (H, 3H)
    L = int(target_seq_len)

    Ip = _round_up(I, 128)
    Hp = _round_up(H, 128)

    has_target = target_seq is not None
    tf = bool(teacher_forcing) and has_target
    ch = bool(combine_hidden_states) and has_target

    if batch_tile is None:
        batch_tile = min(_round_up(B, 8), 128)
    Bp = _round_up(B, batch_tile)
    grid = (Bp // batch_tile,)

    f32 = jnp.float32
    # Time-major, sublane/lane padded inputs: (T, Bp, Ip).
    x_t = jnp.pad(jnp.transpose(x.astype(f32), (1, 0, 2)),
                  ((0, 0), (0, Bp - B), (0, Ip - I)))

    if tf or ch:
        need_t = max(L - 1, 1)
        tgt_t = jnp.transpose(target_seq.astype(f32), (1, 0, 2))
        pad_t = max(need_t - tgt_t.shape[0], 0)
        tgt_t = jnp.pad(tgt_t, ((0, pad_t), (0, Bp - B), (0, Ip - I)))
    else:
        # Never read by the kernel; tiny placeholder instead of a full dummy DMA.
        tgt_t = jnp.zeros((1, Bp, Ip), f32)
    Lt = tgt_t.shape[0]

    (w_ih, b_ih, w_hh, b_hh, w_dec, b_dec,
     w_lin, b_lin, w_gt, b_gt) = _prep_params(params, I, H, Ip, Hp)

    kernel = functools.partial(
        _armodel_kernel, T=T, L=L, Hp=Hp, tf=tf, ch=ch,
        unroll=(max(T, L) <= 16))

    def full_spec(shape):
        return pl.BlockSpec(shape, lambda b: (0,) * len(shape))

    def batched_spec(d0):
        return pl.BlockSpec((d0, batch_tile, Ip), lambda b: (0, b, 0))

    out_pad = pl.pallas_call(
        kernel,
        out_shape=jax.ShapeDtypeStruct((L, Bp, Ip), f32),
        grid_spec=pltpu.PrefetchScalarGridSpec(
            num_scalar_prefetch=0,
            grid=grid,
            in_specs=[
                batched_spec(T),                                  # x
                batched_spec(Lt),                                 # target
                full_spec((Ip, 3 * Hp)), full_spec((1, 3 * Hp)),  # w_ih, b_ih
                full_spec((Hp, 3 * Hp)), full_spec((1, 3 * Hp)),  # w_hh, b_hh
                full_spec((Hp, 6 * Hp)), full_spec((1, 6 * Hp)),  # w_dec, b_dec
                full_spec((Hp, Ip)), full_spec((1, Ip)),          # w_lin, b_lin
                full_spec((Ip, Hp)), full_spec((1, Hp)),          # w_gt, b_gt
            ],
            out_specs=pl.BlockSpec((L, batch_tile, Ip), lambda b: (0, b, 0)),
            scratch_shapes=[
                pltpu.VMEM((T, batch_tile, 3 * Hp), f32),               # gi_enc
                pltpu.VMEM((Lt if tf else 1, batch_tile, 3 * Hp), f32),  # gi_dec
                pltpu.VMEM((Lt if ch else 1, batch_tile, Hp), f32),      # gt proj
                pltpu.VMEM((L, batch_tile, Hp), f32),                   # hiddens
            ],
        ),
        compiler_params=pltpu.CompilerParams(
            dimension_semantics=("parallel",)),
    )(x_t, tgt_t, w_ih, b_ih, w_hh, b_hh, w_dec, b_dec,
      w_lin, b_lin, w_gt, b_gt)

    # (L, Bp, Ip) -> (B, L, I)
    return jnp.transpose(out_pad[:, :B, :I], (1, 0, 2))


# ----------------------------------------------------------------------------
# Pure-JAX reference (mirrors the PyTorch module), params & demo
# ----------------------------------------------------------------------------
def armodel_reference(x, params, target_seq_len, target_seq=None,
                      teacher_forcing=False, combine_hidden_states=False):
    B, T, I = x.shape
    H = params["w_hh"].shape[0]
    w_ih, w_hh = params["w_ih"], params["w_hh"]
    b_ih, b_hh = params["b_ih"], params["b_hh"]
    w_lin, b_lin = params["w_lin"], params["b_lin"]
    w_gt, b_gt = params["w_gt"], params["b_gt"]

    def cell(xi, h):
        gi = xi @ w_ih + b_ih
        gh = h @ w_hh + b_hh
        r = jax.nn.sigmoid(gi[:, :H] + gh[:, :H])
        z = jax.nn.sigmoid(gi[:, H:2 * H] + gh[:, H:2 * H])
        n = jnp.tanh(gi[:, 2 * H:] + r * gh[:, 2 * H:])
        return (1.0 - z) * n + z * h

    h = jnp.zeros((B, H), jnp.float32)
    for t in range(T):
        h = cell(x[:, t, :], h)

    L = int(target_seq_len)
    cur_in = h @ w_lin + b_lin
    outs = []
    for i in range(L):
        if teacher_forcing and target_seq is not None and i < L - 1:
            cur_in = target_seq[:, i, :]
        h_cell = h
        if combine_hidden_states and target_seq is not None and i < L - 1:
            h_cell = h + (target_seq[:, i, :] @ w_gt + b_gt)
        h = cell(cur_in, h_cell)
        cur_in = h @ w_lin + b_lin
        outs.append(cur_in)
    return jnp.stack(outs, axis=1)


def init_params(key, input_size, hidden_size):
    """Deterministic init mirroring nn.GRU / nn.Linear shapes.

    Weights are stored pre-transposed for row-vector matmuls (x @ W);
    biases stored as (1, N) for clean 2-D broadcasting.
    """
    I, H = input_size, hidden_size
    ks = jax.random.split(key, 8)
    scale = 0.1
    return {
        "w_ih": scale * jax.random.normal(ks[0], (I, 3 * H), jnp.float32),
        "w_hh": scale * jax.random.normal(ks[1], (H, 3 * H), jnp.float32),
        "b_ih": scale * jax.random.normal(ks[2], (1, 3 * H), jnp.float32),
        "b_hh": scale * jax.random.normal(ks[3], (1, 3 * H), jnp.float32),
        "w_lin": scale * jax.random.normal(ks[4], (H, I), jnp.float32),
        "b_lin": scale * jax.random.normal(ks[5], (1, I), jnp.float32),
        "w_gt": scale * jax.random.normal(ks[6], (I, H), jnp.float32),
        "b_gt": scale * jax.random.normal(ks[7], (1, H), jnp.float32),
    }


if __name__ == "__main__":
    key = jax.random.PRNGKey(0)
    k_param, k_x, k_tgt = jax.random.split(key, 3)

    batch = 2
    seq_len = 8          # encoder input sequence length
    input_size = 4
    hidden_size = 32
    target_seq_len = 8   # decoder output length

    params = init_params(k_param, input_size, hidden_size)
    x = jax.random.normal(k_x, (batch, seq_len, input_size), jnp.float32)
    target_seq = jax.random.normal(
        k_tgt, (batch, target_seq_len, input_size), jnp.float32)

    # Plain autoregressive decode (forward(x, L)).
    out_free = armodel_forward(x, params, target_seq_len)
    # Teacher forcing + hidden-state combination (all branches exercised).
    out_tf = armodel_forward(x, params, target_seq_len, target_seq=target_seq,
                             teacher_forcing=True, combine_hidden_states=True)
    jax.block_until_ready((out_free, out_tf))

    assert out_free.shape == (batch, target_seq_len, input_size)
    assert out_tf.shape == (batch, target_seq_len, input_size)

    # Numeric check against the pure-JAX reference of the PyTorch module.
    ref_free = armodel_reference(x, params, target_seq_len)
    ref_tf = armodel_reference(x, params, target_seq_len, target_seq,
                               teacher_forcing=True,
                               combine_hidden_states=True)
    assert bool(jnp.allclose(out_free, ref_free, atol=1e-2, rtol=1e-2))
    assert bool(jnp.allclose(out_tf, ref_tf, atol=1e-2, rtol=1e-2))

    print("KERNEL_OK")
</pallas_src>

<mosaic_0001>
module attributes {stable_mosaic.version = 11 : i64} {
  func.func @_armodel_kernel(%arg0: i32, %arg1: memref<8x8x128xf32, #tpu.memory_space<vmem>>, %arg2: memref<1x8x128xf32, #tpu.memory_space<vmem>>, %arg3: memref<128x384xf32, #tpu.memory_space<vmem>>, %arg4: memref<1x384xf32, #tpu.memory_space<vmem>>, %arg5: memref<128x384xf32, #tpu.memory_space<vmem>>, %arg6: memref<1x384xf32, #tpu.memory_space<vmem>>, %arg7: memref<128x768xf32, #tpu.memory_space<vmem>>, %arg8: memref<1x768xf32, #tpu.memory_space<vmem>>, %arg9: memref<128x128xf32, #tpu.memory_space<vmem>>, %arg10: memref<1x128xf32, #tpu.memory_space<vmem>>, %arg11: memref<128x128xf32, #tpu.memory_space<vmem>>, %arg12: memref<1x128xf32, #tpu.memory_space<vmem>>, %arg13: memref<8x8x128xf32, #tpu.memory_space<vmem>>, %arg14: memref<8x8x384xf32, #tpu.memory_space<vmem>>, %arg15: memref<1x8x384xf32, #tpu.memory_space<vmem>>, %arg16: memref<1x8x128xf32, #tpu.memory_space<vmem>>, %arg17: memref<8x8x128xf32, #tpu.memory_space<vmem>>) attributes {dimension_semantics = [#tpu.dimension_semantics<parallel>], iteration_bounds = array<i64: 1>, scalar_prefetch = 0 : i64, scratch_operands = 4 : i64, tpu.core_type = #tpu.core_type<tc>, window_params = [{transform_indices = @transform_0, window_bounds = array<i64: 8, 8, 128>}, {transform_indices = @transform_1, window_bounds = array<i64: 1, 8, 128>}, {pipeline_mode = #tpu.pipeline_mode<synchronous>, transform_indices = @transform_2, window_bounds = array<i64: 128, 384>}, {pipeline_mode = #tpu.pipeline_mode<synchronous>, transform_indices = @transform_3, window_bounds = array<i64: 1, 384>}, {pipeline_mode = #tpu.pipeline_mode<synchronous>, transform_indices = @transform_4, window_bounds = array<i64: 128, 384>}, {pipeline_mode = #tpu.pipeline_mode<synchronous>, transform_indices = @transform_5, window_bounds = array<i64: 1, 384>}, {pipeline_mode = #tpu.pipeline_mode<synchronous>, transform_indices = @transform_6, window_bounds = array<i64: 128, 768>}, {pipeline_mode = #tpu.pipeline_mode<synchronous>, transform_indices = @transform_7, window_bounds = array<i64: 1, 768>}, {pipeline_mode = #tpu.pipeline_mode<synchronous>, transform_indices = @transform_8, window_bounds = array<i64: 128, 128>}, {pipeline_mode = #tpu.pipeline_mode<synchronous>, transform_indices = @transform_9, window_bounds = array<i64: 1, 128>}, {pipeline_mode = #tpu.pipeline_mode<synchronous>, transform_indices = @transform_10, window_bounds = array<i64: 128, 128>}, {pipeline_mode = #tpu.pipeline_mode<synchronous>, transform_indices = @transform_11, window_bounds = array<i64: 1, 128>}, {transform_indices = @transform_12, window_bounds = array<i64: 8, 8, 128>}]} {
    %c0 = arith.constant 0 : index
    %c0_0 = arith.constant 0 : index
    %0 = vector.load %arg3[%c0, %c0_0] : memref<128x384xf32, #tpu.memory_space<vmem>>, vector<128x384xf32>
    %c0_1 = arith.constant 0 : index
    %c0_2 = arith.constant 0 : index
    %1 = vector.load %arg4[%c0_1, %c0_2] : memref<1x384xf32, #tpu.memory_space<vmem>>, vector<1x384xf32>
    %c0_3 = arith.constant 0 : index
    %c0_4 = arith.constant 0 : index
    %2 = vector.load %arg5[%c0_3, %c0_4] : memref<128x384xf32, #tpu.memory_space<vmem>>, vector<128x384xf32>
    %c0_5 = arith.constant 0 : index
    %c0_6 = arith.constant 0 : index
    %3 = vector.load %arg6[%c0_5, %c0_6] : memref<1x384xf32, #tpu.memory_space<vmem>>, vector<1x384xf32>
    %4 = vector.shape_cast %3 : vector<1x384xf32> to vector<1x384xf32>
    %5 = vector.broadcast %4 : vector<1x384xf32> to vector<8x384xf32>
    %c0_7 = arith.constant 0 : index
    %c0_8 = arith.constant 0 : index
    %c0_9 = arith.constant 0 : index
    %6 = vector.load %arg1[%c0_7, %c0_8, %c0_9] : memref<8x8x128xf32, #tpu.memory_space<vmem>>, vector<8x8x128xf32>
    %7 = vector.shape_cast %6 : vector<8x8x128xf32> to vector<64x128xf32>
    %cst = arith.constant dense<0.000000e+00> : vector<64x384xf32>
    %8 = tpu.matmul %7, %0, %cst {dimension_numbers = #tpu.dot_dimension_numbers<[1], [0], [0], [1], [0, 0, 1, 1], [], []>} : vector<64x128xf32>, vector<128x384xf32>, vector<64x384xf32> -> vector<64x384xf32>
    %9 = vector.broadcast %1 : vector<1x384xf32> to vector<64x384xf32>
    %10 = arith.addf %8, %9 : vector<64x384xf32>
    %11 = vector.shape_cast %10 : vector<64x384xf32> to vector<8x8x384xf32>
    %c0_10 = arith.constant 0 : index
    %c0_11 = arith.constant 0 : index
    %c0_12 = arith.constant 0 : index
    %12 = vector.load %arg14[%c0_10, %c0_11, %c0_12] : memref<8x8x384xf32, #tpu.memory_space<vmem>>, vector<8x8x384xf32>
    tpu.vector_store %arg14[%c0_10, %c0_11, %c0_12], %11 {strides = array<i32>} : memref<8x8x384xf32, #tpu.memory_space<vmem>>, vector<8x8x384xf32>,
    %cst_13 = arith.constant 0.000000e+00 : f32
    %13 = vector.broadcast %cst_13 : f32 to vector<8x128xf32>
    %c0_i32 = arith.constant 0 : i32
    %cst_14 = arith.constant dense<0.000000e+00> : vector<8x384xf32>
    %14 = tpu.matmul %13, %2, %cst_14 {dimension_numbers = #tpu.dot_dimension_numbers<[1], [0], [0], [1], [0, 0, 1, 1], [], []>} : vector<8x128xf32>, vector<128x384xf32>, vector<8x384xf32> -> vector<8x384xf32>
    %15 = arith.addf %14, %5 : vector<8x384xf32>
    %16 = arith.index_cast %c0_i32 : i32 to index
    %c0_15 = arith.constant 0 : index
    %c0_16 = arith.constant 0 : index
    %17 = vector.load %arg14[%16, %c0_15, %c0_16] : memref<8x8x384xf32, #tpu.memory_space<vmem>>, vector<1x8x384xf32>
    %18 = vector.shape_cast %17 : vector<1x8x384xf32> to vector<8x384xf32>
    %19 = vector.extract_strided_slice %18 {offsets = [0, 0], sizes = [8, 128], strides = [1, 1]} : vector<8x384xf32> to vector<8x128xf32>
    %20 = vector.extract_strided_slice %15 {offsets = [0, 0], sizes = [8, 128], strides = [1, 1]} : vector<8x384xf32> to vector<8x128xf32>
    %21 = arith.addf %19, %20 : vector<8x128xf32>
    %22 = arith.negf %21 : vector<8x128xf32>
    %23 = math.exp %22 : vector<8x128xf32>
    %cst_17 = arith.constant 1.000000e+00 : f32
    %24 = vector.broadcast %cst_17 : f32 to vector<8x128xf32>
    %25 = arith.addf %24, %23 : vector<8x128xf32>
    %26 = arith.divf %24, %25 : vector<8x128xf32>
    %27 = vector.extract_strided_slice %18 {offsets = [0, 128], sizes = [8, 128], strides = [1, 1]} : vector<8x384xf32> to vector<8x128xf32>
    %28 = vector.extract_strided_slice %15 {offsets = [0, 128], sizes = [8, 128], strides = [1, 1]} : vector<8x384xf32> to vector<8x128xf32>
    %29 = arith.addf %27, %28 : vector<8x128xf32>
    %30 = arith.negf %29 : vector<8x128xf32>
    %31 = math.exp %30 : vector<8x128xf32>
    %cst_18 = arith.constant 1.000000e+00 : f32
    %32 = vector.broadcast %cst_18 : f32 to vector<8x128xf32>
    %33 = arith.addf %32, %31 : vector<8x128xf32>
    %34 = arith.divf %32, %33 : vector<8x128xf32>
    %35 = vector.extract_strided_slice %18 {offsets = [0, 256], sizes = [8, 128], strides = [1, 1]} : vector<8x384xf32> to vector<8x128xf32>
    %36 = vector.extract_strided_slice %15 {offsets = [0, 256], sizes = [8, 128], strides = [1, 1]} : vector<8x384xf32> to vector<8x128xf32>
    %37 = arith.mulf %26, %36 : vector<8x128xf32>
    %38 = arith.addf %35, %37 : vector<8x128xf32>
    %39 = math.tanh %38 : vector<8x128xf32>
    %cst_19 = arith.constant 1.000000e+00 : f32
    %40 = vector.broadcast %cst_19 : f32 to vector<8x128xf32>
    %41 = arith.subf %40, %34 : vector<8x128xf32>
    %42 = arith.mulf %41, %39 : vector<8x128xf32>
    %43 = arith.mulf %34, %13 : vector<8x128xf32>
    %44 = arith.addf %42, %43 : vector<8x128xf32>
    %c1_i32 = arith.constant 1 : i32
    %cst_20 = arith.constant dense<0.000000e+00> : vector<8x384xf32>
    %45 = tpu.matmul %44, %2, %cst_20 {dimension_numbers = #tpu.dot_dimension_numbers<[1], [0], [0], [1], [0, 0, 1, 1], [], []>} : vector<8x128xf32>, vector<128x384xf32>, vector<8x384xf32> -> vector<8x384xf32>
    %46 = arith.addf %45, %5 : vector<8x384xf32>
    %47 = arith.index_cast %c1_i32 : i32 to index
    %c0_21 = arith.constant 0 : index
    %c0_22 = arith.constant 0 : index
    %48 = vector.load %arg14[%47, %c0_21, %c0_22] : memref<8x8x384xf32, #tpu.memory_space<vmem>>, vector<1x8x384xf32>
    %49 = vector.shape_cast %48 : vector<1x8x384xf32> to vector<8x384xf32>
    %50 = vector.extract_strided_slice %49 {offsets = [0, 0], sizes = [8, 128], strides = [1, 1]} : vector<8x384xf32> to vector<8x128xf32>
    %51 = vector.extract_strided_slice %46 {offsets = [0, 0], sizes = [8, 128], strides = [1, 1]} : vector<8x384xf32> to vector<8x128xf32>
    %52 = arith.addf %50, %51 : vector<8x128xf32>
    %53 = arith.negf %52 : vector<8x128xf32>
    %54 = math.exp %53 : vector<8x128xf32>
    %cst_23 = arith.constant 1.000000e+00 : f32
    %55 = vector.broadcast %cst_23 : f32 to vector<8x128xf32>
    %56 = arith.addf %55, %54 : vector<8x128xf32>
    %57 = arith.divf %55, %56 : vector<8x128xf32>
    %58 = vector.extract_strided_slice %49 {offsets = [0, 128], sizes = [8, 128], strides = [1, 1]} : vector<8x384xf32> to vector<8x128xf32>
    %59 = vector.extract_strided_slice %46 {offsets = [0, 128], sizes = [8, 128], strides = [1, 1]} : vector<8x384xf32> to vector<8x128xf32>
    %60 = arith.addf %58, %59 : vector<8x128xf32>
    %61 = arith.negf %60 : vector<8x128xf32>
    %62 = math.exp %61 : vector<8x128xf32>
    %cst_24 = arith.constant 1.000000e+00 : f32
    %63 = vector.broadcast %cst_24 : f32 to vector<8x128xf32>
    %64 = arith.addf %63, %62 : vector<8x128xf32>
    %65 = arith.divf %63, %64 : vector<8x128xf32>
    %66 = vector.extract_strided_slice %49 {offsets = [0, 256], sizes = [8, 128], strides = [1, 1]} : vector<8x384xf32> to vector<8x128xf32>
    %67 = vector.extract_strided_slice %46 {offsets = [0, 256], sizes = [8, 128], strides = [1, 1]} : vector<8x384xf32> to vector<8x128xf32>
    %68 = arith.mulf %57, %67 : vector<8x128xf32>
    %69 = arith.addf %66, %68 : vector<8x128xf32>
    %70 = math.tanh %69 : vector<8x128xf32>
    %cst_25 = arith.constant 1.000000e+00 : f32
    %71 = vector.broadcast %cst_25 : f32 to vector<8x128xf32>
    %72 = arith.subf %71, %65 : vector<8x128xf32>
    %73 = arith.mulf %72, %70 : vector<8x128xf32>
    %74 = arith.mulf %65, %44 : vector<8x128xf32>
    %75 = arith.addf %73, %74 : vector<8x128xf32>
    %c2_i32 = arith.constant 2 : i32
    %cst_26 = arith.constant dense<0.000000e+00> : vector<8x384xf32>
    %76 = tpu.matmul %75, %2, %cst_26 {dimension_numbers = #tpu.dot_dimension_numbers<[1], [0], [0], [1], [0, 0, 1, 1], [], []>} : vector<8x128xf32>, vector<128x384xf32>, vector<8x384xf32> -> vector<8x384xf32>
    %77 = arith.addf %76, %5 : vector<8x384xf32>
    %78 = arith.index_cast %c2_i32 : i32 to index
    %c0_27 = arith.constant 0 : index
    %c0_28 = arith.constant 0 : index
    %79 = vector.load %arg14[%78, %c0_27, %c0_28] : memref<8x8x384xf32, #tpu.memory_space<vmem>>, vector<1x8x384xf32>
    %80 = vector.shape_cast %79 : vector<1x8x384xf32> to vector<8x384xf32>
    %81 = vector.extract_strided_slice %80 {offsets = [0, 0], sizes = [8, 128], strides = [1, 1]} : vector<8x384xf32> to vector<8x128xf32>
    %82 = vector.extract_strided_slice %77 {offsets = [0, 0], sizes = [8, 128], strides = [1, 1]} : vector<8x384xf32> to vector<8x128xf32>
    %83 = arith.addf %81, %82 : vector<8x128xf32>
    %84 = arith.negf %83 : vector<8x128xf32>
    %85 = math.exp %84 : vector<8x128xf32>
    %cst_29 = arith.constant 1.000000e+00 : f32
    %86 = vector.broadcast %cst_29 : f32 to vector<8x128xf32>
    %87 = arith.addf %86, %85 : vector<8x128xf32>
    %88 = arith.divf %86, %87 : vector<8x128xf32>
    %89 = vector.extract_strided_slice %80 {offsets = [0, 128], sizes = [8, 128], strides = [1, 1]} : vector<8x384xf32> to vector<8x128xf32>
    %90 = vector.extract_strided_slice %77 {offsets = [0, 128], sizes = [8, 128], strides = [1, 1]} : vector<8x384xf32> to vector<8x128xf32>
    %91 = arith.addf %89, %90 : vector<8x128xf32>
    %92 = arith.negf %91 : vector<8x128xf32>
    %93 = math.exp %92 : vector<8x128xf32>
    %cst_30 = arith.constant 1.000000e+00 : f32
    %94 = vector.broadcast %cst_30 : f32 to vector<8x128xf32>
    %95 = arith.addf %94, %93 : vector<8x128xf32>
    %96 = arith.divf %94, %95 : vector<8x128xf32>
    %97 = vector.extract_strided_slice %80 {offsets = [0, 256], sizes = [8, 128], strides = [1, 1]} : vector<8x384xf32> to vector<8x128xf32>
    %98 = vector.extract_strided_slice %77 {offsets = [0, 256], sizes = [8, 128], strides = [1, 1]} : vector<8x384xf32> to vector<8x128xf32>
    %99 = arith.mulf %88, %98 : vector<8x128xf32>
    %100 = arith.addf %97, %99 : vector<8x128xf32>
    %101 = math.tanh %100 : vector<8x128xf32>
    %cst_31 = arith.constant 1.000000e+00 : f32
    %102 = vector.broadcast %cst_31 : f32 to vector<8x128xf32>
    %103 = arith.subf %102, %96 : vector<8x128xf32>
    %104 = arith.mulf %103, %101 : vector<8x128xf32>
    %105 = arith.mulf %96, %75 : vector<8x128xf32>
    %106 = arith.addf %104, %105 : vector<8x128xf32>
    %c3_i32 = arith.constant 3 : i32
    %cst_32 = arith.constant dense<0.000000e+00> : vector<8x384xf32>
    %107 = tpu.matmul %106, %2, %cst_32 {dimension_numbers = #tpu.dot_dimension_numbers<[1], [0], [0], [1], [0, 0, 1, 1], [], []>} : vector<8x128xf32>, vector<128x384xf32>, vector<8x384xf32> -> vector<8x384xf32>
    %108 = arith.addf %107, %5 : vector<8x384xf32>
    %109 = arith.index_cast %c3_i32 : i32 to index
    %c0_33 = arith.constant 0 : index
    %c0_34 = arith.constant 0 : index
    %110 = vector.load %arg14[%109, %c0_33, %c0_34] : memref<8x8x384xf32, #tpu.memory_space<vmem>>, vector<1x8x384xf32>
    %111 = vector.shape_cast %110 : vector<1x8x384xf32> to vector<8x384xf32>
    %112 = vector.extract_strided_slice %111 {offsets = [0, 0], sizes = [8, 128], strides = [1, 1]} : vector<8x384xf32> to vector<8x128xf32>
    %113 = vector.extract_strided_slice %108 {offsets = [0, 0], sizes = [8, 128], strides = [1, 1]} : vector<8x384xf32> to vector<8x128xf32>
    %114 = arith.addf %112, %113 : vector<8x128xf32>
    %115 = arith.negf %114 : vector<8x128xf32>
    %116 = math.exp %115 : vector<8x128xf32>
    %cst_35 = arith.constant 1.000000e+00 : f32
    %117 = vector.broadcast %cst_35 : f32 to vector<8x128xf32>
    %118 = arith.addf %117, %116 : vector<8x128xf32>
    %119 = arith.divf %117, %118 : vector<8x128xf32>
    %120 = vector.extract_strided_slice %111 {offsets = [0, 128], sizes = [8, 128], strides = [1, 1]} : vector<8x384xf32> to vector<8x128xf32>
    %121 = vector.extract_strided_slice %108 {offsets = [0, 128], sizes = [8, 128], strides = [1, 1]} : vector<8x384xf32> to vector<8x128xf32>
    %122 = arith.addf %120, %121 : vector<8x128xf32>
    %123 = arith.negf %122 : vector<8x128xf32>
    %124 = math.exp %123 : vector<8x128xf32>
    %cst_36 = arith.constant 1.000000e+00 : f32
    %125 = vector.broadcast %cst_36 : f32 to vector<8x128xf32>
    %126 = arith.addf %125, %124 : vector<8x128xf32>
    %127 = arith.divf %125, %126 : vector<8x128xf32>
    %128 = vector.extract_strided_slice %111 {offsets = [0, 256], sizes = [8, 128], strides = [1, 1]} : vector<8x384xf32> to vector<8x128xf32>
    %129 = vector.extract_strided_slice %108 {offsets = [0, 256], sizes = [8, 128], strides = [1, 1]} : vector<8x384xf32> to vector<8x128xf32>
    %130 = arith.mulf %119, %129 : vector<8x128xf32>
    %131 = arith.addf %128, %130 : vector<8x128xf32>
    %132 = math.tanh %131 : vector<8x128xf32>
    %cst_37 = arith.constant 1.000000e+00 : f32
    %133 = vector.broadcast %cst_37 : f32 to vector<8x128xf32>
    %134 = arith.subf %133, %127 : vector<8x128xf32>
    %135 = arith.mulf %134, %132 : vector<8x128xf32>
    %136 = arith.mulf %127, %106 : vector<8x128xf32>
    %137 = arith.addf %135, %136 : vector<8x128xf32>
    %c4_i32 = arith.constant 4 : i32
    %cst_38 = arith.constant dense<0.000000e+00> : vector<8x384xf32>
    %138 = tpu.matmul %137, %2, %cst_38 {dimension_numbers = #tpu.dot_dimension_numbers<[1], [0], [0], [1], [0, 0, 1, 1], [], []>} : vector<8x128xf32>, vector<128x384xf32>, vector<8x384xf32> -> vector<8x384xf32>
    %139 = arith.addf %138, %5 : vector<8x384xf32>
    %140 = arith.index_cast %c4_i32 : i32 to index
    %c0_39 = arith.constant 0 : index
    %c0_40 = arith.constant 0 : index
    %141 = vector.load %arg14[%140, %c0_39, %c0_40] : memref<8x8x384xf32, #tpu.memory_space<vmem>>, vector<1x8x384xf32>
    %142 = vector.shape_cast %141 : vector<1x8x384xf32> to vector<8x384xf32>
    %143 = vector.extract_strided_slice %142 {offsets = [0, 0], sizes = [8, 128], strides = [1, 1]} : vector<8x384xf32> to vector<8x128xf32>
    %144 = vector.extract_strided_slice %139 {offsets = [0, 0], sizes = [8, 128], strides = [1, 1]} : vector<8x384xf32> to vector<8x128xf32>
    %145 = arith.addf %143, %144 : vector<8x128xf32>
    %146 = arith.negf %145 : vector<8x128xf32>
    %147 = math.exp %146 : vector<8x128xf32>
    %cst_41 = arith.constant 1.000000e+00 : f32
    %148 = vector.broadcast %cst_41 : f32 to vector<8x128xf32>
    %149 = arith.addf %148, %147 : vector<8x128xf32>
    %150 = arith.divf %148, %149 : vector<8x128xf32>
    %151 = vector.extract_strided_slice %142 {offsets = [0, 128], sizes = [8, 128], strides = [1, 1]} : vector<8x384xf32> to vector<8x128xf32>
    %152 = vector.extract_strided_slice %139 {offsets = [0, 128], sizes = [8, 128], strides = [1, 1]} : vector<8x384xf32> to vector<8x128xf32>
    %153 = arith.addf %151, %152 : vector<8x128xf32>
    %154 = arith.negf %153 : vector<8x128xf32>
    %155 = math.exp %154 : vector<8x128xf32>
    %cst_42 = arith.constant 1.000000e+00 : f32
    %156 = vector.broadcast %cst_42 : f32 to vector<8x128xf32>
    %157 = arith.addf %156, %155 : vector<8x128xf32>
    %158 = arith.divf %156, %157 : vector<8x128xf32>
    %159 = vector.extract_strided_slice %142 {offsets = [0, 256], sizes = [8, 128], strides = [1, 1]} : vector<8x384xf32> to vector<8x128xf32>
    %160 = vector.extract_strided_slice %139 {offsets = [0, 256], sizes = [8, 128], strides = [1, 1]} : vector<8x384xf32> to vector<8x128xf32>
    %161 = arith.mulf %150, %160 : vector<8x128xf32>
    %162 = arith.addf %159, %161 : vector<8x128xf32>
    %163 = math.tanh %162 : vector<8x128xf32>
    %cst_43 = arith.constant 1.000000e+00 : f32
    %164 = vector.broadcast %cst_43 : f32 to vector<8x128xf32>
    %165 = arith.subf %164, %158 : vector<8x128xf32>
    %166 = arith.mulf %165, %163 : vector<8x128xf32>
    %167 = arith.mulf %158, %137 : vector<8x128xf32>
    %168 = arith.addf %166, %167 : vector<8x128xf32>
    %c5_i32 = arith.constant 5 : i32
    %cst_44 = arith.constant dense<0.000000e+00> : vector<8x384xf32>
    %169 = tpu.matmul %168, %2, %cst_44 {dimension_numbers = #tpu.dot_dimension_numbers<[1], [0], [0], [1], [0, 0, 1, 1], [], []>} : vector<8x128xf32>, vector<128x384xf32>, vector<8x384xf32> -> vector<8x384xf32>
    %170 = arith.addf %169, %5 : vector<8x384xf32>
    %171 = arith.index_cast %c5_i32 : i32 to index
    %c0_45 = arith.constant 0 : index
    %c0_46 = arith.constant 0 : index
    %172 = vector.load %arg14[%171, %c0_45, %c0_46] : memref<8x8x384xf32, #tpu.memory_space<vmem>>, vector<1x8x384xf32>
    %173 = vector.shape_cast %172 : vector<1x8x384xf32> to vector<8x384xf32>
    %174 = vector.extract_strided_slice %173 {offsets = [0, 0], sizes = [8, 128], strides = [1, 1]} : vector<8x384xf32> to vector<8x128xf32>
    %175 = vector.extract_strided_slice %170 {offsets = [0, 0], sizes = [8, 128], strides = [1, 1]} : vector<8x384xf32> to vector<8x128xf32>
    %176 = arith.addf %174, %175 : vector<8x128xf32>
    %177 = arith.negf %176 : vector<8x128xf32>
    %178 = math.exp %177 : vector<8x128xf32>
    %cst_47 = arith.constant 1.000000e+00 : f32
    %179 = vector.broadcast %cst_47 : f32 to vector<8x128xf32>
    %180 = arith.addf %179, %178 : vector<8x128xf32>
    %181 = arith.divf %179, %180 : vector<8x128xf32>
    %182 = vector.extract_strided_slice %173 {offsets = [0, 128], sizes = [8, 128], strides = [1, 1]} : vector<8x384xf32> to vector<8x128xf32>
    %183 = vector.extract_strided_slice %170 {offsets = [0, 128], sizes = [8, 128], strides = [1, 1]} : vector<8x384xf32> to vector<8x128xf32>
    %184 = arith.addf %182, %183 : vector<8x128xf32>
    %185 = arith.negf %184 : vector<8x128xf32>
    %186 = math.exp %185 : vector<8x128xf32>
    %cst_48 = arith.constant 1.000000e+00 : f32
    %187 = vector.broadcast %cst_48 : f32 to vector<8x128xf32>
    %188 = arith.addf %187, %186 : vector<8x128xf32>
    %189 = arith.divf %187, %188 : vector<8x128xf32>
    %190 = vector.extract_strided_slice %173 {offsets = [0, 256], sizes = [8, 128], strides = [1, 1]} : vector<8x384xf32> to vector<8x128xf32>
    %191 = vector.extract_strided_slice %170 {offsets = [0, 256], sizes = [8, 128], strides = [1, 1]} : vector<8x384xf32> to vector<8x128xf32>
    %192 = arith.mulf %181, %191 : vector<8x128xf32>
    %193 = arith.addf %190, %192 : vector<8x128xf32>
    %194 = math.tanh %193 : vector<8x128xf32>
    %cst_49 = arith.constant 1.000000e+00 : f32
    %195 = vector.broadcast %cst_49 : f32 to vector<8x128xf32>
    %196 = arith.subf %195, %189 : vector<8x128xf32>
    %197 = arith.mulf %196, %194 : vector<8x128xf32>
    %198 = arith.mulf %189, %168 : vector<8x128xf32>
    %199 = arith.addf %197, %198 : vector<8x128xf32>
    %c6_i32 = arith.constant 6 : i32
    %cst_50 = arith.constant dense<0.000000e+00> : vector<8x384xf32>
    %200 = tpu.matmul %199, %2, %cst_50 {dimension_numbers = #tpu.dot_dimension_numbers<[1], [0], [0], [1], [0, 0, 1, 1], [], []>} : vector<8x128xf32>, vector<128x384xf32>, vector<8x384xf32> -> vector<8x384xf32>
    %201 = arith.addf %200, %5 : vector<8x384xf32>
    %202 = arith.index_cast %c6_i32 : i32 to index
    %c0_51 = arith.constant 0 : index
    %c0_52 = arith.constant 0 : index
    %203 = vector.load %arg14[%202, %c0_51, %c0_52] : memref<8x8x384xf32, #tpu.memory_space<vmem>>, vector<1x8x384xf32>
    %204 = vector.shape_cast %203 : vector<1x8x384xf32> to vector<8x384xf32>
    %205 = vector.extract_strided_slice %204 {offsets = [0, 0], sizes = [8, 128], strides = [1, 1]} : vector<8x384xf32> to vector<8x128xf32>
    %206 = vector.extract_strided_slice %201 {offsets = [0, 0], sizes = [8, 128], strides = [1, 1]} : vector<8x384xf32> to vector<8x128xf32>
    %207 = arith.addf %205, %206 : vector<8x128xf32>
    %208 = arith.negf %207 : vector<8x128xf32>
    %209 = math.exp %208 : vector<8x128xf32>
    %cst_53 = arith.constant 1.000000e+00 : f32
    %210 = vector.broadcast %cst_53 : f32 to vector<8x128xf32>
    %211 = arith.addf %210, %209 : vector<8x128xf32>
    %212 = arith.divf %210, %211 : vector<8x128xf32>
    %213 = vector.extract_strided_slice %204 {offsets = [0, 128], sizes = [8, 128], strides = [1, 1]} : vector<8x384xf32> to vector<8x128xf32>
    %214 = vector.extract_strided_slice %201 {offsets = [0, 128], sizes = [8, 128], strides = [1, 1]} : vector<8x384xf32> to vector<8x128xf32>
    %215 = arith.addf %213, %214 : vector<8x128xf32>
    %216 = arith.negf %215 : vector<8x128xf32>
    %217 = math.exp %216 : vector<8x128xf32>
    %cst_54 = arith.constant 1.000000e+00 : f32
    %218 = vector.broadcast %cst_54 : f32 to vector<8x128xf32>
    %219 = arith.addf %218, %217 : vector<8x128xf32>
    %220 = arith.divf %218, %219 : vector<8x128xf32>
    %221 = vector.extract_strided_slice %204 {offsets = [0, 256], sizes = [8, 128], strides = [1, 1]} : vector<8x384xf32> to vector<8x128xf32>
    %222 = vector.extract_strided_slice %201 {offsets = [0, 256], sizes = [8, 128], strides = [1, 1]} : vector<8x384xf32> to vector<8x128xf32>
    %223 = arith.mulf %212, %222 : vector<8x128xf32>
    %224 = arith.addf %221, %223 : vector<8x128xf32>
    %225 = math.tanh %224 : vector<8x128xf32>
    %cst_55 = arith.constant 1.000000e+00 : f32
    %226 = vector.broadcast %cst_55 : f32 to vector<8x128xf32>
    %227 = arith.subf %226, %220 : vector<8x128xf32>
    %228 = arith.mulf %227, %225 : vector<8x128xf32>
    %229 = arith.mulf %220, %199 : vector<8x128xf32>
    %230 = arith.addf %228, %229 : vector<8x128xf32>
    %c7_i32 = arith.constant 7 : i32
    %cst_56 = arith.constant dense<0.000000e+00> : vector<8x384xf32>
    %231 = tpu.matmul %230, %2, %cst_56 {dimension_numbers = #tpu.dot_dimension_numbers<[1], [0], [0], [1], [0, 0, 1, 1], [], []>} : vector<8x128xf32>, vector<128x384xf32>, vector<8x384xf32> -> vector<8x384xf32>
    %232 = arith.addf %231, %5 : vector<8x384xf32>
    %233 = arith.index_cast %c7_i32 : i32 to index
    %c0_57 = arith.constant 0 : index
    %c0_58 = arith.constant 0 : index
    %234 = vector.load %arg14[%233, %c0_57, %c0_58] : memref<8x8x384xf32, #tpu.memory_space<vmem>>, vector<1x8x384xf32>
    %235 = vector.shape_cast %234 : vector<1x8x384xf32> to vector<8x384xf32>
    %236 = vector.extract_strided_slice %235 {offsets = [0, 0], sizes = [8, 128], strides = [1, 1]} : vector<8x384xf32> to vector<8x128xf32>
    %237 = vector.extract_strided_slice %232 {offsets = [0, 0], sizes = [8, 128], strides = [1, 1]} : vector<8x384xf32> to vector<8x128xf32>
    %238 = arith.addf %236, %237 : vector<8x128xf32>
    %239 = arith.negf %238 : vector<8x128xf32>
    %240 = math.exp %239 : vector<8x128xf32>
    %cst_59 = arith.constant 1.000000e+00 : f32
    %241 = vector.broadcast %cst_59 : f32 to vector<8x128xf32>
    %242 = arith.addf %241, %240 : vector<8x128xf32>
    %243 = arith.divf %241, %242 : vector<8x128xf32>
    %244 = vector.extract_strided_slice %235 {offsets = [0, 128], sizes = [8, 128], strides = [1, 1]} : vector<8x384xf32> to vector<8x128xf32>
    %245 = vector.extract_strided_slice %232 {offsets = [0, 128], sizes = [8, 128], strides = [1, 1]} : vector<8x384xf32> to vector<8x128xf32>
    %246 = arith.addf %244, %245 : vector<8x128xf32>
    %247 = arith.negf %246 : vector<8x128xf32>
    %248 = math.exp %247 : vector<8x128xf32>
    %cst_60 = arith.constant 1.000000e+00 : f32
    %249 = vector.broadcast %cst_60 : f32 to vector<8x128xf32>
    %250 = arith.addf %249, %248 : vector<8x128xf32>
    %251 = arith.divf %249, %250 : vector<8x128xf32>
    %252 = vector.extract_strided_slice %235 {offsets = [0, 256], sizes = [8, 128], strides = [1, 1]} : vector<8x384xf32> to vector<8x128xf32>
    %253 = vector.extract_strided_slice %232 {offsets = [0, 256], sizes = [8, 128], strides = [1, 1]} : vector<8x384xf32> to vector<8x128xf32>
    %254 = arith.mulf %243, %253 : vector<8x128xf32>
    %255 = arith.addf %252, %254 : vector<8x128xf32>
    %256 = math.tanh %255 : vector<8x128xf32>
    %cst_61 = arith.constant 1.000000e+00 : f32
    %257 = vector.broadcast %cst_61 : f32 to vector<8x128xf32>
    %258 = arith.subf %257, %251 : vector<8x128xf32>
    %259 = arith.mulf %258, %256 : vector<8x128xf32>
    %260 = arith.mulf %251, %230 : vector<8x128xf32>
    %261 = arith.addf %259, %260 : vector<8x128xf32>
    %c8_i32 = arith.constant 8 : i32
    %c0_62 = arith.constant 0 : index
    %c0_63 = arith.constant 0 : index
    %262 = vector.load %arg7[%c0_62, %c0_63] : memref<128x768xf32, #tpu.memory_space<vmem>>, vector<128x768xf32>
    %c0_64 = arith.constant 0 : index
    %c0_65 = arith.constant 0 : index
    %263 = vector.load %arg8[%c0_64, %c0_65] : memref<1x768xf32, #tpu.memory_space<vmem>>, vector<1x768xf32>
    %264 = vector.shape_cast %263 : vector<1x768xf32> to vector<1x768xf32>
    %265 = vector.broadcast %264 : vector<1x768xf32> to vector<8x768xf32>
    %c0_i32_66 = arith.constant 0 : i32
    %cst_67 = arith.constant dense<0.000000e+00> : vector<8x768xf32>
    %266 = tpu.matmul %261, %262, %cst_67 {dimension_numbers = #tpu.dot_dimension_numbers<[1], [0], [0], [1], [0, 0, 1, 1], [], []>} : vector<8x128xf32>, vector<128x768xf32>, vector<8x768xf32> -> vector<8x768xf32>
    %267 = arith.addf %266, %265 : vector<8x768xf32>
    %268 = vector.extract_strided_slice %267 {offsets = [0, 0], sizes = [8, 384], strides = [1, 1]} : vector<8x768xf32> to vector<8x384xf32>
    %269 = vector.extract_strided_slice %267 {offsets = [0, 384], sizes = [8, 384], strides = [1, 1]} : vector<8x768xf32> to vector<8x384xf32>
    %270 = vector.extract_strided_slice %268 {offsets = [0, 0], sizes = [8, 128], strides = [1, 1]} : vector<8x384xf32> to vector<8x128xf32>
    %271 = vector.extract_strided_slice %269 {offsets = [0, 0], sizes = [8, 128], strides = [1, 1]} : vector<8x384xf32> to vector<8x128xf32>
    %272 = arith.addf %270, %271 : vector<8x128xf32>
    %273 = arith.negf %272 : vector<8x128xf32>
    %274 = math.exp %273 : vector<8x128xf32>
    %cst_68 = arith.constant 1.000000e+00 : f32
    %275 = vector.broadcast %cst_68 : f32 to vector<8x128xf32>
    %276 = arith.addf %275, %274 : vector<8x128xf32>
    %277 = arith.divf %275, %276 : vector<8x128xf32>
    %278 = vector.extract_strided_slice %268 {offsets = [0, 128], sizes = [8, 128], strides = [1, 1]} : vector<8x384xf32> to vector<8x128xf32>
    %279 = vector.extract_strided_slice %269 {offsets = [0, 128], sizes = [8, 128], strides = [1, 1]} : vector<8x384xf32> to vector<8x128xf32>
    %280 = arith.addf %278, %279 : vector<8x128xf32>
    %281 = arith.negf %280 : vector<8x128xf32>
    %282 = math.exp %281 : vector<8x128xf32>
    %cst_69 = arith.constant 1.000000e+00 : f32
    %283 = vector.broadcast %cst_69 : f32 to vector<8x128xf32>
    %284 = arith.addf %283, %282 : vector<8x128xf32>
    %285 = arith.divf %283, %284 : vector<8x128xf32>
    %286 = vector.extract_strided_slice %268 {offsets = [0, 256], sizes = [8, 128], strides = [1, 1]} : vector<8x384xf32> to vector<8x128xf32>
    %287 = vector.extract_strided_slice %269 {offsets = [0, 256], sizes = [8, 128], strides = [1, 1]} : vector<8x384xf32> to vector<8x128xf32>
    %288 = arith.mulf %277, %287 : vector<8x128xf32>
    %289 = arith.addf %286, %288 : vector<8x128xf32>
    %290 = math.tanh %289 : vector<8x128xf32>
    %cst_70 = arith.constant 1.000000e+00 : f32
    %291 = vector.broadcast %cst_70 : f32 to vector<8x128xf32>
    %292 = arith.subf %291, %285 : vector<8x128xf32>
    %293 = arith.mulf %292, %290 : vector<8x128xf32>
    %294 = arith.mulf %285, %261 : vector<8x128xf32>
    %295 = arith.addf %293, %294 : vector<8x128xf32>
    %296 = arith.index_cast %c0_i32_66 : i32 to index
    %c0_71 = arith.constant 0 : index
    %c0_72 = arith.constant 0 : index
    %297 = vector.load %arg17[%296, %c0_71, %c0_72] : memref<8x8x128xf32, #tpu.memory_space<vmem>>, vector<1x8x128xf32>
    %298 = vector.shape_cast %297 : vector<1x8x128xf32> to vector<8x128xf32>
    %299 = vector.shape_cast %295 : vector<8x128xf32> to vector<1x8x128xf32>
    tpu.vector_store %arg17[%296, %c0_71, %c0_72], %299 {strides = array<i32>} : memref<8x8x128xf32, #tpu.memory_space<vmem>>, vector<1x8x128xf32>,
    %c1_i32_73 = arith.constant 1 : i32
    %cst_74 = arith.constant dense<0.000000e+00> : vector<8x768xf32>
    %300 = tpu.matmul %295, %262, %cst_74 {dimension_numbers = #tpu.dot_dimension_numbers<[1], [0], [0], [1], [0, 0, 1, 1], [], []>} : vector<8x128xf32>, vector<128x768xf32>, vector<8x768xf32> -> vector<8x768xf32>
    %301 = arith.addf %300, %265 : vector<8x768xf32>
    %302 = vector.extract_strided_slice %301 {offsets = [0, 0], sizes = [8, 384], strides = [1, 1]} : vector<8x768xf32> to vector<8x384xf32>
    %303 = vector.extract_strided_slice %301 {offsets = [0, 384], sizes = [8, 384], strides = [1, 1]} : vector<8x768xf32> to vector<8x384xf32>
    %304 = vector.extract_strided_slice %302 {offsets = [0, 0], sizes = [8, 128], strides = [1, 1]} : vector<8x384xf32> to vector<8x128xf32>
    %305 = vector.extract_strided_slice %303 {offsets = [0, 0], sizes = [8, 128], strides = [1, 1]} : vector<8x384xf32> to vector<8x128xf32>
    %306 = arith.addf %304, %305 : vector<8x128xf32>
    %307 = arith.negf %306 : vector<8x128xf32>
    %308 = math.exp %307 : vector<8x128xf32>
    %cst_75 = arith.constant 1.000000e+00 : f32
    %309 = vector.broadcast %cst_75 : f32 to vector<8x128xf32>
    %310 = arith.addf %309, %308 : vector<8x128xf32>
    %311 = arith.divf %309, %310 : vector<8x128xf32>
    %312 = vector.extract_strided_slice %302 {offsets = [0, 128], sizes = [8, 128], strides = [1, 1]} : vector<8x384xf32> to vector<8x128xf32>
    %313 = vector.extract_strided_slice %303 {offsets = [0, 128], sizes = [8, 128], strides = [1, 1]} : vector<8x384xf32> to vector<8x128xf32>
    %314 = arith.addf %312, %313 : vector<8x128xf32>
    %315 = arith.negf %314 : vector<8x128xf32>
    %316 = math.exp %315 : vector<8x128xf32>
    %cst_76 = arith.constant 1.000000e+00 : f32
    %317 = vector.broadcast %cst_76 : f32 to vector<8x128xf32>
    %318 = arith.addf %317, %316 : vector<8x128xf32>
    %319 = arith.divf %317, %318 : vector<8x128xf32>
    %320 = vector.extract_strided_slice %302 {offsets = [0, 256], sizes = [8, 128], strides = [1, 1]} : vector<8x384xf32> to vector<8x128xf32>
    %321 = vector.extract_strided_slice %303 {offsets = [0, 256], sizes = [8, 128], strides = [1, 1]} : vector<8x384xf32> to vector<8x128xf32>
    %322 = arith.mulf %311, %321 : vector<8x128xf32>
    %323 = arith.addf %320, %322 : vector<8x128xf32>
    %324 = math.tanh %323 : vector<8x128xf32>
    %cst_77 = arith.constant 1.000000e+00 : f32
    %325 = vector.broadcast %cst_77 : f32 to vector<8x128xf32>
    %326 = arith.subf %325, %319 : vector<8x128xf32>
    %327 = arith.mulf %326, %324 : vector<8x128xf32>
    %328 = arith.mulf %319, %295 : vector<8x128xf32>
    %329 = arith.addf %327, %328 : vector<8x128xf32>
    %330 = arith.index_cast %c1_i32_73 : i32 to index
    %c0_78 = arith.constant 0 : index
    %c0_79 = arith.constant 0 : index
    %331 = vector.load %arg17[%330, %c0_78, %c0_79] : memref<8x8x128xf32, #tpu.memory_space<vmem>>, vector<1x8x128xf32>
    %332 = vector.shape_cast %331 : vector<1x8x128xf32> to vector<8x128xf32>
    %333 = vector.shape_cast %329 : vector<8x128xf32> to vector<1x8x128xf32>
    tpu.vector_store %arg17[%330, %c0_78, %c0_79], %333 {strides = array<i32>} : memref<8x8x128xf32, #tpu.memory_space<vmem>>, vector<1x8x128xf32>,
    %c2_i32_80 = arith.constant 2 : i32
    %cst_81 = arith.constant dense<0.000000e+00> : vector<8x768xf32>
    %334 = tpu.matmul %329, %262, %cst_81 {dimension_numbers = #tpu.dot_dimension_numbers<[1], [0], [0], [1], [0, 0, 1, 1], [], []>} : vector<8x128xf32>, vector<128x768xf32>, vector<8x768xf32> -> vector<8x768xf32>
    %335 = arith.addf %334, %265 : vector<8x768xf32>
    %336 = vector.extract_strided_slice %335 {offsets = [0, 0], sizes = [8, 384], strides = [1, 1]} : vector<8x768xf32> to vector<8x384xf32>
    %337 = vector.extract_strided_slice %335 {offsets = [0, 384], sizes = [8, 384], strides = [1, 1]} : vector<8x768xf32> to vector<8x384xf32>
    %338 = vector.extract_strided_slice %336 {offsets = [0, 0], sizes = [8, 128], strides = [1, 1]} : vector<8x384xf32> to vector<8x128xf32>
    %339 = vector.extract_strided_slice %337 {offsets = [0, 0], sizes = [8, 128], strides = [1, 1]} : vector<8x384xf32> to vector<8x128xf32>
    %340 = arith.addf %338, %339 : vector<8x128xf32>
    %341 = arith.negf %340 : vector<8x128xf32>
    %342 = math.exp %341 : vector<8x128xf32>
    %cst_82 = arith.constant 1.000000e+00 : f32
    %343 = vector.broadcast %cst_82 : f32 to vector<8x128xf32>
    %344 = arith.addf %343, %342 : vector<8x128xf32>
    %345 = arith.divf %343, %344 : vector<8x128xf32>
    %346 = vector.extract_strided_slice %336 {offsets = [0, 128], sizes = [8, 128], strides = [1, 1]} : vector<8x384xf32> to vector<8x128xf32>
    %347 = vector.extract_strided_slice %337 {offsets = [0, 128], sizes = [8, 128], strides = [1, 1]} : vector<8x384xf32> to vector<8x128xf32>
    %348 = arith.addf %346, %347 : vector<8x128xf32>
    %349 = arith.negf %348 : vector<8x128xf32>
    %350 = math.exp %349 : vector<8x128xf32>
    %cst_83 = arith.constant 1.000000e+00 : f32
    %351 = vector.broadcast %cst_83 : f32 to vector<8x128xf32>
    %352 = arith.addf %351, %350 : vector<8x128xf32>
    %353 = arith.divf %351, %352 : vector<8x128xf32>
    %354 = vector.extract_strided_slice %336 {offsets = [0, 256], sizes = [8, 128], strides = [1, 1]} : vector<8x384xf32> to vector<8x128xf32>
    %355 = vector.extract_strided_slice %337 {offsets = [0, 256], sizes = [8, 128], strides = [1, 1]} : vector<8x384xf32> to vector<8x128xf32>
    %356 = arith.mulf %345, %355 : vector<8x128xf32>
    %357 = arith.addf %354, %356 : vector<8x128xf32>
    %358 = math.tanh %357 : vector<8x128xf32>
    %cst_84 = arith.constant 1.000000e+00 : f32
    %359 = vector.broadcast %cst_84 : f32 to vector<8x128xf32>
    %360 = arith.subf %359, %353 : vector<8x128xf32>
    %361 = arith.mulf %360, %358 : vector<8x128xf32>
    %362 = arith.mulf %353, %329 : vector<8x128xf32>
    %363 = arith.addf %361, %362 : vector<8x128xf32>
    %364 = arith.index_cast %c2_i32_80 : i32 to index
    %c0_85 = arith.constant 0 : index
    %c0_86 = arith.constant 0 : index
    %365 = vector.load %arg17[%364, %c0_85, %c0_86] : memref<8x8x128xf32, #tpu.memory_space<vmem>>, vector<1x8x128xf32>
    %366 = vector.shape_cast %365 : vector<1x8x128xf32> to vector<8x128xf32>
    %367 = vector.shape_cast %363 : vector<8x128xf32> to vector<1x8x128xf32>
    tpu.vector_store %arg17[%364, %c0_85, %c0_86], %367 {strides = array<i32>} : memref<8x8x128xf32, #tpu.memory_space<vmem>>, vector<1x8x128xf32>,
    %c3_i32_87 = arith.constant 3 : i32
    %cst_88 = arith.constant dense<0.000000e+00> : vector<8x768xf32>
    %368 = tpu.matmul %363, %262, %cst_88 {dimension_numbers = #tpu.dot_dimension_numbers<[1], [0], [0], [1], [0, 0, 1, 1], [], []>} : vector<8x128xf32>, vector<128x768xf32>, vector<8x768xf32> -> vector<8x768xf32>
    %369 = arith.addf %368, %265 : vector<8x768xf32>
    %370 = vector.extract_strided_slice %369 {offsets = [0, 0], sizes = [8, 384], strides = [1, 1]} : vector<8x768xf32> to vector<8x384xf32>
    %371 = vector.extract_strided_slice %369 {offsets = [0, 384], sizes = [8, 384], strides = [1, 1]} : vector<8x768xf32> to vector<8x384xf32>
    %372 = vector.extract_strided_slice %370 {offsets = [0, 0], sizes = [8, 128], strides = [1, 1]} : vector<8x384xf32> to vector<8x128xf32>
    %373 = vector.extract_strided_slice %371 {offsets = [0, 0], sizes = [8, 128], strides = [1, 1]} : vector<8x384xf32> to vector<8x128xf32>
    %374 = arith.addf %372, %373 : vector<8x128xf32>
    %375 = arith.negf %374 : vector<8x128xf32>
    %376 = math.exp %375 : vector<8x128xf32>
    %cst_89 = arith.constant 1.000000e+00 : f32
    %377 = vector.broadcast %cst_89 : f32 to vector<8x128xf32>
    %378 = arith.addf %377, %376 : vector<8x128xf32>
    %379 = arith.divf %377, %378 : vector<8x128xf32>
    %380 = vector.extract_strided_slice %370 {offsets = [0, 128], sizes = [8, 128], strides = [1, 1]} : vector<8x384xf32> to vector<8x128xf32>
    %381 = vector.extract_strided_slice %371 {offsets = [0, 128], sizes = [8, 128], strides = [1, 1]} : vector<8x384xf32> to vector<8x128xf32>
    %382 = arith.addf %380, %381 : vector<8x128xf32>
    %383 = arith.negf %382 : vector<8x128xf32>
    %384 = math.exp %383 : vector<8x128xf32>
    %cst_90 = arith.constant 1.000000e+00 : f32
    %385 = vector.broadcast %cst_90 : f32 to vector<8x128xf32>
    %386 = arith.addf %385, %384 : vector<8x128xf32>
    %387 = arith.divf %385, %386 : vector<8x128xf32>
    %388 = vector.extract_strided_slice %370 {offsets = [0, 256], sizes = [8, 128], strides = [1, 1]} : vector<8x384xf32> to vector<8x128xf32>
    %389 = vector.extract_strided_slice %371 {offsets = [0, 256], sizes = [8, 128], strides = [1, 1]} : vector<8x384xf32> to vector<8x128xf32>
    %390 = arith.mulf %379, %389 : vector<8x128xf32>
    %391 = arith.addf %388, %390 : vector<8x128xf32>
    %392 = math.tanh %391 : vector<8x128xf32>
    %cst_91 = arith.constant 1.000000e+00 : f32
    %393 = vector.broadcast %cst_91 : f32 to vector<8x128xf32>
    %394 = arith.subf %393, %387 : vector<8x128xf32>
    %395 = arith.mulf %394, %392 : vector<8x128xf32>
    %396 = arith.mulf %387, %363 : vector<8x128xf32>
    %397 = arith.addf %395, %396 : vector<8x128xf32>
    %398 = arith.index_cast %c3_i32_87 : i32 to index
    %c0_92 = arith.constant 0 : index
    %c0_93 = arith.constant 0 : index
    %399 = vector.load %arg17[%398, %c0_92, %c0_93] : memref<8x8x128xf32, #tpu.memory_space<vmem>>, vector<1x8x128xf32>
    %400 = vector.shape_cast %399 : vector<1x8x128xf32> to vector<8x128xf32>
    %401 = vector.shape_cast %397 : vector<8x128xf32> to vector<1x8x128xf32>
    tpu.vector_store %arg17[%398, %c0_92, %c0_93], %401 {strides = array<i32>} : memref<8x8x128xf32, #tpu.memory_space<vmem>>, vector<1x8x128xf32>,
    %c4_i32_94 = arith.constant 4 : i32
    %cst_95 = arith.constant dense<0.000000e+00> : vector<8x768xf32>
    %402 = tpu.matmul %397, %262, %cst_95 {dimension_numbers = #tpu.dot_dimension_numbers<[1], [0], [0], [1], [0, 0, 1, 1], [], []>} : vector<8x128xf32>, vector<128x768xf32>, vector<8x768xf32> -> vector<8x768xf32>
    %403 = arith.addf %402, %265 : vector<8x768xf32>
    %404 = vector.extract_strided_slice %403 {offsets = [0, 0], sizes = [8, 384], strides = [1, 1]} : vector<8x768xf32> to vector<8x384xf32>
    %405 = vector.extract_strided_slice %403 {offsets = [0, 384], sizes = [8, 384], strides = [1, 1]} : vector<8x768xf32> to vector<8x384xf32>
    %406 = vector.extract_strided_slice %404 {offsets = [0, 0], sizes = [8, 128], strides = [1, 1]} : vector<8x384xf32> to vector<8x128xf32>
    %407 = vector.extract_strided_slice %405 {offsets = [0, 0], sizes = [8, 128], strides = [1, 1]} : vector<8x384xf32> to vector<8x128xf32>
    %408 = arith.addf %406, %407 : vector<8x128xf32>
    %409 = arith.negf %408 : vector<8x128xf32>
    %410 = math.exp %409 : vector<8x128xf32>
    %cst_96 = arith.constant 1.000000e+00 : f32
    %411 = vector.broadcast %cst_96 : f32 to vector<8x128xf32>
    %412 = arith.addf %411, %410 : vector<8x128xf32>
    %413 = arith.divf %411, %412 : vector<8x128xf32>
    %414 = vector.extract_strided_slice %404 {offsets = [0, 128], sizes = [8, 128], strides = [1, 1]} : vector<8x384xf32> to vector<8x128xf32>
    %415 = vector.extract_strided_slice %405 {offsets = [0, 128], sizes = [8, 128], strides = [1, 1]} : vector<8x384xf32> to vector<8x128xf32>
    %416 = arith.addf %414, %415 : vector<8x128xf32>
    %417 = arith.negf %416 : vector<8x128xf32>
    %418 = math.exp %417 : vector<8x128xf32>
    %cst_97 = arith.constant 1.000000e+00 : f32
    %419 = vector.broadcast %cst_97 : f32 to vector<8x128xf32>
    %420 = arith.addf %419, %418 : vector<8x128xf32>
    %421 = arith.divf %419, %420 : vector<8x128xf32>
    %422 = vector.extract_strided_slice %404 {offsets = [0, 256], sizes = [8, 128], strides = [1, 1]} : vector<8x384xf32> to vector<8x128xf32>
    %423 = vector.extract_strided_slice %405 {offsets = [0, 256], sizes = [8, 128], strides = [1, 1]} : vector<8x384xf32> to vector<8x128xf32>
    %424 = arith.mulf %413, %423 : vector<8x128xf32>
    %425 = arith.addf %422, %424 : vector<8x128xf32>
    %426 = math.tanh %425 : vector<8x128xf32>
    %cst_98 = arith.constant 1.000000e+00 : f32
    %427 = vector.broadcast %cst_98 : f32 to vector<8x128xf32>
    %428 = arith.subf %427, %421 : vector<8x128xf32>
    %429 = arith.mulf %428, %426 : vector<8x128xf32>
    %430 = arith.mulf %421, %397 : vector<8x128xf32>
    %431 = arith.addf %429, %430 : vector<8x128xf32>
    %432 = arith.index_cast %c4_i32_94 : i32 to index
    %c0_99 = arith.constant 0 : index
    %c0_100 = arith.constant 0 : index
    %433 = vector.load %arg17[%432, %c0_99, %c0_100] : memref<8x8x128xf32, #tpu.memory_space<vmem>>, vector<1x8x128xf32>
    %434 = vector.shape_cast %433 : vector<1x8x128xf32> to vector<8x128xf32>
    %435 = vector.shape_cast %431 : vector<8x128xf32> to vector<1x8x128xf32>
    tpu.vector_store %arg17[%432, %c0_99, %c0_100], %435 {strides = array<i32>} : memref<8x8x128xf32, #tpu.memory_space<vmem>>, vector<1x8x128xf32>,
    %c5_i32_101 = arith.constant 5 : i32
    %cst_102 = arith.constant dense<0.000000e+00> : vector<8x768xf32>
    %436 = tpu.matmul %431, %262, %cst_102 {dimension_numbers = #tpu.dot_dimension_numbers<[1], [0], [0], [1], [0, 0, 1, 1], [], []>} : vector<8x128xf32>, vector<128x768xf32>, vector<8x768xf32> -> vector<8x768xf32>
    %437 = arith.addf %436, %265 : vector<8x768xf32>
    %438 = vector.extract_strided_slice %437 {offsets = [0, 0], sizes = [8, 384], strides = [1, 1]} : vector<8x768xf32> to vector<8x384xf32>
    %439 = vector.extract_strided_slice %437 {offsets = [0, 384], sizes = [8, 384], strides = [1, 1]} : vector<8x768xf32> to vector<8x384xf32>
    %440 = vector.extract_strided_slice %438 {offsets = [0, 0], sizes = [8, 128], strides = [1, 1]} : vector<8x384xf32> to vector<8x128xf32>
    %441 = vector.extract_strided_slice %439 {offsets = [0, 0], sizes = [8, 128], strides = [1, 1]} : vector<8x384xf32> to vector<8x128xf32>
    %442 = arith.addf %440, %441 : vector<8x128xf32>
    %443 = arith.negf %442 : vector<8x128xf32>
    %444 = math.exp %443 : vector<8x128xf32>
    %cst_103 = arith.constant 1.000000e+00 : f32
    %445 = vector.broadcast %cst_103 : f32 to vector<8x128xf32>
    %446 = arith.addf %445, %444 : vector<8x128xf32>
    %447 = arith.divf %445, %446 : vector<8x128xf32>
    %448 = vector.extract_strided_slice %438 {offsets = [0, 128], sizes = [8, 128], strides = [1, 1]} : vector<8x384xf32> to vector<8x128xf32>
    %449 = vector.extract_strided_slice %439 {offsets = [0, 128], sizes = [8, 128], strides = [1, 1]} : vector<8x384xf32> to vector<8x128xf32>
    %450 = arith.addf %448, %449 : vector<8x128xf32>
    %451 = arith.negf %450 : vector<8x128xf32>
    %452 = math.exp %451 : vector<8x128xf32>
    %cst_104 = arith.constant 1.000000e+00 : f32
    %453 = vector.broadcast %cst_104 : f32 to vector<8x128xf32>
    %454 = arith.addf %453, %452 : vector<8x128xf32>
    %455 = arith.divf %453, %454 : vector<8x128xf32>
    %456 = vector.extract_strided_slice %438 {offsets = [0, 256], sizes = [8, 128], strides = [1, 1]} : vector<8x384xf32> to vector<8x128xf32>
    %457 = vector.extract_strided_slice %439 {offsets = [0, 256], sizes = [8, 128], strides = [1, 1]} : vector<8x384xf32> to vector<8x128xf32>
    %458 = arith.mulf %447, %457 : vector<8x128xf32>
    %459 = arith.addf %456, %458 : vector<8x128xf32>
    %460 = math.tanh %459 : vector<8x128xf32>
    %cst_105 = arith.constant 1.000000e+00 : f32
    %461 = vector.broadcast %cst_105 : f32 to vector<8x128xf32>
    %462 = arith.subf %461, %455 : vector<8x128xf32>
    %463 = arith.mulf %462, %460 : vector<8x128xf32>
    %464 = arith.mulf %455, %431 : vector<8x128xf32>
    %465 = arith.addf %463, %464 : vector<8x128xf32>
    %466 = arith.index_cast %c5_i32_101 : i32 to index
    %c0_106 = arith.constant 0 : index
    %c0_107 = arith.constant 0 : index
    %467 = vector.load %arg17[%466, %c0_106, %c0_107] : memref<8x8x128xf32, #tpu.memory_space<vmem>>, vector<1x8x128xf32>
    %468 = vector.shape_cast %467 : vector<1x8x128xf32> to vector<8x128xf32>
    %469 = vector.shape_cast %465 : vector<8x128xf32> to vector<1x8x128xf32>
    tpu.vector_store %arg17[%466, %c0_106, %c0_107], %469 {strides = array<i32>} : memref<8x8x128xf32, #tpu.memory_space<vmem>>, vector<1x8x128xf32>,
    %c6_i32_108 = arith.constant 6 : i32
    %cst_109 = arith.constant dense<0.000000e+00> : vector<8x768xf32>
    %470 = tpu.matmul %465, %262, %cst_109 {dimension_numbers = #tpu.dot_dimension_numbers<[1], [0], [0], [1], [0, 0, 1, 1], [], []>} : vector<8x128xf32>, vector<128x768xf32>, vector<8x768xf32> -> vector<8x768xf32>
    %471 = arith.addf %470, %265 : vector<8x768xf32>
    %472 = vector.extract_strided_slice %471 {offsets = [0, 0], sizes = [8, 384], strides = [1, 1]} : vector<8x768xf32> to vector<8x384xf32>
    %473 = vector.extract_strided_slice %471 {offsets = [0, 384], sizes = [8, 384], strides = [1, 1]} : vector<8x768xf32> to vector<8x384xf32>
    %474 = vector.extract_strided_slice %472 {offsets = [0, 0], sizes = [8, 128], strides = [1, 1]} : vector<8x384xf32> to vector<8x128xf32>
    %475 = vector.extract_strided_slice %473 {offsets = [0, 0], sizes = [8, 128], strides = [1, 1]} : vector<8x384xf32> to vector<8x128xf32>
    %476 = arith.addf %474, %475 : vector<8x128xf32>
    %477 = arith.negf %476 : vector<8x128xf32>
    %478 = math.exp %477 : vector<8x128xf32>
    %cst_110 = arith.constant 1.000000e+00 : f32
    %479 = vector.broadcast %cst_110 : f32 to vector<8x128xf32>
    %480 = arith.addf %479, %478 : vector<8x128xf32>
    %481 = arith.divf %479, %480 : vector<8x128xf32>
    %482 = vector.extract_strided_slice %472 {offsets = [0, 128], sizes = [8, 128], strides = [1, 1]} : vector<8x384xf32> to vector<8x128xf32>
    %483 = vector.extract_strided_slice %473 {offsets = [0, 128], sizes = [8, 128], strides = [1, 1]} : vector<8x384xf32> to vector<8x128xf32>
    %484 = arith.addf %482, %483 : vector<8x128xf32>
    %485 = arith.negf %484 : vector<8x128xf32>
    %486 = math.exp %485 : vector<8x128xf32>
    %cst_111 = arith.constant 1.000000e+00 : f32
    %487 = vector.broadcast %cst_111 : f32 to vector<8x128xf32>
    %488 = arith.addf %487, %486 : vector<8x128xf32>
    %489 = arith.divf %487, %488 : vector<8x128xf32>
    %490 = vector.extract_strided_slice %472 {offsets = [0, 256], sizes = [8, 128], strides = [1, 1]} : vector<8x384xf32> to vector<8x128xf32>
    %491 = vector.extract_strided_slice %473 {offsets = [0, 256], sizes = [8, 128], strides = [1, 1]} : vector<8x384xf32> to vector<8x128xf32>
    %492 = arith.mulf %481, %491 : vector<8x128xf32>
    %493 = arith.addf %490, %492 : vector<8x128xf32>
    %494 = math.tanh %493 : vector<8x128xf32>
    %cst_112 = arith.constant 1.000000e+00 : f32
    %495 = vector.broadcast %cst_112 : f32 to vector<8x128xf32>
    %496 = arith.subf %495, %489 : vector<8x128xf32>
    %497 = arith.mulf %496, %494 : vector<8x128xf32>
    %498 = arith.mulf %489, %465 : vector<8x128xf32>
    %499 = arith.addf %497, %498 : vector<8x128xf32>
    %500 = arith.index_cast %c6_i32_108 : i32 to index
    %c0_113 = arith.constant 0 : index
    %c0_114 = arith.constant 0 : index
    %501 = vector.load %arg17[%500, %c0_113, %c0_114] : memref<8x8x128xf32, #tpu.memory_space<vmem>>, vector<1x8x128xf32>
    %502 = vector.shape_cast %501 : vector<1x8x128xf32> to vector<8x128xf32>
    %503 = vector.shape_cast %499 : vector<8x128xf32> to vector<1x8x128xf32>
    tpu.vector_store %arg17[%500, %c0_113, %c0_114], %503 {strides = array<i32>} : memref<8x8x128xf32, #tpu.memory_space<vmem>>, vector<1x8x128xf32>,
    %c7_i32_115 = arith.constant 7 : i32
    %cst_116 = arith.constant dense<0.000000e+00> : vector<8x768xf32>
    %504 = tpu.matmul %499, %262, %cst_116 {dimension_numbers = #tpu.dot_dimension_numbers<[1], [0], [0], [1], [0, 0, 1, 1], [], []>} : vector<8x128xf32>, vector<128x768xf32>, vector<8x768xf32> -> vector<8x768xf32>
    %505 = arith.addf %504, %265 : vector<8x768xf32>
    %506 = vector.extract_strided_slice %505 {offsets = [0, 0], sizes = [8, 384], strides = [1, 1]} : vector<8x768xf32> to vector<8x384xf32>
    %507 = vector.extract_strided_slice %505 {offsets = [0, 384], sizes = [8, 384], strides = [1, 1]} : vector<8x768xf32> to vector<8x384xf32>
    %508 = vector.extract_strided_slice %506 {offsets = [0, 0], sizes = [8, 128], strides = [1, 1]} : vector<8x384xf32> to vector<8x128xf32>
    %509 = vector.extract_strided_slice %507 {offsets = [0, 0], sizes = [8, 128], strides = [1, 1]} : vector<8x384xf32> to vector<8x128xf32>
    %510 = arith.addf %508, %509 : vector<8x128xf32>
    %511 = arith.negf %510 : vector<8x128xf32>
    %512 = math.exp %511 : vector<8x128xf32>
    %cst_117 = arith.constant 1.000000e+00 : f32
    %513 = vector.broadcast %cst_117 : f32 to vector<8x128xf32>
    %514 = arith.addf %513, %512 : vector<8x128xf32>
    %515 = arith.divf %513, %514 : vector<8x128xf32>
    %516 = vector.extract_strided_slice %506 {offsets = [0, 128], sizes = [8, 128], strides = [1, 1]} : vector<8x384xf32> to vector<8x128xf32>
    %517 = vector.extract_strided_slice %507 {offsets = [0, 128], sizes = [8, 128], strides = [1, 1]} : vector<8x384xf32> to vector<8x128xf32>
    %518 = arith.addf %516, %517 : vector<8x128xf32>
    %519 = arith.negf %518 : vector<8x128xf32>
    %520 = math.exp %519 : vector<8x128xf32>
    %cst_118 = arith.constant 1.000000e+00 : f32
    %521 = vector.broadcast %cst_118 : f32 to vector<8x128xf32>
    %522 = arith.addf %521, %520 : vector<8x128xf32>
    %523 = arith.divf %521, %522 : vector<8x128xf32>
    %524 = vector.extract_strided_slice %506 {offsets = [0, 256], sizes = [8, 128], strides = [1, 1]} : vector<8x384xf32> to vector<8x128xf32>
    %525 = vector.extract_strided_slice %507 {offsets = [0, 256], sizes = [8, 128], strides = [1, 1]} : vector<8x384xf32> to vector<8x128xf32>
    %526 = arith.mulf %515, %525 : vector<8x128xf32>
    %527 = arith.addf %524, %526 : vector<8x128xf32>
    %528 = math.tanh %527 : vector<8x128xf32>
    %cst_119 = arith.constant 1.000000e+00 : f32
    %529 = vector.broadcast %cst_119 : f32 to vector<8x128xf32>
    %530 = arith.subf %529, %523 : vector<8x128xf32>
    %531 = arith.mulf %530, %528 : vector<8x128xf32>
    %532 = arith.mulf %523, %499 : vector<8x128xf32>
    %533 = arith.addf %531, %532 : vector<8x128xf32>
    %534 = arith.index_cast %c7_i32_115 : i32 to index
    %c0_120 = arith.constant 0 : index
    %c0_121 = arith.constant 0 : index
    %535 = vector.load %arg17[%534, %c0_120, %c0_121] : memref<8x8x128xf32, #tpu.memory_space<vmem>>, vector<1x8x128xf32>
    %536 = vector.shape_cast %535 : vector<1x8x128xf32> to vector<8x128xf32>
    %537 = vector.shape_cast %533 : vector<8x128xf32> to vector<1x8x128xf32>
    tpu.vector_store %arg17[%534, %c0_120, %c0_121], %537 {strides = array<i32>} : memref<8x8x128xf32, #tpu.memory_space<vmem>>, vector<1x8x128xf32>,
    %c8_i32_122 = arith.constant 8 : i32
    %c0_123 = arith.constant 0 : index
    %c0_124 = arith.constant 0 : index
    %c0_125 = arith.constant 0 : index
    %538 = vector.load %arg17[%c0_123, %c0_124, %c0_125] : memref<8x8x128xf32, #tpu.memory_space<vmem>>, vector<8x8x128xf32>
    %539 = vector.shape_cast %538 : vector<8x8x128xf32> to vector<64x128xf32>
    %c0_126 = arith.constant 0 : index
    %c0_127 = arith.constant 0 : index
    %540 = vector.load %arg9[%c0_126, %c0_127] : memref<128x128xf32, #tpu.memory_space<vmem>>, vector<128x128xf32>
    %cst_128 = arith.constant dense<0.000000e+00> : vector<64x128xf32>
    %541 = tpu.matmul %539, %540, %cst_128 {dimension_numbers = #tpu.dot_dimension_numbers<[1], [0], [0], [1], [0, 0, 1, 1], [], []>} : vector<64x128xf32>, vector<128x128xf32>, vector<64x128xf32> -> vector<64x128xf32>
    %c0_129 = arith.constant 0 : index
    %c0_130 = arith.constant 0 : index
    %542 = vector.load %arg10[%c0_129, %c0_130] : memref<1x128xf32, #tpu.memory_space<vmem>>, vector<1x128xf32>
    %543 = vector.broadcast %542 : vector<1x128xf32> to vector<64x128xf32>
    %544 = arith.addf %541, %543 : vector<64x128xf32>
    %545 = vector.shape_cast %544 : vector<64x128xf32> to vector<8x8x128xf32>
    %c0_131 = arith.constant 0 : index
    %c0_132 = arith.constant 0 : index
    %c0_133 = arith.constant 0 : index
    %546 = vector.load %arg13[%c0_131, %c0_132, %c0_133] : memref<8x8x128xf32, #tpu.memory_space<vmem>>, vector<8x8x128xf32>
    tpu.vector_store %arg13[%c0_131, %c0_132, %c0_133], %545 {strides = array<i32>} : memref<8x8x128xf32, #tpu.memory_space<vmem>>, vector<8x8x128xf32>,
    return
  }
  func.func @transform_0(%arg0: i32) -> (i32, i32, i32) {
    %c0_i32 = arith.constant 0 : i32
    %c0_i32_0 = arith.constant 0 : i32
    %c0_i32_1 = arith.constant 0 : i32
    return %c0_i32, %arg0, %c0_i32_0 : i32, i32, i32
  }
  func.func @transform_1(%arg0: i32) -> (i32, i32, i32) {
    %c0_i32 = arith.constant 0 : i32
    %c0_i32_0 = arith.constant 0 : i32
    %c0_i32_1 = arith.constant 0 : i32
    return %c0_i32, %arg0, %c0_i32_0 : i32, i32, i32
  }
  func.func @transform_2(%arg0: i32) -> (i32, i32) {
    %c0_i32 = arith.constant 0 : i32
    %c0_i32_0 = arith.constant 0 : i32
    %c0_i32_1 = arith.constant 0 : i32
    return %c0_i32, %c0_i32_0 : i32, i32
  }
  func.func @transform_3(%arg0: i32) -> (i32, i32) {
    %c0_i32 = arith.constant 0 : i32
    %c0_i32_0 = arith.constant 0 : i32
    %c0_i32_1 = arith.constant 0 : i32
    return %c0_i32, %c0_i32_0 : i32, i32
  }
  func.func @transform_4(%arg0: i32) -> (i32, i32) {
    %c0_i32 = arith.constant 0 : i32
    %c0_i32_0 = arith.constant 0 : i32
    %c0_i32_1 = arith.constant 0 : i32
    return %c0_i32, %c0_i32_0 : i32, i32
  }
  func.func @transform_5(%arg0: i32) -> (i32, i32) {
    %c0_i32 = arith.constant 0 : i32
    %c0_i32_0 = arith.constant 0 : i32
    %c0_i32_1 = arith.constant 0 : i32
    return %c0_i32, %c0_i32_0 : i32, i32
  }
  func.func @transform_6(%arg0: i32) -> (i32, i32) {
    %c0_i32 = arith.constant 0 : i32
    %c0_i32_0 = arith.constant 0 : i32
    %c0_i32_1 = arith.constant 0 : i32
    return %c0_i32, %c0_i32_0 : i32, i32
  }
  func.func @transform_7(%arg0: i32) -> (i32, i32) {
    %c0_i32 = arith.constant 0 : i32
    %c0_i32_0 = arith.constant 0 : i32
    %c0_i32_1 = arith.constant 0 : i32
    return %c0_i32, %c0_i32_0 : i32, i32
  }
  func.func @transform_8(%arg0: i32) -> (i32, i32) {
    %c0_i32 = arith.constant 0 : i32
    %c0_i32_0 = arith.constant 0 : i32
    %c0_i32_1 = arith.constant 0 : i32
    return %c0_i32, %c0_i32_0 : i32, i32
  }
  func.func @transform_9(%arg0: i32) -> (i32, i32) {
    %c0_i32 = arith.constant 0 : i32
    %c0_i32_0 = arith.constant 0 : i32
    %c0_i32_1 = arith.constant 0 : i32
    return %c0_i32, %c0_i32_0 : i32, i32
  }
  func.func @transform_10(%arg0: i32) -> (i32, i32) {
    %c0_i32 = arith.constant 0 : i32
    %c0_i32_0 = arith.constant 0 : i32
    %c0_i32_1 = arith.constant 0 : i32
    return %c0_i32, %c0_i32_0 : i32, i32
  }
  func.func @transform_11(%arg0: i32) -> (i32, i32) {
    %c0_i32 = arith.constant 0 : i32
    %c0_i32_0 = arith.constant 0 : i32
    %c0_i32_1 = arith.constant 0 : i32
    return %c0_i32, %c0_i32_0 : i32, i32
  }
  func.func @transform_12(%arg0: i32) -> (i32, i32, i32) {
    %c0_i32 = arith.constant 0 : i32
    %c0_i32_0 = arith.constant 0 : i32
    %c0_i32_1 = arith.constant 0 : i32
    return %c0_i32, %arg0, %c0_i32_0 : i32, i32, i32
  }
}

</mosaic_0001>

<llo_original>
// kernel: tpu_custom_call.1
$region0: #{tpu_custom_call.1}
  #allocation0 [shape = 'u32[]', space=smem, size = 0x4, offset = 0x4, fixed_abs, tag = 'smem constant byte address 0x4 - core index']
  #allocation1 [shape = 'u32[144,128]{1,0:T(1,128)}', space=vmem, size = 0x12000, scoped, tag = 'internal scratch']
  #allocation2 [shape = 'f32[8,8,384]{2,1,0:T(8,128)}', space=vmem, size = 0x18000, scoped, tag = 'scratch operand']
  #allocation3 [shape = 'f32[1,8,384]{2,1,0:T(8,128)}', space=vmem, size = 0x3000, scoped, tag = 'scratch operand']
  #allocation4 [shape = 'f32[1,8,128]{2,1,0:T(8,128)}', space=vmem, size = 0x1000, scoped, tag = 'scratch operand']
  #allocation5 [shape = 'f32[8,8,128]{2,1,0:T(8,128)}', space=vmem, size = 0x8000, scoped, tag = 'scratch operand']
  %s0 = inlined_call_operand.hbm [shape: f32[8,8,128], index: 0, kind: input, shape index: {}]
  %s1 = inlined_call_operand.hbm [shape: f32[1,8,128], index: 1, kind: input, shape index: {}]
  %s2 = inlined_call_operand.hbm [shape: f32[128,384], index: 2, kind: input, shape index: {}]
  %s3 = inlined_call_operand.vmem [shape: f32[1,384], index: 3, kind: input, shape index: {}]
  %s4 = inlined_call_operand.hbm [shape: f32[128,384], index: 4, kind: input, shape index: {}]
  %s5 = inlined_call_operand.vmem [shape: f32[1,384], index: 5, kind: input, shape index: {}]
  %s6 = inlined_call_operand.hbm [shape: f32[128,768], index: 6, kind: input, shape index: {}]
  %s7 = inlined_call_operand.vmem [shape: f32[1,768], index: 7, kind: input, shape index: {}]
  %s8 = inlined_call_operand.hbm [shape: f32[128,128], index: 8, kind: input, shape index: {}]
  %s9 = inlined_call_operand.vmem [shape: f32[1,128], index: 9, kind: input, shape index: {}]
  %s10 = inlined_call_operand.hbm [shape: f32[128,128], index: 10, kind: input, shape index: {}]
  %s11 = inlined_call_operand.vmem [shape: f32[1,128], index: 11, kind: input, shape index: {}]
  %s12 = inlined_call_operand.hbm [shape: f32[8,8,128], index: 12, kind: output, shape index: {}]
  %s13 = sld [smem:[#allocation0]]
  $region86: #{tpu_custom_call.1} parent=0
    _
  %s15 = ssub.s32 1, %s13
  %s16 = scalar_select 0, %s15, %s13
  $region1: #{tpu_custom_call.1} parent=0
    #allocation6 [shape = 'u8[32768]{0}', space=vmem, size = 0x8000, scoped, tag = 'input window, operand 0, single buffered']
    #allocation7 [shape = 's32[1]{0}', space=sflag, size = 0x4, scoped, tag = 'scoped memory for tpu_custom_call.1']
    #allocation8 [shape = 's32[1]{0}', space=sflag, size = 0x4, scoped, tag = 'scoped memory for tpu_custom_call.1']
    #allocation9 [shape = 'u8[4096]{0}', space=vmem, size = 0x1000, scoped, tag = 'input window, operand 1, single buffered']
    #allocation10 [shape = 's32[1]{0}', space=sflag, size = 0x4, scoped, tag = 'scoped memory for tpu_custom_call.1']
    #allocation11 [shape = 'u8[196608]{0}', space=vmem, size = 0x30000, scoped, tag = 'input window, operand 2, single buffered']
    #allocation12 [shape = 'u8[196608]{0}', space=vmem, size = 0x30000, scoped, tag = 'input window, operand 4, single buffered']
    #allocation13 [shape = 's32[1]{0}', space=sflag, size = 0x4, scoped, tag = 'scoped memory for tpu_custom_call.1']
    #allocation14 [shape = 'u8[393216]{0}', space=vmem, size = 0x60000, scoped, tag = 'input window, operand 6, single buffered']
    #allocation15 [shape = 'u8[65536]{0}', space=vmem, size = 0x10000, scoped, tag = 'input window, operand 8, single buffered']
    #allocation16 [shape = 's32[1]{0}', space=sflag, size = 0x4, scoped, tag = 'scoped memory for tpu_custom_call.1']
    #allocation17 [shape = 'u8[65536]{0}', space=vmem, size = 0x10000, scoped, tag = 'input window, operand 10, single buffered']
    #allocation18 [shape = 'u8[32768]{0}', space=vmem, size = 0x8000, scoped, tag = 'output window, operand 0, single buffered']
    %17 = vsyncpa [#allocation7], 0
    %18 = vsyncpa [#allocation10], 0
    %19 = vsyncpa [#allocation13], 0
    %20 = vsyncpa [#allocation16], 0
    %21 = vsyncpa [#allocation8], 0
    // Predicated region
    $region2: #{tpu_custom_call.1} parent=1 // pred_check
      _
    $region3: #{tpu_custom_call.1} parent=1 // pred_check_branch
      %23 = sbr.rel (0) target = $region5
    $region4: #{tpu_custom_call.1} parent=1 // pred_region
      %s25 = ssub.s32 1024, 1024
      %26 = vsyncadd [#allocation7], %s25
      %s27 = sshll.u32 [#allocation6], 4
      %s28 = int_to_ptr.vmem [resolvable:$true] %s27
      %33 = dma.hbm_to_vmem [thread:$0]  %s0, 1024, %s28, [#allocation7], 128, 128, 8
    $region5: #{tpu_custom_call.1} parent=1 // pred_fallthru
      _
    // Predicated region
    $region6: #{tpu_custom_call.1} parent=1 // pred_check
      _
    $region7: #{tpu_custom_call.1} parent=1 // pred_check_branch
      %35 = sbr.rel (0) target = $region9
    $region8: #{tpu_custom_call.1} parent=1 // pred_region
      %s37 = ssub.s32 128, 128
      %38 = vsyncadd [#allocation10], %s37
      %s40 = sshll.u32 [#allocation9], 4
      %s41 = int_to_ptr.vmem [resolvable:$true] %s40
      %43 = dma.hbm_to_vmem [thread:$0]  %s1, 128, %s41, [#allocation10]
    $region9: #{tpu_custom_call.1} parent=1 // pred_fallthru
      _
    // Predicated region
    $region10: #{tpu_custom_call.1} parent=1 // pred_check
      _
    $region11: #{tpu_custom_call.1} parent=1 // pred_check_branch
      %45 = sbr.rel (0) target = $region13
    $region12: #{tpu_custom_call.1} parent=1 // pred_region
      %s47 = ssub.s32 6144, 6144
      %48 = vsyncadd [#allocation10], %s47
      %s49 = sshll.u32 [#allocation11], 4
      %s50 = int_to_ptr.vmem [resolvable:$true] %s49
      %55 = dma.hbm_to_vmem [thread:$0]  %s2, 6144, %s50, [#allocation10], 384, 384, 24
    $region13: #{tpu_custom_call.1} parent=1 // pred_fallthru
      _
    // Predicated region
    $region14: #{tpu_custom_call.1} parent=1 // pred_check
      _
    $region15: #{tpu_custom_call.1} parent=1 // pred_check_branch
      %57 = sbr.rel (0) target = $region17
    $region16: #{tpu_custom_call.1} parent=1 // pred_region
      _
    $region17: #{tpu_custom_call.1} parent=1 // pred_fallthru
      _
    // Predicated region
    $region18: #{tpu_custom_call.1} parent=1 // pred_check
      _
    $region19: #{tpu_custom_call.1} parent=1 // pred_check_branch
      %59 = sbr.rel (0) target = $region21
    $region20: #{tpu_custom_call.1} parent=1 // pred_region
      %s61 = ssub.s32 6144, 6144
      %62 = vsyncadd [#allocation13], %s61
      %s63 = sshll.u32 [#allocation12], 4
      %s64 = int_to_ptr.vmem [resolvable:$true] %s63
      %69 = dma.hbm_to_vmem [thread:$0]  %s4, 6144, %s64, [#allocation13], 384, 384, 24
    $region21: #{tpu_custom_call.1} parent=1 // pred_fallthru
      _
    // Predicated region
    $region22: #{tpu_custom_call.1} parent=1 // pred_check
      _
    $region23: #{tpu_custom_call.1} parent=1 // pred_check_branch
      %71 = sbr.rel (0) target = $region25
    $region24: #{tpu_custom_call.1} parent=1 // pred_region
      _
    $region25: #{tpu_custom_call.1} parent=1 // pred_fallthru
      _
    // Predicated region
    $region26: #{tpu_custom_call.1} parent=1 // pred_check
      _
    $region27: #{tpu_custom_call.1} parent=1 // pred_check_branch
      %73 = sbr.rel (0) target = $region29
    $region28: #{tpu_custom_call.1} parent=1 // pred_region
      %s75 = ssub.s32 12288, 12288
      %76 = vsyncadd [#allocation13], %s75
      %s77 = sshll.u32 [#allocation14], 4
      %s78 = int_to_ptr.vmem [resolvable:$true] %s77
      %83 = dma.hbm_to_vmem [thread:$0]  %s6, 12288, %s78, [#allocation13], 768, 768, 48
    $region29: #{tpu_custom_call.1} parent=1 // pred_fallthru
      _
    // Predicated region
    $region30: #{tpu_custom_call.1} parent=1 // pred_check
      _
    $region31: #{tpu_custom_call.1} parent=1 // pred_check_branch
      %85 = sbr.rel (0) target = $region33
    $region32: #{tpu_custom_call.1} parent=1 // pred_region
      _
    $region33: #{tpu_custom_call.1} parent=1 // pred_fallthru
      _
    // Predicated region
    $region34: #{tpu_custom_call.1} parent=1 // pred_check
      _
    $region35: #{tpu_custom_call.1} parent=1 // pred_check_branch
      %87 = sbr.rel (0) target = $region37
    $region36: #{tpu_custom_call.1} parent=1 // pred_region
      %s89 = ssub.s32 2048, 2048
      %90 = vsyncadd [#allocation16], %s89
      %s91 = sshll.u32 [#allocation15], 4
      %s92 = int_to_ptr.vmem [resolvable:$true] %s91
      %97 = dma.hbm_to_vmem [thread:$0]  %s8, 2048, %s92, [#allocation16], 128, 128, 8
    $region37: #{tpu_custom_call.1} parent=1 // pred_fallthru
      _
    // Predicated region
    $region38: #{tpu_custom_call.1} parent=1 // pred_check
      _
    $region39: #{tpu_custom_call.1} parent=1 // pred_check_branch
      %99 = sbr.rel (0) target = $region41
    $region40: #{tpu_custom_call.1} parent=1 // pred_region
      _
    $region41: #{tpu_custom_call.1} parent=1 // pred_fallthru
      _
    // Predicated region
    $region42: #{tpu_custom_call.1} parent=1 // pred_check
      _
    $region43: #{tpu_custom_call.1} parent=1 // pred_check_branch
      %101 = sbr.rel (0) target = $region45
    $region44: #{tpu_custom_call.1} parent=1 // pred_region
      %s103 = ssub.s32 2048, 2048
      %104 = vsyncadd [#allocation16], %s103
      %s105 = sshll.u32 [#allocation17], 4
      %s106 = int_to_ptr.vmem [resolvable:$true] %s105
      %111 = dma.hbm_to_vmem [thread:$0]  %s10, 2048, %s106, [#allocation16], 128, 128, 8
    $region45: #{tpu_custom_call.1} parent=1 // pred_fallthru
      _
    // Predicated region
    $region46: #{tpu_custom_call.1} parent=1 // pred_check
      _
    $region47: #{tpu_custom_call.1} parent=1 // pred_check_branch
      %113 = sbr.rel (0) target = $region49
    $region48: #{tpu_custom_call.1} parent=1 // pred_region
      _
    $region49: #{tpu_custom_call.1} parent=1 // pred_fallthru
      _
    // Predicated region
    $region50: #{tpu_custom_call.1} parent=1 // pred_check
      _
    $region51: #{tpu_custom_call.1} parent=1 // pred_check_branch
      %115 = sbr.rel (0) target = $region53
    $region52: #{tpu_custom_call.1} parent=1 // pred_region
      %116 = dma.done [#allocation7], 1024
    $region53: #{tpu_custom_call.1} parent=1 // pred_fallthru
      _
    // Predicated region
    $region54: #{tpu_custom_call.1} parent=1 // pred_check
      _
    $region55: #{tpu_custom_call.1} parent=1 // pred_check_branch
      %118 = sbr.rel (0) target = $region57
    $region56: #{tpu_custom_call.1} parent=1 // pred_region
      %119 = dma.done [#allocation10], 128
    $region57: #{tpu_custom_call.1} parent=1 // pred_fallthru
      _
    // Predicated region
    $region58: #{tpu_custom_call.1} parent=1 // pred_check
      _
    $region59: #{tpu_custom_call.1} parent=1 // pred_check_branch
      %121 = sbr.rel (0) target = $region61
    $region60: #{tpu_custom_call.1} parent=1 // pred_region
      %122 = dma.done [#allocation10], 6144
    $region61: #{tpu_custom_call.1} parent=1 // pred_fallthru
      _
    // Predicated region
    $region62: #{tpu_custom_call.1} parent=1 // pred_check
      _
    $region63: #{tpu_custom_call.1} parent=1 // pred_check_branch
      %124 = sbr.rel (0) target = $region65
    $region64: #{tpu_custom_call.1} parent=1 // pred_region
      %125 = dma.done [#allocation13], 6144
    $region65: #{tpu_custom_call.1} parent=1 // pred_fallthru
      _
    // Predicated region
    $region66: #{tpu_custom_call.1} parent=1 // pred_check
      _
    $region67: #{tpu_custom_call.1} parent=1 // pred_check_branch
      %127 = sbr.rel (0) target = $region69
    $region68: #{tpu_custom_call.1} parent=1 // pred_region
      %128 = dma.done [#allocation13], 12288
    $region69: #{tpu_custom_call.1} parent=1 // pred_fallthru
      _
    // Predicated region
    $region70: #{tpu_custom_call.1} parent=1 // pred_check
      _
    $region71: #{tpu_custom_call.1} parent=1 // pred_check_branch
      %130 = sbr.rel (0) target = $region73
    $region72: #{tpu_custom_call.1} parent=1 // pred_region
      %131 = dma.done [#allocation16], 2048
    $region73: #{tpu_custom_call.1} parent=1 // pred_fallthru
      _
    // Predicated region
    $region74: #{tpu_custom_call.1} parent=1 // pred_check
      _
    $region75: #{tpu_custom_call.1} parent=1 // pred_check_branch
      %133 = sbr.rel (0) target = $region77
    $region76: #{tpu_custom_call.1} parent=1 // pred_region
      %134 = dma.done [#allocation16], 2048
    $region77: #{tpu_custom_call.1} parent=1 // pred_fallthru
      _
    %v135 = vld [vmem:[#allocation11] sm:$0xff]
    %v136 = vld [vmem:[#allocation11 + $0x8] sm:$0xff]
    %v137 = vld [vmem:[#allocation11 + $0x10] sm:$0xff]
    %v138 = vld [vmem:[#allocation11 + $0x18] sm:$0xff]
    %v139 = vld [vmem:[#allocation11 + $0x20] sm:$0xff]
    %v140 = vld [vmem:[#allocation11 + $0x28] sm:$0xff]
    %v141 = vld [vmem:[#allocation11 + $0x30] sm:$0xff]
    %v142 = vld [vmem:[#allocation11 + $0x38] sm:$0xff]
    %v143 = vld [vmem:[#allocation11 + $0x40] sm:$0xff]
    %v144 = vld [vmem:[#allocation11 + $0x48] sm:$0xff]
    %v145 = vld [vmem:[#allocation11 + $0x50] sm:$0xff]
    %v146 = vld [vmem:[#allocation11 + $0x58] sm:$0xff]
    %v147 = vld [vmem:[#allocation11 + $0x60] sm:$0xff]
    %v148 = vld [vmem:[#allocation11 + $0x68] sm:$0xff]
    %v149 = vld [vmem:[#allocation11 + $0x70] sm:$0xff]
    %v150 = vld [vmem:[#allocation11 + $0x78] sm:$0xff]
    %v151 = vld [vmem:[#allocation11 + $0x80] sm:$0xff]
    %v152 = vld [vmem:[#allocation11 + $0x88] sm:$0xff]
    %v153 = vld [vmem:[#allocation11 + $0x90] sm:$0xff]
    %v154 = vld [vmem:[#allocation11 + $0x98] sm:$0xff]
    %v155 = vld [vmem:[#allocation11 + $0xa0] sm:$0xff]
    %v156 = vld [vmem:[#allocation11 + $0xa8] sm:$0xff]
    %v157 = vld [vmem:[#allocation11 + $0xb0] sm:$0xff]
    %v158 = vld [vmem:[#allocation11 + $0xb8] sm:$0xff]
    %v159 = vld [vmem:[#allocation11 + $0xc0] sm:$0xff]
    %v160 = vld [vmem:[#allocation11 + $0xc8] sm:$0xff]
    %v161 = vld [vmem:[#allocation11 + $0xd0] sm:$0xff]
    %v162 = vld [vmem:[#allocation11 + $0xd8] sm:$0xff]
    %v163 = vld [vmem:[#allocation11 + $0xe0] sm:$0xff]
    %v164 = vld [vmem:[#allocation11 + $0xe8] sm:$0xff]
    %v165 = vld [vmem:[#allocation11 + $0xf0] sm:$0xff]
    %v166 = vld [vmem:[#allocation11 + $0xf8] sm:$0xff]
    %v167 = vld [vmem:[#allocation11 + $0x100] sm:$0xff]
    %v168 = vld [vmem:[#allocation11 + $0x108] sm:$0xff]
    %v169 = vld [vmem:[#allocation11 + $0x110] sm:$0xff]
    %v170 = vld [vmem:[#allocation11 + $0x118] sm:$0xff]
    %v171 = vld [vmem:[#allocation11 + $0x120] sm:$0xff]
    %v172 = vld [vmem:[#allocation11 + $0x128] sm:$0xff]
    %v173 = vld [vmem:[#allocation11 + $0x130] sm:$0xff]
    %v174 = vld [vmem:[#allocation11 + $0x138] sm:$0xff]
    %v175 = vld [vmem:[#allocation11 + $0x140] sm:$0xff]
    %v176 = vld [vmem:[#allocation11 + $0x148] sm:$0xff]
    %v177 = vld [vmem:[#allocation11 + $0x150] sm:$0xff]
    %v178 = vld [vmem:[#allocation11 + $0x158] sm:$0xff]
    %v179 = vld [vmem:[#allocation11 + $0x160] sm:$0xff]
    %v180 = vld [vmem:[#allocation11 + $0x168] sm:$0xff]
    %v181 = vld [vmem:[#allocation11 + $0x170] sm:$0xff]
    %v182 = vld [vmem:[#allocation11 + $0x178] sm:$0xff]
    %v183 = vld [vmem:[%s3] sm:$0x7]
    %v184 = vld [vmem:[#allocation12] sm:$0xff]
    %v185 = vld [vmem:[#allocation12 + $0x8] sm:$0xff]
    %v186 = vld [vmem:[#allocation12 + $0x10] sm:$0xff]
    %v187 = vld [vmem:[#allocation12 + $0x18] sm:$0xff]
    %v188 = vld [vmem:[#allocation12 + $0x20] sm:$0xff]
    %v189 = vld [vmem:[#allocation12 + $0x28] sm:$0xff]
    %v190 = vld [vmem:[#allocation12 + $0x30] sm:$0xff]
    %v191 = vld [vmem:[#allocation12 + $0x38] sm:$0xff]
    %v192 = vld [vmem:[#allocation12 + $0x40] sm:$0xff]
    %v193 = vld [vmem:[#allocation12 + $0x48] sm:$0xff]
    %v194 = vld [vmem:[#allocation12 + $0x50] sm:$0xff]
    %v195 = vld [vmem:[#allocation12 + $0x58] sm:$0xff]
    %v196 = vld [vmem:[#allocation12 + $0x60] sm:$0xff]
    %v197 = vld [vmem:[#allocation12 + $0x68] sm:$0xff]
    %v198 = vld [vmem:[#allocation12 + $0x70] sm:$0xff]
    %v199 = vld [vmem:[#allocation12 + $0x78] sm:$0xff]
    %v200 = vld [vmem:[#allocation12 + $0x80] sm:$0xff]
    %v201 = vld [vmem:[#allocation12 + $0x88] sm:$0xff]
    %v202 = vld [vmem:[#allocation12 + $0x90] sm:$0xff]
    %v203 = vld [vmem:[#allocation12 + $0x98] sm:$0xff]
    %v204 = vld [vmem:[#allocation12 + $0xa0] sm:$0xff]
    %v205 = vld [vmem:[#allocation12 + $0xa8] sm:$0xff]
    %v206 = vld [vmem:[#allocation12 + $0xb0] sm:$0xff]
    %v207 = vld [vmem:[#allocation12 + $0xb8] sm:$0xff]
    %v208 = vld [vmem:[#allocation12 + $0xc0] sm:$0xff]
    %v209 = vld [vmem:[#allocation12 + $0xc8] sm:$0xff]
    %v210 = vld [vmem:[#allocation12 + $0xd0] sm:$0xff]
    %v211 = vld [vmem:[#allocation12 + $0xd8] sm:$0xff]
    %v212 = vld [vmem:[#allocation12 + $0xe0] sm:$0xff]
    %v213 = vld [vmem:[#allocation12 + $0xe8] sm:$0xff]
    %v214 = vld [vmem:[#allocation12 + $0xf0] sm:$0xff]
    %v215 = vld [vmem:[#allocation12 + $0xf8] sm:$0xff]
    %v216 = vld [vmem:[#allocation12 + $0x100] sm:$0xff]
    %v217 = vld [vmem:[#allocation12 + $0x108] sm:$0xff]
    %v218 = vld [vmem:[#allocation12 + $0x110] sm:$0xff]
    %v219 = vld [vmem:[#allocation12 + $0x118] sm:$0xff]
    %v220 = vld [vmem:[#allocation12 + $0x120] sm:$0xff]
    %v221 = vld [vmem:[#allocation12 + $0x128] sm:$0xff]
    %v222 = vld [vmem:[#allocation12 + $0x130] sm:$0xff]
    %v223 = vld [vmem:[#allocation12 + $0x138] sm:$0xff]
    %v224 = vld [vmem:[#allocation12 + $0x140] sm:$0xff]
    %v225 = vld [vmem:[#allocation12 + $0x148] sm:$0xff]
    %v226 = vld [vmem:[#allocation12 + $0x150] sm:$0xff]
    %v227 = vld [vmem:[#allocation12 + $0x158] sm:$0xff]
    %v228 = vld [vmem:[#allocation12 + $0x160] sm:$0xff]
    %v229 = vld [vmem:[#allocation12 + $0x168] sm:$0xff]
    %v230 = vld [vmem:[#allocation12 + $0x170] sm:$0xff]
    %v231 = vld [vmem:[#allocation12 + $0x178] sm:$0xff]
    %v232 = vld [vmem:[%s5] sm:$0x7]
    %v234 = vlaneseq
    %v235 = vshrl.u32 %v234, 7
    %v236 = vsub.s32 0, %v235
    %v237 = vrot.slane %v232, %v236
    %v238 = vlaneseq
    %v239 = vshrl.u32 %v238, 7
    %v240 = vsub.s32 1, %v239
    %v241 = vrot.slane %v232, %v240
    %v242 = vlaneseq
    %v243 = vshrl.u32 %v242, 7
    %v244 = vsub.s32 2, %v243
    %v245 = vrot.slane %v232, %v244
    %v249 = vld [vmem:[#allocation6] sm:$0xff]
    %v250 = vld [vmem:[#allocation6 + $0x8] sm:$0xff]
    %v251 = vld [vmem:[#allocation6 + $0x10] sm:$0xff]
    %v252 = vld [vmem:[#allocation6 + $0x18] sm:$0xff]
    %v253 = vld [vmem:[#allocation6 + $0x20] sm:$0xff]
    %v254 = vld [vmem:[#allocation6 + $0x28] sm:$0xff]
    %v255 = vld [vmem:[#allocation6 + $0x30] sm:$0xff]
    %v256 = vld [vmem:[#allocation6 + $0x38] sm:$0xff]
    %v258 = vlaneseq
    %v259 = vshrl.u32 %v258, 7
    %v260 = vsub.s32 0, %v259
    %v261 = vrot.slane %v183, %v260
    %v262 = vlaneseq
    %v263 = vshrl.u32 %v262, 7
    %v264 = vsub.s32 1, %v263
    %v265 = vrot.slane %v183, %v264
    %v266 = vlaneseq
    %v267 = vshrl.u32 %v266, 7
    %v268 = vsub.s32 2, %v267
    %v269 = vrot.slane %v183, %v268
    %273 = vmatprep.subr.mxu0 %v136
    %274 = vmatpush1.msra.mxu0 %v135
    %275 = vmatprep.subr.mxu0 %v139
    %276 = vmatpush1.msra.mxu0 %v138
    %277 = vmatprep.subr.mxu0 %v142
    %278 = vmatpush1.msra.mxu0 %v141
    %279 = vmatprep.subr.mxu0 %v145
    %280 = vmatpush1.msra.mxu0 %v144
    %281 = vmatprep.subr.mxu0 %v148
    %282 = vmatpush1.msra.mxu0 %v147
    %283 = vmatprep.subr.mxu0 %v151
    %284 = vmatpush1.msra.mxu0 %v150
    %285 = vmatprep.subr.mxu0 %v154
    %286 = vmatpush1.msra.mxu0 %v153
    %287 = vmatprep.subr.mxu0 %v157
    %288 = vmatpush1.msra.mxu0 %v156
    %289 = vmatprep.subr.mxu0 %v160
    %290 = vmatpush1.msra.mxu0 %v159
    %291 = vmatprep.subr.mxu0 %v163
    %292 = vmatpush1.msra.mxu0 %v162
    %293 = vmatprep.subr.mxu0 %v166
    %294 = vmatpush1.msra.mxu0 %v165
    %295 = vmatprep.subr.mxu0 %v169
    %296 = vmatpush1.msra.mxu0 %v168
    %297 = vmatprep.subr.mxu0 %v172
    %298 = vmatpush1.msra.mxu0 %v171
    %299 = vmatprep.subr.mxu0 %v175
    %300 = vmatpush1.msra.mxu0 %v174
    %301 = vmatprep.subr.mxu0 %v178
    %302 = vmatpush1.msra.mxu0 %v177
    %303 = vmatprep.subr.mxu0 %v181
    %304 = vmatpush1.msra.mxu0 %v180
    %305 = vmatprep.subr.mxu0 0.0
    %306 = vmatpush1.msra.mxu0 0.0
    %307 = vmatprep.subr.mxu0 0.0
    %308 = vmatpush1.msra.mxu0 0.0
    %309 = vmatprep.subr.mxu0 0.0
    %310 = vmatpush1.msra.mxu0 0.0
    %311 = vmatprep.subr.mxu0 0.0
    %312 = vmatpush1.msra.mxu0 0.0
    %313 = vmatprep.subr.mxu0 0.0
    %314 = vmatpush1.msra.mxu0 0.0
    %315 = vmatprep.subr.mxu0 0.0
    %316 = vmatpush1.msra.mxu0 0.0
    %317 = vmatprep.subr.mxu0 0.0
    %318 = vmatpush1.msra.mxu0 0.0
    %319 = vmatprep.subr.mxu0 0.0
    %320 = vmatpush1.msra.mxu0 0.0
    %321 = vmatprep.subr.mxu0 0.0
    %322 = vmatpush1.msra.mxu0 0.0
    %323 = vmatprep.subr.mxu0 0.0
    %324 = vmatpush1.msra.mxu0 0.0
    %325 = vmatprep.subr.mxu0 0.0
    %326 = vmatpush1.msra.mxu0 0.0
    %327 = vmatprep.subr.mxu0 0.0
    %328 = vmatpush1.msra.mxu0 0.0
    %329 = vmatprep.subr.mxu0 0.0
    %330 = vmatpush1.msra.mxu0 0.0
    %331 = vmatprep.subr.mxu0 0.0
    %332 = vmatpush1.msra.mxu0 0.0
    %333 = vmatprep.subr.mxu0 0.0
    %334 = vmatpush1.msra.mxu0 0.0
    %335 = vmatprep.subr.mxu0 0.0
    %336 = vmatpush1.msra.mxu0 0.0
    %337 = vmatprep.mubr.f32.mxu0 0.0
    %338 = vmatmul.mubr.f32.gmra.mrb[0].mxu0 %v249
    %v339 = vpop.f32.mrb[0].mxu0
    %v340 = vadd.f32 %v261, %v339
    %v341 = vpop.f32.mrb[0].mxu0
    %v342 = vadd.f32 %v265, %v341
    %343 = vmatprep.mubr.f32.mxu0 0.0
    %344 = vmatmul.mubr.f32.gmra.mrb[0].mxu0 %v250
    %v345 = vpop.f32.mrb[0].mxu0
    %v346 = vadd.f32 %v261, %v345
    %v347 = vpop.f32.mrb[0].mxu0
    %v348 = vadd.f32 %v265, %v347
    %349 = vmatprep.mubr.f32.mxu0 0.0
    %350 = vmatmul.mubr.f32.gmra.mrb[0].mxu0 %v251
    %v351 = vpop.f32.mrb[0].mxu0
    %v352 = vadd.f32 %v261, %v351
    %v353 = vpop.f32.mrb[0].mxu0
    %v354 = vadd.f32 %v265, %v353
    %355 = vmatprep.mubr.f32.mxu0 0.0
    %356 = vmatmul.mubr.f32.gmra.mrb[0].mxu0 %v252
    %v357 = vpop.f32.mrb[0].mxu0
    %v358 = vadd.f32 %v261, %v357
    %v359 = vpop.f32.mrb[0].mxu0
    %v360 = vadd.f32 %v265, %v359
    %361 = vmatprep.mubr.f32.mxu0 0.0
    %362 = vmatmul.mubr.f32.gmra.mrb[0].mxu0 %v253
    %v363 = vpop.f32.mrb[0].mxu0
    %v364 = vadd.f32 %v261, %v363
    %v365 = vpop.f32.mrb[0].mxu0
    %v366 = vadd.f32 %v265, %v365
    %367 = vmatprep.mubr.f32.mxu0 0.0
    %368 = vmatmul.mubr.f32.gmra.mrb[0].mxu0 %v254
    %v369 = vpop.f32.mrb[0].mxu0
    %v370 = vadd.f32 %v261, %v369
    %v371 = vpop.f32.mrb[0].mxu0
    %v372 = vadd.f32 %v265, %v371
    %373 = vmatprep.mubr.f32.mxu0 0.0
    %374 = vmatmul.mubr.f32.gmra.mrb[0].mxu0 %v255
    %v375 = vpop.f32.mrb[0].mxu0
    %v376 = vadd.f32 %v261, %v375
    %v377 = vpop.f32.mrb[0].mxu0
    %v378 = vadd.f32 %v265, %v377
    %379 = vmatprep.mubr.f32.mxu0 0.0
    %380 = vmatmul.mubr.f32.gmra.mrb[0].mxu0 %v256
    %v381 = vpop.f32.mrb[0].mxu0
    %v382 = vadd.f32 %v261, %v381
    %v383 = vpop.f32.mrb[0].mxu0
    %v384 = vadd.f32 %v265, %v383
    %385 = vdwg.mxu0
    %386 = vmatprep.subr.mxu0 0.0
    %387 = vmatpush1.msra.mxu0 %v137
    %388 = vmatprep.subr.mxu0 0.0
    %389 = vmatpush1.msra.mxu0 %v140
    %390 = vmatprep.subr.mxu0 0.0
    %391 = vmatpush1.msra.mxu0 %v143
    %392 = vmatprep.subr.mxu0 0.0
    %393 = vmatpush1.msra.mxu0 %v146
    %394 = vmatprep.subr.mxu0 0.0
    %395 = vmatpush1.msra.mxu0 %v149
    %396 = vmatprep.subr.mxu0 0.0
    %397 = vmatpush1.msra.mxu0 %v152
    %398 = vmatprep.subr.mxu0 0.0
    %399 = vmatpush1.msra.mxu0 %v155
    %400 = vmatprep.subr.mxu0 0.0
    %401 = vmatpush1.msra.mxu0 %v158
    %402 = vmatprep.subr.mxu0 0.0
    %403 = vmatpush1.msra.mxu0 %v161
    %404 = vmatprep.subr.mxu0 0.0
    %405 = vmatpush1.msra.mxu0 %v164
    %406 = vmatprep.subr.mxu0 0.0
    %407 = vmatpush1.msra.mxu0 %v167
    %408 = vmatprep.subr.mxu0 0.0
    %409 = vmatpush1.msra.mxu0 %v170
    %410 = vmatprep.subr.mxu0 0.0
    %411 = vmatpush1.msra.mxu0 %v173
    %412 = vmatprep.subr.mxu0 0.0
    %413 = vmatpush1.msra.mxu0 %v176
    %414 = vmatprep.subr.mxu0 0.0
    %415 = vmatpush1.msra.mxu0 %v179
    %416 = vmatprep.subr.mxu0 0.0
    %417 = vmatpush1.msra.mxu0 %v182
    %418 = vmatprep.subr.mxu0 0.0
    %419 = vmatpush1.msra.mxu0 0.0
    %420 = vmatprep.subr.mxu0 0.0
    %421 = vmatpush1.msra.mxu0 0.0
    %422 = vmatprep.subr.mxu0 0.0
    %423 = vmatpush1.msra.mxu0 0.0
    %424 = vmatprep.subr.mxu0 0.0
    %425 = vmatpush1.msra.mxu0 0.0
    %426 = vmatprep.subr.mxu0 0.0
    %427 = vmatpush1.msra.mxu0 0.0
    %428 = vmatprep.subr.mxu0 0.0
    %429 = vmatpush1.msra.mxu0 0.0
    %430 = vmatprep.subr.mxu0 0.0
    %431 = vmatpush1.msra.mxu0 0.0
    %432 = vmatprep.subr.mxu0 0.0
    %433 = vmatpush1.msra.mxu0 0.0
    %434 = vmatprep.subr.mxu0 0.0
    %435 = vmatpush1.msra.mxu0 0.0
    %436 = vmatprep.subr.mxu0 0.0
    %437 = vmatpush1.msra.mxu0 0.0
    %438 = vmatprep.subr.mxu0 0.0
    %439 = vmatpush1.msra.mxu0 0.0
    %440 = vmatprep.subr.mxu0 0.0
    %441 = vmatpush1.msra.mxu0 0.0
    %442 = vmatprep.subr.mxu0 0.0
    %443 = vmatpush1.msra.mxu0 0.0
    %444 = vmatprep.subr.mxu0 0.0
    %445 = vmatpush1.msra.mxu0 0.0
    %446 = vmatprep.subr.mxu0 0.0
    %447 = vmatpush1.msra.mxu0 0.0
    %448 = vmatprep.subr.mxu0 0.0
    %449 = vmatpush1.msra.mxu0 0.0
    %450 = vmatprep.mubr.f32.mxu0 0.0
    %451 = vmatmul.mubr.f32.gmra.mrb[0].mxu0 %v249
    %v452 = vpop.f32.mrb[0].mxu0
    %v453 = vadd.f32 %v269, %v452
    %v454 = vpop.f32.mrb[0].mxu0
    %455 = vmatprep.mubr.f32.mxu0 0.0
    %456 = vmatmul.mubr.f32.gmra.mrb[0].mxu0 %v250
    %v457 = vpop.f32.mrb[0].mxu0
    %v458 = vadd.f32 %v269, %v457
    %v459 = vpop.f32.mrb[0].mxu0
    %460 = vmatprep.mubr.f32.mxu0 0.0
    %461 = vmatmul.mubr.f32.gmra.mrb[0].mxu0 %v251
    %v462 = vpop.f32.mrb[0].mxu0
    %v463 = vadd.f32 %v269, %v462
    %v464 = vpop.f32.mrb[0].mxu0
    %465 = vmatprep.mubr.f32.mxu0 0.0
    %466 = vmatmul.mubr.f32.gmra.mrb[0].mxu0 %v252
    %v467 = vpop.f32.mrb[0].mxu0
    %v468 = vadd.f32 %v269, %v467
    %v469 = vpop.f32.mrb[0].mxu0
    %470 = vmatprep.mubr.f32.mxu0 0.0
    %471 = vmatmul.mubr.f32.gmra.mrb[0].mxu0 %v253
    %v472 = vpop.f32.mrb[0].mxu0
    %v473 = vadd.f32 %v269, %v472
    %v474 = vpop.f32.mrb[0].mxu0
    %475 = vmatprep.mubr.f32.mxu0 0.0
    %476 = vmatmul.mubr.f32.gmra.mrb[0].mxu0 %v254
    %v477 = vpop.f32.mrb[0].mxu0
    %v478 = vadd.f32 %v269, %v477
    %v479 = vpop.f32.mrb[0].mxu0
    %480 = vmatprep.mubr.f32.mxu0 0.0
    %481 = vmatmul.mubr.f32.gmra.mrb[0].mxu0 %v255
    %v482 = vpop.f32.mrb[0].mxu0
    %v483 = vadd.f32 %v269, %v482
    %v484 = vpop.f32.mrb[0].mxu0
    %485 = vmatprep.mubr.f32.mxu0 0.0
    %486 = vmatmul.mubr.f32.gmra.mrb[0].mxu0 %v256
    %v487 = vpop.f32.mrb[0].mxu0
    %v488 = vadd.f32 %v269, %v487
    %v489 = vpop.f32.mrb[0].mxu0
    %490 = vdwg.mxu0
    %491 = vst [vmem:[#allocation2] sm:$0xff] %v340
    %492 = vst [vmem:[#allocation2 + $0x8] sm:$0xff] %v342
    %493 = vst [vmem:[#allocation2 + $0x10] sm:$0xff] %v453
    %494 = vst [vmem:[#allocation2 + $0x18] sm:$0xff] %v346
    %495 = vst [vmem:[#allocation2 + $0x20] sm:$0xff] %v348
    %496 = vst [vmem:[#allocation2 + $0x28] sm:$0xff] %v458
    %497 = vst [vmem:[#allocation2 + $0x30] sm:$0xff] %v352
    %498 = vst [vmem:[#allocation2 + $0x38] sm:$0xff] %v354
    %499 = vst [vmem:[#allocation2 + $0x40] sm:$0xff] %v463
    %500 = vst [vmem:[#allocation2 + $0x48] sm:$0xff] %v358
    %501 = vst [vmem:[#allocation2 + $0x50] sm:$0xff] %v360
    %502 = vst [vmem:[#allocation2 + $0x58] sm:$0xff] %v468
    %503 = vst [vmem:[#allocation2 + $0x60] sm:$0xff] %v364
    %504 = vst [vmem:[#allocation2 + $0x68] sm:$0xff] %v366
    %505 = vst [vmem:[#allocation2 + $0x70] sm:$0xff] %v473
    %506 = vst [vmem:[#allocation2 + $0x78] sm:$0xff] %v370
    %507 = vst [vmem:[#allocation2 + $0x80] sm:$0xff] %v372
    %508 = vst [vmem:[#allocation2 + $0x88] sm:$0xff] %v478
    %509 = vst [vmem:[#allocation2 + $0x90] sm:$0xff] %v376
    %510 = vst [vmem:[#allocation2 + $0x98] sm:$0xff] %v378
    %511 = vst [vmem:[#allocation2 + $0xa0] sm:$0xff] %v483
    %512 = vst [vmem:[#allocation2 + $0xa8] sm:$0xff] %v382
    %513 = vst [vmem:[#allocation2 + $0xb0] sm:$0xff] %v384
    %514 = vst [vmem:[#allocation2 + $0xb8] sm:$0xff] %v488
    %515 = vmatprep.subr.mxu0 %v185
    %516 = vmatpush1.msra.mxu0 %v184
    %517 = vmatprep.subr.mxu0 %v188
    %518 = vmatpush1.msra.mxu0 %v187
    %519 = vmatprep.subr.mxu0 %v191
    %520 = vmatpush1.msra.mxu0 %v190
    %521 = vmatprep.subr.mxu0 %v194
    %522 = vmatpush1.msra.mxu0 %v193
    %523 = vmatprep.subr.mxu0 %v197
    %524 = vmatpush1.msra.mxu0 %v196
    %525 = vmatprep.subr.mxu0 %v200
    %526 = vmatpush1.msra.mxu0 %v199
    %527 = vmatprep.subr.mxu0 %v203
    %528 = vmatpush1.msra.mxu0 %v202
    %529 = vmatprep.subr.mxu0 %v206
    %530 = vmatpush1.msra.mxu0 %v205
    %531 = vmatprep.subr.mxu0 %v209
    %532 = vmatpush1.msra.mxu0 %v208
    %533 = vmatprep.subr.mxu0 %v212
    %534 = vmatpush1.msra.mxu0 %v211
    %535 = vmatprep.subr.mxu0 %v215
    %536 = vmatpush1.msra.mxu0 %v214
    %537 = vmatprep.subr.mxu0 %v218
    %538 = vmatpush1.msra.mxu0 %v217
    %539 = vmatprep.subr.mxu0 %v221
    %540 = vmatpush1.msra.mxu0 %v220
    %541 = vmatprep.subr.mxu0 %v224
    %542 = vmatpush1.msra.mxu0 %v223
    %543 = vmatprep.subr.mxu0 %v227
    %544 = vmatpush1.msra.mxu0 %v226
    %545 = vmatprep.subr.mxu0 %v230
    %546 = vmatpush1.msra.mxu0 %v229
    %547 = vmatprep.subr.mxu0 0.0
    %548 = vmatpush1.msra.mxu0 0.0
    %549 = vmatprep.subr.mxu0 0.0
    %550 = vmatpush1.msra.mxu0 0.0
    %551 = vmatprep.subr.mxu0 0.0
    %552 = vmatpush1.msra.mxu0 0.0
    %553 = vmatprep.subr.mxu0 0.0
    %554 = vmatpush1.msra.mxu0 0.0
    %555 = vmatprep.subr.mxu0 0.0
    %556 = vmatpush1.msra.mxu0 0.0
    %557 = vmatprep.subr.mxu0 0.0
    %558 = vmatpush1.msra.mxu0 0.0
    %559 = vmatprep.subr.mxu0 0.0
    %560 = vmatpush1.msra.mxu0 0.0
    %561 = vmatprep.subr.mxu0 0.0
    %562 = vmatpush1.msra.mxu0 0.0
    %563 = vmatprep.subr.mxu0 0.0
    %564 = vmatpush1.msra.mxu0 0.0
    %565 = vmatprep.subr.mxu0 0.0
    %566 = vmatpush1.msra.mxu0 0.0
    %567 = vmatprep.subr.mxu0 0.0
    %568 = vmatpush1.msra.mxu0 0.0
    %569 = vmatprep.subr.mxu0 0.0
    %570 = vmatpush1.msra.mxu0 0.0
    %571 = vmatprep.subr.mxu0 0.0
    %572 = vmatpush1.msra.mxu0 0.0
    %573 = vmatprep.subr.mxu0 0.0
    %574 = vmatpush1.msra.mxu0 0.0
    %575 = vmatprep.subr.mxu0 0.0
    %576 = vmatpush1.msra.mxu0 0.0
    %577 = vmatprep.subr.mxu0 0.0
    %578 = vmatpush1.msra.mxu0 0.0
    %579 = vmatprep.mubr.f32.mxu0 0.0
    %580 = vmatmul.mubr.f32.gmra.mrb[0].mxu0 0.0
    %v581 = vpop.f32.mrb[0].mxu0
    %v582 = vadd.f32 %v237, %v581
    %v583 = vpop.f32.mrb[0].mxu0
    %v584 = vadd.f32 %v241, %v583
    %585 = vdwg.mxu0
    %586 = vmatprep.subr.mxu0 0.0
    %587 = vmatpush1.msra.mxu0 %v186
    %588 = vmatprep.subr.mxu0 0.0
    %589 = vmatpush1.msra.mxu0 %v189
    %590 = vmatprep.subr.mxu0 0.0
    %591 = vmatpush1.msra.mxu0 %v192
    %592 = vmatprep.subr.mxu0 0.0
    %593 = vmatpush1.msra.mxu0 %v195
    %594 = vmatprep.subr.mxu0 0.0
    %595 = vmatpush1.msra.mxu0 %v198
    %596 = vmatprep.subr.mxu0 0.0
    %597 = vmatpush1.msra.mxu0 %v201
    %598 = vmatprep.subr.mxu0 0.0
    %599 = vmatpush1.msra.mxu0 %v204
    %600 = vmatprep.subr.mxu0 0.0
    %601 = vmatpush1.msra.mxu0 %v207
    %602 = vmatprep.subr.mxu0 0.0
    %603 = vmatpush1.msra.mxu0 %v210
    %604 = vmatprep.subr.mxu0 0.0
    %605 = vmatpush1.msra.mxu0 %v213
    %606 = vmatprep.subr.mxu0 0.0
    %607 = vmatpush1.msra.mxu0 %v216
    %608 = vmatprep.subr.mxu0 0.0
    %609 = vmatpush1.msra.mxu0 %v219
    %610 = vmatprep.subr.mxu0 0.0
    %611 = vmatpush1.msra.mxu0 %v222
    %612 = vmatprep.subr.mxu0 0.0
    %613 = vmatpush1.msra.mxu0 %v225
    %614 = vmatprep.subr.mxu0 0.0
    %615 = vmatpush1.msra.mxu0 %v228
    %616 = vmatprep.subr.mxu0 0.0
    %617 = vmatpush1.msra.mxu0 %v231
    %618 = vmatprep.subr.mxu0 0.0
    %619 = vmatpush1.msra.mxu0 0.0
    %620 = vmatprep.subr.mxu0 0.0
    %621 = vmatpush1.msra.mxu0 0.0
    %622 = vmatprep.subr.mxu0 0.0
    %623 = vmatpush1.msra.mxu0 0.0
    %624 = vmatprep.subr.mxu0 0.0
    %625 = vmatpush1.msra.mxu0 0.0
    %626 = vmatprep.subr.mxu0 0.0
    %627 = vmatpush1.msra.mxu0 0.0
    %628 = vmatprep.subr.mxu0 0.0
    %629 = vmatpush1.msra.mxu0 0.0
    %630 = vmatprep.subr.mxu0 0.0
    %631 = vmatpush1.msra.mxu0 0.0
    %632 = vmatprep.subr.mxu0 0.0
    %633 = vmatpush1.msra.mxu0 0.0
    %634 = vmatprep.subr.mxu0 0.0
    %635 = vmatpush1.msra.mxu0 0.0
    %636 = vmatprep.subr.mxu0 0.0
    %637 = vmatpush1.msra.mxu0 0.0
    %638 = vmatprep.subr.mxu0 0.0
    %639 = vmatpush1.msra.mxu0 0.0
    %640 = vmatprep.subr.mxu0 0.0
    %641 = vmatpush1.msra.mxu0 0.0
    %642 = vmatprep.subr.mxu0 0.0
    %643 = vmatpush1.msra.mxu0 0.0
    %644 = vmatprep.subr.mxu0 0.0
    %645 = vmatpush1.msra.mxu0 0.0
    %646 = vmatprep.subr.mxu0 0.0
    %647 = vmatpush1.msra.mxu0 0.0
    %648 = vmatprep.subr.mxu0 0.0
    %649 = vmatpush1.msra.mxu0 0.0
    %650 = vmatprep.mubr.f32.mxu0 0.0
    %651 = vmatmul.mubr.f32.gmra.mrb[0].mxu0 0.0
    %v652 = vpop.f32.mrb[0].mxu0
    %v653 = vadd.f32 %v245, %v652
    %v654 = vpop.f32.mrb[0].mxu0
    %655 = vdwg.mxu0
    %v656 = vld [vmem:[#allocation2] sm:$0xff]
    %v657 = vld [vmem:[#allocation2 + $0x8] sm:$0xff]
    %v658 = vld [vmem:[#allocation2 + $0x10] sm:$0xff]
    %v659 = vadd.f32 %v656, %v582
    %v660 = vxor.u32 %v659, 2147483648
    %v661 = vmul.f32 %v660, 1.442695
    %v662 = vpow.pop %v661
    %v663 = vadd.f32 %v662, 1.0
    %v664 = vrcp.pop %v663
    %v665 = vmul.f32 1.0, %v664
    %v666 = vadd.f32 %v657, %v584
    %v667 = vxor.u32 %v666, 2147483648
    %v668 = vmul.f32 %v667, 1.442695
    %v669 = vpow.pop %v668
    %v670 = vadd.f32 %v669, 1.0
    %v671 = vrcp.pop %v670
    %v672 = vmul.f32 1.0, %v671
    %v673 = vmul.f32 %v665, %v653
    %v674 = vadd.f32 %v658, %v673
    %v675 = vtanh.pop %v674
    %v676 = vsub.f32 1.0, %v672
    %v677 = vmul.f32 %v676, %v675
    %v678 = vmul.f32 %v672, 0.0
    %v679 = vadd.f32 %v677, %v678
    %680 = vmatprep.subr.mxu0 %v185
    %681 = vmatpush1.msra.mxu0 %v184
    %682 = vmatprep.subr.mxu0 %v188
    %683 = vmatpush1.msra.mxu0 %v187
    %684 = vmatprep.subr.mxu0 %v191
    %685 = vmatpush1.msra.mxu0 %v190
    %686 = vmatprep.subr.mxu0 %v194
    %687 = vmatpush1.msra.mxu0 %v193
    %688 = vmatprep.subr.mxu0 %v197
    %689 = vmatpush1.msra.mxu0 %v196
    %690 = vmatprep.subr.mxu0 %v200
    %691 = vmatpush1.msra.mxu0 %v199
    %692 = vmatprep.subr.mxu0 %v203
    %693 = vmatpush1.msra.mxu0 %v202
    %694 = vmatprep.subr.mxu0 %v206
    %695 = vmatpush1.msra.mxu0 %v205
    %696 = vmatprep.subr.mxu0 %v209
    %697 = vmatpush1.msra.mxu0 %v208
    %698 = vmatprep.subr.mxu0 %v212
    %699 = vmatpush1.msra.mxu0 %v211
    %700 = vmatprep.subr.mxu0 %v215
    %701 = vmatpush1.msra.mxu0 %v214
    %702 = vmatprep.subr.mxu0 %v218
    %703 = vmatpush1.msra.mxu0 %v217
    %704 = vmatprep.subr.mxu0 %v221
    %705 = vmatpush1.msra.mxu0 %v220
    %706 = vmatprep.subr.mxu0 %v224
    %707 = vmatpush1.msra.mxu0 %v223
    %708 = vmatprep.subr.mxu0 %v227
    %709 = vmatpush1.msra.mxu0 %v226
    %710 = vmatprep.subr.mxu0 %v230
    %711 = vmatpush1.msra.mxu0 %v229
    %712 = vmatprep.subr.mxu0 0.0
    %713 = vmatpush1.msra.mxu0 0.0
    %714 = vmatprep.subr.mxu0 0.0
    %715 = vmatpush1.msra.mxu0 0.0
    %716 = vmatprep.subr.mxu0 0.0
    %717 = vmatpush1.msra.mxu0 0.0
    %718 = vmatprep.subr.mxu0 0.0
    %719 = vmatpush1.msra.mxu0 0.0
    %720 = vmatprep.subr.mxu0 0.0
    %721 = vmatpush1.msra.mxu0 0.0
    %722 = vmatprep.subr.mxu0 0.0
    %723 = vmatpush1.msra.mxu0 0.0
    %724 = vmatprep.subr.mxu0 0.0
    %725 = vmatpush1.msra.mxu0 0.0
    %726 = vmatprep.subr.mxu0 0.0
    %727 = vmatpush1.msra.mxu0 0.0
    %728 = vmatprep.subr.mxu0 0.0
    %729 = vmatpush1.msra.mxu0 0.0
    %730 = vmatprep.subr.mxu0 0.0
    %731 = vmatpush1.msra.mxu0 0.0
    %732 = vmatprep.subr.mxu0 0.0
    %733 = vmatpush1.msra.mxu0 0.0
    %734 = vmatprep.subr.mxu0 0.0
    %735 = vmatpush1.msra.mxu0 0.0
    %736 = vmatprep.subr.mxu0 0.0
    %737 = vmatpush1.msra.mxu0 0.0
    %738 = vmatprep.subr.mxu0 0.0
    %739 = vmatpush1.msra.mxu0 0.0
    %740 = vmatprep.subr.mxu0 0.0
    %741 = vmatpush1.msra.mxu0 0.0
    %742 = vmatprep.subr.mxu0 0.0
    %743 = vmatpush1.msra.mxu0 0.0
    %744 = vmatprep.mubr.f32.mxu0 0.0
    %745 = vmatmul.mubr.f32.gmra.mrb[0].mxu0 %v679
    %v746 = vpop.f32.mrb[0].mxu0
    %v747 = vadd.f32 %v237, %v746
    %v748 = vpop.f32.mrb[0].mxu0
    %v749 = vadd.f32 %v241, %v748
    %750 = vdwg.mxu0
    %751 = vmatprep.subr.mxu0 0.0
    %752 = vmatpush1.msra.mxu0 %v186
    %753 = vmatprep.subr.mxu0 0.0
    %754 = vmatpush1.msra.mxu0 %v189
    %755 = vmatprep.subr.mxu0 0.0
    %756 = vmatpush1.msra.mxu0 %v192
    %757 = vmatprep.subr.mxu0 0.0
    %758 = vmatpush1.msra.mxu0 %v195
    %759 = vmatprep.subr.mxu0 0.0
    %760 = vmatpush1.msra.mxu0 %v198
    %761 = vmatprep.subr.mxu0 0.0
    %762 = vmatpush1.msra.mxu0 %v201
    %763 = vmatprep.subr.mxu0 0.0
    %764 = vmatpush1.msra.mxu0 %v204
    %765 = vmatprep.subr.mxu0 0.0
    %766 = vmatpush1.msra.mxu0 %v207
    %767 = vmatprep.subr.mxu0 0.0
    %768 = vmatpush1.msra.mxu0 %v210
    %769 = vmatprep.subr.mxu0 0.0
    %770 = vmatpush1.msra.mxu0 %v213
    %771 = vmatprep.subr.mxu0 0.0
    %772 = vmatpush1.msra.mxu0 %v216
    %773 = vmatprep.subr.mxu0 0.0
    %774 = vmatpush1.msra.mxu0 %v219
    %775 = vmatprep.subr.mxu0 0.0
    %776 = vmatpush1.msra.mxu0 %v222
    %777 = vmatprep.subr.mxu0 0.0
    %778 = vmatpush1.msra.mxu0 %v225
    %779 = vmatprep.subr.mxu0 0.0
    %780 = vmatpush1.msra.mxu0 %v228
    %781 = vmatprep.subr.mxu0 0.0
    %782 = vmatpush1.msra.mxu0 %v231
    %783 = vmatprep.subr.mxu0 0.0
    %784 = vmatpush1.msra.mxu0 0.0
    %785 = vmatprep.subr.mxu0 0.0
    %786 = vmatpush1.msra.mxu0 0.0
    %787 = vmatprep.subr.mxu0 0.0
    %788 = vmatpush1.msra.mxu0 0.0
    %789 = vmatprep.subr.mxu0 0.0
    %790 = vmatpush1.msra.mxu0 0.0
    %791 = vmatprep.subr.mxu0 0.0
    %792 = vmatpush1.msra.mxu0 0.0
    %793 = vmatprep.subr.mxu0 0.0
    %794 = vmatpush1.msra.mxu0 0.0
    %795 = vmatprep.subr.mxu0 0.0
    %796 = vmatpush1.msra.mxu0 0.0
    %797 = vmatprep.subr.mxu0 0.0
    %798 = vmatpush1.msra.mxu0 0.0
    %799 = vmatprep.subr.mxu0 0.0
    %800 = vmatpush1.msra.mxu0 0.0
    %801 = vmatprep.subr.mxu0 0.0
    %802 = vmatpush1.msra.mxu0 0.0
    %803 = vmatprep.subr.mxu0 0.0
    %804 = vmatpush1.msra.mxu0 0.0
    %805 = vmatprep.subr.mxu0 0.0
    %806 = vmatpush1.msra.mxu0 0.0
    %807 = vmatprep.subr.mxu0 0.0
    %808 = vmatpush1.msra.mxu0 0.0
    %809 = vmatprep.subr.mxu0 0.0
    %810 = vmatpush1.msra.mxu0 0.0
    %811 = vmatprep.subr.mxu0 0.0
    %812 = vmatpush1.msra.mxu0 0.0
    %813 = vmatprep.subr.mxu0 0.0
    %814 = vmatpush1.msra.mxu0 0.0
    %815 = vmatprep.mubr.f32.mxu0 0.0
    %816 = vmatmul.mubr.f32.gmra.mrb[0].mxu0 %v679
    %v817 = vpop.f32.mrb[0].mxu0
    %v818 = vadd.f32 %v245, %v817
    %v819 = vpop.f32.mrb[0].mxu0
    %820 = vdwg.mxu0
    %s821 = scalar_lea.vmem [#allocation2], 24
    %v822 = vld [vmem:[%s821] sm:$0xff]
    %v823 = vld [vmem:[%s821 + $0x8] sm:$0xff]
    %v824 = vld [vmem:[%s821 + $0x10] sm:$0xff]
    %v825 = vadd.f32 %v822, %v747
    %v826 = vxor.u32 %v825, 2147483648
    %v827 = vmul.f32 %v826, 1.442695
    %v828 = vpow.pop %v827
    %v829 = vadd.f32 %v828, 1.0
    %v830 = vrcp.pop %v829
    %v831 = vmul.f32 1.0, %v830
    %v832 = vadd.f32 %v823, %v749
    %v833 = vxor.u32 %v832, 2147483648
    %v834 = vmul.f32 %v833, 1.442695
    %v835 = vpow.pop %v834
    %v836 = vadd.f32 %v835, 1.0
    %v837 = vrcp.pop %v836
    %v838 = vmul.f32 1.0, %v837
    %v839 = vmul.f32 %v831, %v818
    %v840 = vadd.f32 %v824, %v839
    %v841 = vtanh.pop %v840
    %v842 = vsub.f32 1.0, %v838
    %v843 = vmul.f32 %v842, %v841
    %v844 = vmul.f32 %v838, %v679
    %v845 = vadd.f32 %v843, %v844
    %846 = vmatprep.subr.mxu0 %v185
    %847 = vmatpush1.msra.mxu0 %v184
    %848 = vmatprep.subr.mxu0 %v188
    %849 = vmatpush1.msra.mxu0 %v187
    %850 = vmatprep.subr.mxu0 %v191
    %851 = vmatpush1.msra.mxu0 %v190
    %852 = vmatprep.subr.mxu0 %v194
    %853 = vmatpush1.msra.mxu0 %v193
    %854 = vmatprep.subr.mxu0 %v197
    %855 = vmatpush1.msra.mxu0 %v196
    %856 = vmatprep.subr.mxu0 %v200
    %857 = vmatpush1.msra.mxu0 %v199
    %858 = vmatprep.subr.mxu0 %v203
    %859 = vmatpush1.msra.mxu0 %v202
    %860 = vmatprep.subr.mxu0 %v206
    %861 = vmatpush1.msra.mxu0 %v205
    %862 = vmatprep.subr.mxu0 %v209
    %863 = vmatpush1.msra.mxu0 %v208
    %864 = vmatprep.subr.mxu0 %v212
    %865 = vmatpush1.msra.mxu0 %v211
    %866 = vmatprep.subr.mxu0 %v215
    %867 = vmatpush1.msra.mxu0 %v214
    %868 = vmatprep.subr.mxu0 %v218
    %869 = vmatpush1.msra.mxu0 %v217
    %870 = vmatprep.subr.mxu0 %v221
    %871 = vmatpush1.msra.mxu0 %v220
    %872 = vmatprep.subr.mxu0 %v224
    %873 = vmatpush1.msra.mxu0 %v223
    %874 = vmatprep.subr.mxu0 %v227
    %875 = vmatpush1.msra.mxu0 %v226
    %876 = vmatprep.subr.mxu0 %v230
    %877 = vmatpush1.msra.mxu0 %v229
    %878 = vmatprep.subr.mxu0 0.0
    %879 = vmatpush1.msra.mxu0 0.0
    %880 = vmatprep.subr.mxu0 0.0
    %881 = vmatpush1.msra.mxu0 0.0
    %882 = vmatprep.subr.mxu0 0.0
    %883 = vmatpush1.msra.mxu0 0.0
    %884 = vmatprep.subr.mxu0 0.0
    %885 = vmatpush1.msra.mxu0 0.0
    %886 = vmatprep.subr.mxu0 0.0
    %887 = vmatpush1.msra.mxu0 0.0
    %888 = vmatprep.subr.mxu0 0.0
    %889 = vmatpush1.msra.mxu0 0.0
    %890 = vmatprep.subr.mxu0 0.0
    %891 = vmatpush1.msra.mxu0 0.0
    %892 = vmatprep.subr.mxu0 0.0
    %893 = vmatpush1.msra.mxu0 0.0
    %894 = vmatprep.subr.mxu0 0.0
    %895 = vmatpush1.msra.mxu0 0.0
    %896 = vmatprep.subr.mxu0 0.0
    %897 = vmatpush1.msra.mxu0 0.0
    %898 = vmatprep.subr.mxu0 0.0
    %899 = vmatpush1.msra.mxu0 0.0
    %900 = vmatprep.subr.mxu0 0.0
    %901 = vmatpush1.msra.mxu0 0.0
    %902 = vmatprep.subr.mxu0 0.0
    %903 = vmatpush1.msra.mxu0 0.0
    %904 = vmatprep.subr.mxu0 0.0
    %905 = vmatpush1.msra.mxu0 0.0
    %906 = vmatprep.subr.mxu0 0.0
    %907 = vmatpush1.msra.mxu0 0.0
    %908 = vmatprep.subr.mxu0 0.0
    %909 = vmatpush1.msra.mxu0 0.0
    %910 = vmatprep.mubr.f32.mxu0 0.0
    %911 = vmatmul.mubr.f32.gmra.mrb[0].mxu0 %v845
    %v912 = vpop.f32.mrb[0].mxu0
    %v913 = vadd.f32 %v237, %v912
    %v914 = vpop.f32.mrb[0].mxu0
    %v915 = vadd.f32 %v241, %v914
    %916 = vdwg.mxu0
    %917 = vmatprep.subr.mxu0 0.0
    %918 = vmatpush1.msra.mxu0 %v186
    %919 = vmatprep.subr.mxu0 0.0
    %920 = vmatpush1.msra.mxu0 %v189
    %921 = vmatprep.subr.mxu0 0.0
    %922 = vmatpush1.msra.mxu0 %v192
    %923 = vmatprep.subr.mxu0 0.0
    %924 = vmatpush1.msra.mxu0 %v195
    %925 = vmatprep.subr.mxu0 0.0
    %926 = vmatpush1.msra.mxu0 %v198
    %927 = vmatprep.subr.mxu0 0.0
    %928 = vmatpush1.msra.mxu0 %v201
    %929 = vmatprep.subr.mxu0 0.0
    %930 = vmatpush1.msra.mxu0 %v204
    %931 = vmatprep.subr.mxu0 0.0
    %932 = vmatpush1.msra.mxu0 %v207
    %933 = vmatprep.subr.mxu0 0.0
    %934 = vmatpush1.msra.mxu0 %v210
    %935 = vmatprep.subr.mxu0 0.0
    %936 = vmatpush1.msra.mxu0 %v213
    %937 = vmatprep.subr.mxu0 0.0
    %938 = vmatpush1.msra.mxu0 %v216
    %939 = vmatprep.subr.mxu0 0.0
    %940 = vmatpush1.msra.mxu0 %v219
    %941 = vmatprep.subr.mxu0 0.0
    %942 = vmatpush1.msra.mxu0 %v222
    %943 = vmatprep.subr.mxu0 0.0
    %944 = vmatpush1.msra.mxu0 %v225
    %945 = vmatprep.subr.mxu0 0.0
    %946 = vmatpush1.msra.mxu0 %v228
    %947 = vmatprep.subr.mxu0 0.0
    %948 = vmatpush1.msra.mxu0 %v231
    %949 = vmatprep.subr.mxu0 0.0
    %950 = vmatpush1.msra.mxu0 0.0
    %951 = vmatprep.subr.mxu0 0.0
    %952 = vmatpush1.msra.mxu0 0.0
    %953 = vmatprep.subr.mxu0 0.0
    %954 = vmatpush1.msra.mxu0 0.0
    %955 = vmatprep.subr.mxu0 0.0
    %956 = vmatpush1.msra.mxu0 0.0
    %957 = vmatprep.subr.mxu0 0.0
    %958 = vmatpush1.msra.mxu0 0.0
    %959 = vmatprep.subr.mxu0 0.0
    %960 = vmatpush1.msra.mxu0 0.0
    %961 = vmatprep.subr.mxu0 0.0
    %962 = vmatpush1.msra.mxu0 0.0
    %963 = vmatprep.subr.mxu0 0.0
    %964 = vmatpush1.msra.mxu0 0.0
    %965 = vmatprep.subr.mxu0 0.0
    %966 = vmatpush1.msra.mxu0 0.0
    %967 = vmatprep.subr.mxu0 0.0
    %968 = vmatpush1.msra.mxu0 0.0
    %969 = vmatprep.subr.mxu0 0.0
    %970 = vmatpush1.msra.mxu0 0.0
    %971 = vmatprep.subr.mxu0 0.0
    %972 = vmatpush1.msra.mxu0 0.0
    %973 = vmatprep.subr.mxu0 0.0
    %974 = vmatpush1.msra.mxu0 0.0
    %975 = vmatprep.subr.mxu0 0.0
    %976 = vmatpush1.msra.mxu0 0.0
    %977 = vmatprep.subr.mxu0 0.0
    %978 = vmatpush1.msra.mxu0 0.0
    %979 = vmatprep.subr.mxu0 0.0
    %980 = vmatpush1.msra.mxu0 0.0
    %981 = vmatprep.mubr.f32.mxu0 0.0
    %982 = vmatmul.mubr.f32.gmra.mrb[0].mxu0 %v845
    %v983 = vpop.f32.mrb[0].mxu0
    %v984 = vadd.f32 %v245, %v983
    %v985 = vpop.f32.mrb[0].mxu0
    %986 = vdwg.mxu0
    %s987 = scalar_lea.vmem [#allocation2], 48
    %v988 = vld [vmem:[%s987] sm:$0xff]
    %v989 = vld [vmem:[%s987 + $0x8] sm:$0xff]
    %v990 = vld [vmem:[%s987 + $0x10] sm:$0xff]
    %v991 = vadd.f32 %v988, %v913
    %v992 = vxor.u32 %v991, 2147483648
    %v993 = vmul.f32 %v992, 1.442695
    %v994 = vpow.pop %v993
    %v995 = vadd.f32 %v994, 1.0
    %v996 = vrcp.pop %v995
    %v997 = vmul.f32 1.0, %v996
    %v998 = vadd.f32 %v989, %v915
    %v999 = vxor.u32 %v998, 2147483648
    %v1000 = vmul.f32 %v999, 1.442695
    %v1001 = vpow.pop %v1000
    %v1002 = vadd.f32 %v1001, 1.0
    %v1003 = vrcp.pop %v1002
    %v1004 = vmul.f32 1.0, %v1003
    %v1005 = vmul.f32 %v997, %v984
    %v1006 = vadd.f32 %v990, %v1005
    %v1007 = vtanh.pop %v1006
    %v1008 = vsub.f32 1.0, %v1004
    %v1009 = vmul.f32 %v1008, %v1007
    %v1010 = vmul.f32 %v1004, %v845
    %v1011 = vadd.f32 %v1009, %v1010
    %1012 = vmatprep.subr.mxu0 %v185
    %1013 = vmatpush1.msra.mxu0 %v184
    %1014 = vmatprep.subr.mxu0 %v188
    %1015 = vmatpush1.msra.mxu0 %v187
    %1016 = vmatprep.subr.mxu0 %v191
    %1017 = vmatpush1.msra.mxu0 %v190
    %1018 = vmatprep.subr.mxu0 %v194
    %1019 = vmatpush1.msra.mxu0 %v193
    %1020 = vmatprep.subr.mxu0 %v197
    %1021 = vmatpush1.msra.mxu0 %v196
    %1022 = vmatprep.subr.mxu0 %v200
    %1023 = vmatpush1.msra.mxu0 %v199
    %1024 = vmatprep.subr.mxu0 %v203
    %1025 = vmatpush1.msra.mxu0 %v202
    %1026 = vmatprep.subr.mxu0 %v206
    %1027 = vmatpush1.msra.mxu0 %v205
    %1028 = vmatprep.subr.mxu0 %v209
    %1029 = vmatpush1.msra.mxu0 %v208
    %1030 = vmatprep.subr.mxu0 %v212
    %1031 = vmatpush1.msra.mxu0 %v211
    %1032 = vmatprep.subr.mxu0 %v215
    %1033 = vmatpush1.msra.mxu0 %v214
    %1034 = vmatprep.subr.mxu0 %v218
    %1035 = vmatpush1.msra.mxu0 %v217
    %1036 = vmatprep.subr.mxu0 %v221
    %1037 = vmatpush1.msra.mxu0 %v220
    %1038 = vmatprep.subr.mxu0 %v224
    %1039 = vmatpush1.msra.mxu0 %v223
    %1040 = vmatprep.subr.mxu0 %v227
    %1041 = vmatpush1.msra.mxu0 %v226
    %1042 = vmatprep.subr.mxu0 %v230
    %1043 = vmatpush1.msra.mxu0 %v229
    %1044 = vmatprep.subr.mxu0 0.0
    %1045 = vmatpush1.msra.mxu0 0.0
    %1046 = vmatprep.subr.mxu0 0.0
    %1047 = vmatpush1.msra.mxu0 0.0
    %1048 = vmatprep.subr.mxu0 0.0
    %1049 = vmatpush1.msra.mxu0 0.0
    %1050 = vmatprep.subr.mxu0 0.0
    %1051 = vmatpush1.msra.mxu0 0.0
    %1052 = vmatprep.subr.mxu0 0.0
    %1053 = vmatpush1.msra.mxu0 0.0
    %1054 = vmatprep.subr.mxu0 0.0
    %1055 = vmatpush1.msra.mxu0 0.0
    %1056 = vmatprep.subr.mxu0 0.0
    %1057 = vmatpush1.msra.mxu0 0.0
    %1058 = vmatprep.subr.mxu0 0.0
    %1059 = vmatpush1.msra.mxu0 0.0
    %1060 = vmatprep.subr.mxu0 0.0
    %1061 = vmatpush1.msra.mxu0 0.0
    %1062 = vmatprep.subr.mxu0 0.0
    %1063 = vmatpush1.msra.mxu0 0.0
    %1064 = vmatprep.subr.mxu0 0.0
    %1065 = vmatpush1.msra.mxu0 0.0
    %1066 = vmatprep.subr.mxu0 0.0
    %1067 = vmatpush1.msra.mxu0 0.0
    %1068 = vmatprep.subr.mxu0 0.0
    %1069 = vmatpush1.msra.mxu0 0.0
    %1070 = vmatprep.subr.mxu0 0.0
    %1071 = vmatpush1.msra.mxu0 0.0
    %1072 = vmatprep.subr.mxu0 0.0
    %1073 = vmatpush1.msra.mxu0 0.0
    %1074 = vmatprep.subr.mxu0 0.0
    %1075 = vmatpush1.msra.mxu0 0.0
    %1076 = vmatprep.mubr.f32.mxu0 0.0
    %1077 = vmatmul.mubr.f32.gmra.mrb[0].mxu0 %v1011
    %v1078 = vpop.f32.mrb[0].mxu0
    %v1079 = vadd.f32 %v237, %v1078
    %v1080 = vpop.f32.mrb[0].mxu0
    %v1081 = vadd.f32 %v241, %v1080
    %1082 = vdwg.mxu0
    %1083 = vmatprep.subr.mxu0 0.0
    %1084 = vmatpush1.msra.mxu0 %v186
    %1085 = vmatprep.subr.mxu0 0.0
    %1086 = vmatpush1.msra.mxu0 %v189
    %1087 = vmatprep.subr.mxu0 0.0
    %1088 = vmatpush1.msra.mxu0 %v192
    %1089 = vmatprep.subr.mxu0 0.0
    %1090 = vmatpush1.msra.mxu0 %v195
    %1091 = vmatprep.subr.mxu0 0.0
    %1092 = vmatpush1.msra.mxu0 %v198
    %1093 = vmatprep.subr.mxu0 0.0
    %1094 = vmatpush1.msra.mxu0 %v201
    %1095 = vmatprep.subr.mxu0 0.0
    %1096 = vmatpush1.msra.mxu0 %v204
    %1097 = vmatprep.subr.mxu0 0.0
    %1098 = vmatpush1.msra.mxu0 %v207
    %1099 = vmatprep.subr.mxu0 0.0
    %1100 = vmatpush1.msra.mxu0 %v210
    %1101 = vmatprep.subr.mxu0 0.0
    %1102 = vmatpush1.msra.mxu0 %v213
    %1103 = vmatprep.subr.mxu0 0.0
    %1104 = vmatpush1.msra.mxu0 %v216
    %1105 = vmatprep.subr.mxu0 0.0
    %1106 = vmatpush1.msra.mxu0 %v219
    %1107 = vmatprep.subr.mxu0 0.0
    %1108 = vmatpush1.msra.mxu0 %v222
    %1109 = vmatprep.subr.mxu0 0.0
    %1110 = vmatpush1.msra.mxu0 %v225
    %1111 = vmatprep.subr.mxu0 0.0
    %1112 = vmatpush1.msra.mxu0 %v228
    %1113 = vmatprep.subr.mxu0 0.0
    %1114 = vmatpush1.msra.mxu0 %v231
    %1115 = vmatprep.subr.mxu0 0.0
    %1116 = vmatpush1.msra.mxu0 0.0
    %1117 = vmatprep.subr.mxu0 0.0
    %1118 = vmatpush1.msra.mxu0 0.0
    %1119 = vmatprep.subr.mxu0 0.0
    %1120 = vmatpush1.msra.mxu0 0.0
    %1121 = vmatprep.subr.mxu0 0.0
    %1122 = vmatpush1.msra.mxu0 0.0
    %1123 = vmatprep.subr.mxu0 0.0
    %1124 = vmatpush1.msra.mxu0 0.0
    %1125 = vmatprep.subr.mxu0 0.0
    %1126 = vmatpush1.msra.mxu0 0.0
    %1127 = vmatprep.subr.mxu0 0.0
    %1128 = vmatpush1.msra.mxu0 0.0
    %1129 = vmatprep.subr.mxu0 0.0
    %1130 = vmatpush1.msra.mxu0 0.0
    %1131 = vmatprep.subr.mxu0 0.0
    %1132 = vmatpush1.msra.mxu0 0.0
    %1133 = vmatprep.subr.mxu0 0.0
    %1134 = vmatpush1.msra.mxu0 0.0
    %1135 = vmatprep.subr.mxu0 0.0
    %1136 = vmatpush1.msra.mxu0 0.0
    %1137 = vmatprep.subr.mxu0 0.0
    %1138 = vmatpush1.msra.mxu0 0.0
    %1139 = vmatprep.subr.mxu0 0.0
    %1140 = vmatpush1.msra.mxu0 0.0
    %1141 = vmatprep.subr.mxu0 0.0
    %1142 = vmatpush1.msra.mxu0 0.0
    %1143 = vmatprep.subr.mxu0 0.0
    %1144 = vmatpush1.msra.mxu0 0.0
    %1145 = vmatprep.subr.mxu0 0.0
    %1146 = vmatpush1.msra.mxu0 0.0
    %1147 = vmatprep.mubr.f32.mxu0 0.0
    %1148 = vmatmul.mubr.f32.gmra.mrb[0].mxu0 %v1011
    %v1149 = vpop.f32.mrb[0].mxu0
    %v1150 = vadd.f32 %v245, %v1149
    %v1151 = vpop.f32.mrb[0].mxu0
    %1152 = vdwg.mxu0
    %s1153 = scalar_lea.vmem [#allocation2], 72
    %v1154 = vld [vmem:[%s1153] sm:$0xff]
    %v1155 = vld [vmem:[%s1153 + $0x8] sm:$0xff]
    %v1156 = vld [vmem:[%s1153 + $0x10] sm:$0xff]
    %v1157 = vadd.f32 %v1154, %v1079
    %v1158 = vxor.u32 %v1157, 2147483648
    %v1159 = vmul.f32 %v1158, 1.442695
    %v1160 = vpow.pop %v1159
    %v1161 = vadd.f32 %v1160, 1.0
    %v1162 = vrcp.pop %v1161
    %v1163 = vmul.f32 1.0, %v1162
    %v1164 = vadd.f32 %v1155, %v1081
    %v1165 = vxor.u32 %v1164, 2147483648
    %v1166 = vmul.f32 %v1165, 1.442695
    %v1167 = vpow.pop %v1166
    %v1168 = vadd.f32 %v1167, 1.0
    %v1169 = vrcp.pop %v1168
    %v1170 = vmul.f32 1.0, %v1169
    %v1171 = vmul.f32 %v1163, %v1150
    %v1172 = vadd.f32 %v1156, %v1171
    %v1173 = vtanh.pop %v1172
    %v1174 = vsub.f32 1.0, %v1170
    %v1175 = vmul.f32 %v1174, %v1173
    %v1176 = vmul.f32 %v1170, %v1011
    %v1177 = vadd.f32 %v1175, %v1176
    %1178 = vmatprep.subr.mxu0 %v185
    %1179 = vmatpush1.msra.mxu0 %v184
    %1180 = vmatprep.subr.mxu0 %v188
    %1181 = vmatpush1.msra.mxu0 %v187
    %1182 = vmatprep.subr.mxu0 %v191
    %1183 = vmatpush1.msra.mxu0 %v190
    %1184 = vmatprep.subr.mxu0 %v194
    %1185 = vmatpush1.msra.mxu0 %v193
    %1186 = vmatprep.subr.mxu0 %v197
    %1187 = vmatpush1.msra.mxu0 %v196
    %1188 = vmatprep.subr.mxu0 %v200
    %1189 = vmatpush1.msra.mxu0 %v199
    %1190 = vmatprep.subr.mxu0 %v203
    %1191 = vmatpush1.msra.mxu0 %v202
    %1192 = vmatprep.subr.mxu0 %v206
    %1193 = vmatpush1.msra.mxu0 %v205
    %1194 = vmatprep.subr.mxu0 %v209
    %1195 = vmatpush1.msra.mxu0 %v208
    %1196 = vmatprep.subr.mxu0 %v212
    %1197 = vmatpush1.msra.mxu0 %v211
    %1198 = vmatprep.subr.mxu0 %v215
    %1199 = vmatpush1.msra.mxu0 %v214
    %1200 = vmatprep.subr.mxu0 %v218
    %1201 = vmatpush1.msra.mxu0 %v217
    %1202 = vmatprep.subr.mxu0 %v221
    %1203 = vmatpush1.msra.mxu0 %v220
    %1204 = vmatprep.subr.mxu0 %v224
    %1205 = vmatpush1.msra.mxu0 %v223
    %1206 = vmatprep.subr.mxu0 %v227
    %1207 = vmatpush1.msra.mxu0 %v226
    %1208 = vmatprep.subr.mxu0 %v230
    %1209 = vmatpush1.msra.mxu0 %v229
    %1210 = vmatprep.subr.mxu0 0.0
    %1211 = vmatpush1.msra.mxu0 0.0
    %1212 = vmatprep.subr.mxu0 0.0
    %1213 = vmatpush1.msra.mxu0 0.0
    %1214 = vmatprep.subr.mxu0 0.0
    %1215 = vmatpush1.msra.mxu0 0.0
    %1216 = vmatprep.subr.mxu0 0.0
    %1217 = vmatpush1.msra.mxu0 0.0
    %1218 = vmatprep.subr.mxu0 0.0
    %1219 = vmatpush1.msra.mxu0 0.0
    %1220 = vmatprep.subr.mxu0 0.0
    %1221 = vmatpush1.msra.mxu0 0.0
    %1222 = vmatprep.subr.mxu0 0.0
    %1223 = vmatpush1.msra.mxu0 0.0
    %1224 = vmatprep.subr.mxu0 0.0
    %1225 = vmatpush1.msra.mxu0 0.0
    %1226 = vmatprep.subr.mxu0 0.0
    %1227 = vmatpush1.msra.mxu0 0.0
    %1228 = vmatprep.subr.mxu0 0.0
    %1229 = vmatpush1.msra.mxu0 0.0
    %1230 = vmatprep.subr.mxu0 0.0
    %1231 = vmatpush1.msra.mxu0 0.0
    %1232 = vmatprep.subr.mxu0 0.0
    %1233 = vmatpush1.msra.mxu0 0.0
    %1234 = vmatprep.subr.mxu0 0.0
    %1235 = vmatpush1.msra.mxu0 0.0
    %1236 = vmatprep.subr.mxu0 0.0
    %1237 = vmatpush1.msra.mxu0 0.0
    %1238 = vmatprep.subr.mxu0 0.0
    %1239 = vmatpush1.msra.mxu0 0.0
    %1240 = vmatprep.subr.mxu0 0.0
    %1241 = vmatpush1.msra.mxu0 0.0
    %1242 = vmatprep.mubr.f32.mxu0 0.0
    %1243 = vmatmul.mubr.f32.gmra.mrb[0].mxu0 %v1177
    %v1244 = vpop.f32.mrb[0].mxu0
    %v1245 = vadd.f32 %v237, %v1244
    %v1246 = vpop.f32.mrb[0].mxu0
    %v1247 = vadd.f32 %v241, %v1246
    %1248 = vdwg.mxu0
    %1249 = vmatprep.subr.mxu0 0.0
    %1250 = vmatpush1.msra.mxu0 %v186
    %1251 = vmatprep.subr.mxu0 0.0
    %1252 = vmatpush1.msra.mxu0 %v189
    %1253 = vmatprep.subr.mxu0 0.0
    %1254 = vmatpush1.msra.mxu0 %v192
    %1255 = vmatprep.subr.mxu0 0.0
    %1256 = vmatpush1.msra.mxu0 %v195
    %1257 = vmatprep.subr.mxu0 0.0
    %1258 = vmatpush1.msra.mxu0 %v198
    %1259 = vmatprep.subr.mxu0 0.0
    %1260 = vmatpush1.msra.mxu0 %v201
    %1261 = vmatprep.subr.mxu0 0.0
    %1262 = vmatpush1.msra.mxu0 %v204
    %1263 = vmatprep.subr.mxu0 0.0
    %1264 = vmatpush1.msra.mxu0 %v207
    %1265 = vmatprep.subr.mxu0 0.0
    %1266 = vmatpush1.msra.mxu0 %v210
    %1267 = vmatprep.subr.mxu0 0.0
    %1268 = vmatpush1.msra.mxu0 %v213
    %1269 = vmatprep.subr.mxu0 0.0
    %1270 = vmatpush1.msra.mxu0 %v216
    %1271 = vmatprep.subr.mxu0 0.0
    %1272 = vmatpush1.msra.mxu0 %v219
    %1273 = vmatprep.subr.mxu0 0.0
    %1274 = vmatpush1.msra.mxu0 %v222
    %1275 = vmatprep.subr.mxu0 0.0
    %1276 = vmatpush1.msra.mxu0 %v225
    %1277 = vmatprep.subr.mxu0 0.0
    %1278 = vmatpush1.msra.mxu0 %v228
    %1279 = vmatprep.subr.mxu0 0.0
    %1280 = vmatpush1.msra.mxu0 %v231
    %1281 = vmatprep.subr.mxu0 0.0
    %1282 = vmatpush1.msra.mxu0 0.0
    %1283 = vmatprep.subr.mxu0 0.0
    %1284 = vmatpush1.msra.mxu0 0.0
    %1285 = vmatprep.subr.mxu0 0.0
    %1286 = vmatpush1.msra.mxu0 0.0
    %1287 = vmatprep.subr.mxu0 0.0
    %1288 = vmatpush1.msra.mxu0 0.0
    %1289 = vmatprep.subr.mxu0 0.0
    %1290 = vmatpush1.msra.mxu0 0.0
    %1291 = vmatprep.subr.mxu0 0.0
    %1292 = vmatpush1.msra.mxu0 0.0
    %1293 = vmatprep.subr.mxu0 0.0
    %1294 = vmatpush1.msra.mxu0 0.0
    %1295 = vmatprep.subr.mxu0 0.0
    %1296 = vmatpush1.msra.mxu0 0.0
    %1297 = vmatprep.subr.mxu0 0.0
    %1298 = vmatpush1.msra.mxu0 0.0
    %1299 = vmatprep.subr.mxu0 0.0
    %1300 = vmatpush1.msra.mxu0 0.0
    %1301 = vmatprep.subr.mxu0 0.0
    %1302 = vmatpush1.msra.mxu0 0.0
    %1303 = vmatprep.subr.mxu0 0.0
    %1304 = vmatpush1.msra.mxu0 0.0
    %1305 = vmatprep.subr.mxu0 0.0
    %1306 = vmatpush1.msra.mxu0 0.0
    %1307 = vmatprep.subr.mxu0 0.0
    %1308 = vmatpush1.msra.mxu0 0.0
    %1309 = vmatprep.subr.mxu0 0.0
    %1310 = vmatpush1.msra.mxu0 0.0
    %1311 = vmatprep.subr.mxu0 0.0
    %1312 = vmatpush1.msra.mxu0 0.0
    %1313 = vmatprep.mubr.f32.mxu0 0.0
    %1314 = vmatmul.mubr.f32.gmra.mrb[0].mxu0 %v1177
    %v1315 = vpop.f32.mrb[0].mxu0
    %v1316 = vadd.f32 %v245, %v1315
    %v1317 = vpop.f32.mrb[0].mxu0
    %1318 = vdwg.mxu0
    %s1319 = scalar_lea.vmem [#allocation2], 96
    %v1320 = vld [vmem:[%s1319] sm:$0xff]
    %v1321 = vld [vmem:[%s1319 + $0x8] sm:$0xff]
    %v1322 = vld [vmem:[%s1319 + $0x10] sm:$0xff]
    %v1323 = vadd.f32 %v1320, %v1245
    %v1324 = vxor.u32 %v1323, 2147483648
    %v1325 = vmul.f32 %v1324, 1.442695
    %v1326 = vpow.pop %v1325
    %v1327 = vadd.f32 %v1326, 1.0
    %v1328 = vrcp.pop %v1327
    %v1329 = vmul.f32 1.0, %v1328
    %v1330 = vadd.f32 %v1321, %v1247
    %v1331 = vxor.u32 %v1330, 2147483648
    %v1332 = vmul.f32 %v1331, 1.442695
    %v1333 = vpow.pop %v1332
    %v1334 = vadd.f32 %v1333, 1.0
    %v1335 = vrcp.pop %v1334
    %v1336 = vmul.f32 1.0, %v1335
    %v1337 = vmul.f32 %v1329, %v1316
    %v1338 = vadd.f32 %v1322, %v1337
    %v1339 = vtanh.pop %v1338
    %v1340 = vsub.f32 1.0, %v1336
    %v1341 = vmul.f32 %v1340, %v1339
    %v1342 = vmul.f32 %v1336, %v1177
    %v1343 = vadd.f32 %v1341, %v1342
    %1344 = vmatprep.subr.mxu0 %v185
    %1345 = vmatpush1.msra.mxu0 %v184
    %1346 = vmatprep.subr.mxu0 %v188
    %1347 = vmatpush1.msra.mxu0 %v187
    %1348 = vmatprep.subr.mxu0 %v191
    %1349 = vmatpush1.msra.mxu0 %v190
    %1350 = vmatprep.subr.mxu0 %v194
    %1351 = vmatpush1.msra.mxu0 %v193
    %1352 = vmatprep.subr.mxu0 %v197
    %1353 = vmatpush1.msra.mxu0 %v196
    %1354 = vmatprep.subr.mxu0 %v200
    %1355 = vmatpush1.msra.mxu0 %v199
    %1356 = vmatprep.subr.mxu0 %v203
    %1357 = vmatpush1.msra.mxu0 %v202
    %1358 = vmatprep.subr.mxu0 %v206
    %1359 = vmatpush1.msra.mxu0 %v205
    %1360 = vmatprep.subr.mxu0 %v209
    %1361 = vmatpush1.msra.mxu0 %v208
    %1362 = vmatprep.subr.mxu0 %v212
    %1363 = vmatpush1.msra.mxu0 %v211
    %1364 = vmatprep.subr.mxu0 %v215
    %1365 = vmatpush1.msra.mxu0 %v214
    %1366 = vmatprep.subr.mxu0 %v218
    %1367 = vmatpush1.msra.mxu0 %v217
    %1368 = vmatprep.subr.mxu0 %v221
    %1369 = vmatpush1.msra.mxu0 %v220
    %1370 = vmatprep.subr.mxu0 %v224
    %1371 = vmatpush1.msra.mxu0 %v223
    %1372 = vmatprep.subr.mxu0 %v227
    %1373 = vmatpush1.msra.mxu0 %v226
    %1374 = vmatprep.subr.mxu0 %v230
    %1375 = vmatpush1.msra.mxu0 %v229
    %1376 = vmatprep.subr.mxu0 0.0
    %1377 = vmatpush1.msra.mxu0 0.0
    %1378 = vmatprep.subr.mxu0 0.0
    %1379 = vmatpush1.msra.mxu0 0.0
    %1380 = vmatprep.subr.mxu0 0.0
    %1381 = vmatpush1.msra.mxu0 0.0
    %1382 = vmatprep.subr.mxu0 0.0
    %1383 = vmatpush1.msra.mxu0 0.0
    %1384 = vmatprep.subr.mxu0 0.0
    %1385 = vmatpush1.msra.mxu0 0.0
    %1386 = vmatprep.subr.mxu0 0.0
    %1387 = vmatpush1.msra.mxu0 0.0
    %1388 = vmatprep.subr.mxu0 0.0
    %1389 = vmatpush1.msra.mxu0 0.0
    %1390 = vmatprep.subr.mxu0 0.0
    %1391 = vmatpush1.msra.mxu0 0.0
    %1392 = vmatprep.subr.mxu0 0.0
    %1393 = vmatpush1.msra.mxu0 0.0
    %1394 = vmatprep.subr.mxu0 0.0
    %1395 = vmatpush1.msra.mxu0 0.0
    %1396 = vmatprep.subr.mxu0 0.0
    %1397 = vmatpush1.msra.mxu0 0.0
    %1398 = vmatprep.subr.mxu0 0.0
    %1399 = vmatpush1.msra.mxu0 0.0
    %1400 = vmatprep.subr.mxu0 0.0
    %1401 = vmatpush1.msra.mxu0 0.0
    %1402 = vmatprep.subr.mxu0 0.0
    %1403 = vmatpush1.msra.mxu0 0.0
    %1404 = vmatprep.subr.mxu0 0.0
    %1405 = vmatpush1.msra.mxu0 0.0
    %1406 = vmatprep.subr.mxu0 0.0
    %1407 = vmatpush1.msra.mxu0 0.0
    %1408 = vmatprep.mubr.f32.mxu0 0.0
    %1409 = vmatmul.mubr.f32.gmra.mrb[0].mxu0 %v1343
    %v1410 = vpop.f32.mrb[0].mxu0
    %v1411 = vadd.f32 %v237, %v1410
    %v1412 = vpop.f32.mrb[0].mxu0
    %v1413 = vadd.f32 %v241, %v1412
    %1414 = vdwg.mxu0
    %1415 = vmatprep.subr.mxu0 0.0
    %1416 = vmatpush1.msra.mxu0 %v186
    %1417 = vmatprep.subr.mxu0 0.0
    %1418 = vmatpush1.msra.mxu0 %v189
    %1419 = vmatprep.subr.mxu0 0.0
    %1420 = vmatpush1.msra.mxu0 %v192
    %1421 = vmatprep.subr.mxu0 0.0
    %1422 = vmatpush1.msra.mxu0 %v195
    %1423 = vmatprep.subr.mxu0 0.0
    %1424 = vmatpush1.msra.mxu0 %v198
    %1425 = vmatprep.subr.mxu0 0.0
    %1426 = vmatpush1.msra.mxu0 %v201
    %1427 = vmatprep.subr.mxu0 0.0
    %1428 = vmatpush1.msra.mxu0 %v204
    %1429 = vmatprep.subr.mxu0 0.0
    %1430 = vmatpush1.msra.mxu0 %v207
    %1431 = vmatprep.subr.mxu0 0.0
    %1432 = vmatpush1.msra.mxu0 %v210
    %1433 = vmatprep.subr.mxu0 0.0
    %1434 = vmatpush1.msra.mxu0 %v213
    %1435 = vmatprep.subr.mxu0 0.0
    %1436 = vmatpush1.msra.mxu0 %v216
    %1437 = vmatprep.subr.mxu0 0.0
    %1438 = vmatpush1.msra.mxu0 %v219
    %1439 = vmatprep.subr.mxu0 0.0
    %1440 = vmatpush1.msra.mxu0 %v222
    %1441 = vmatprep.subr.mxu0 0.0
    %1442 = vmatpush1.msra.mxu0 %v225
    %1443 = vmatprep.subr.mxu0 0.0
    %1444 = vmatpush1.msra.mxu0 %v228
    %1445 = vmatprep.subr.mxu0 0.0
    %1446 = vmatpush1.msra.mxu0 %v231
    %1447 = vmatprep.subr.mxu0 0.0
    %1448 = vmatpush1.msra.mxu0 0.0
    %1449 = vmatprep.subr.mxu0 0.0
    %1450 = vmatpush1.msra.mxu0 0.0
    %1451 = vmatprep.subr.mxu0 0.0
    %1452 = vmatpush1.msra.mxu0 0.0
    %1453 = vmatprep.subr.mxu0 0.0
    %1454 = vmatpush1.msra.mxu0 0.0
    %1455 = vmatprep.subr.mxu0 0.0
    %1456 = vmatpush1.msra.mxu0 0.0
    %1457 = vmatprep.subr.mxu0 0.0
    %1458 = vmatpush1.msra.mxu0 0.0
    %1459 = vmatprep.subr.mxu0 0.0
    %1460 = vmatpush1.msra.mxu0 0.0
    %1461 = vmatprep.subr.mxu0 0.0
    %1462 = vmatpush1.msra.mxu0 0.0
    %1463 = vmatprep.subr.mxu0 0.0
    %1464 = vmatpush1.msra.mxu0 0.0
    %1465 = vmatprep.subr.mxu0 0.0
    %1466 = vmatpush1.msra.mxu0 0.0
    %1467 = vmatprep.subr.mxu0 0.0
    %1468 = vmatpush1.msra.mxu0 0.0
    %1469 = vmatprep.subr.mxu0 0.0
    %1470 = vmatpush1.msra.mxu0 0.0
    %1471 = vmatprep.subr.mxu0 0.0
    %1472 = vmatpush1.msra.mxu0 0.0
    %1473 = vmatprep.subr.mxu0 0.0
    %1474 = vmatpush1.msra.mxu0 0.0
    %1475 = vmatprep.subr.mxu0 0.0
    %1476 = vmatpush1.msra.mxu0 0.0
    %1477 = vmatprep.subr.mxu0 0.0
    %1478 = vmatpush1.msra.mxu0 0.0
    %1479 = vmatprep.mubr.f32.mxu0 0.0
    %1480 = vmatmul.mubr.f32.gmra.mrb[0].mxu0 %v1343
    %v1481 = vpop.f32.mrb[0].mxu0
    %v1482 = vadd.f32 %v245, %v1481
    %v1483 = vpop.f32.mrb[0].mxu0
    %1484 = vdwg.mxu0
    %s1485 = scalar_lea.vmem [#allocation2], 120
    %v1486 = vld [vmem:[%s1485] sm:$0xff]
    %v1487 = vld [vmem:[%s1485 + $0x8] sm:$0xff]
    %v1488 = vld [vmem:[%s1485 + $0x10] sm:$0xff]
    %v1489 = vadd.f32 %v1486, %v1411
    %v1490 = vxor.u32 %v1489, 2147483648
    %v1491 = vmul.f32 %v1490, 1.442695
    %v1492 = vpow.pop %v1491
    %v1493 = vadd.f32 %v1492, 1.0
    %v1494 = vrcp.pop %v1493
    %v1495 = vmul.f32 1.0, %v1494
    %v1496 = vadd.f32 %v1487, %v1413
    %v1497 = vxor.u32 %v1496, 2147483648
    %v1498 = vmul.f32 %v1497, 1.442695
    %v1499 = vpow.pop %v1498
    %v1500 = vadd.f32 %v1499, 1.0
    %v1501 = vrcp.pop %v1500
    %v1502 = vmul.f32 1.0, %v1501
    %v1503 = vmul.f32 %v1495, %v1482
    %v1504 = vadd.f32 %v1488, %v1503
    %v1505 = vtanh.pop %v1504
    %v1506 = vsub.f32 1.0, %v1502
    %v1507 = vmul.f32 %v1506, %v1505
    %v1508 = vmul.f32 %v1502, %v1343
    %v1509 = vadd.f32 %v1507, %v1508
    %1510 = vmatprep.subr.mxu0 %v185
    %1511 = vmatpush1.msra.mxu0 %v184
    %1512 = vmatprep.subr.mxu0 %v188
    %1513 = vmatpush1.msra.mxu0 %v187
    %1514 = vmatprep.subr.mxu0 %v191
    %1515 = vmatpush1.msra.mxu0 %v190
    %1516 = vmatprep.subr.mxu0 %v194
    %1517 = vmatpush1.msra.mxu0 %v193
    %1518 = vmatprep.subr.mxu0 %v197
    %1519 = vmatpush1.msra.mxu0 %v196
    %1520 = vmatprep.subr.mxu0 %v200
    %1521 = vmatpush1.msra.mxu0 %v199
    %1522 = vmatprep.subr.mxu0 %v203
    %1523 = vmatpush1.msra.mxu0 %v202
    %1524 = vmatprep.subr.mxu0 %v206
    %1525 = vmatpush1.msra.mxu0 %v205
    %1526 = vmatprep.subr.mxu0 %v209
    %1527 = vmatpush1.msra.mxu0 %v208
    %1528 = vmatprep.subr.mxu0 %v212
    %1529 = vmatpush1.msra.mxu0 %v211
    %1530 = vmatprep.subr.mxu0 %v215
    %1531 = vmatpush1.msra.mxu0 %v214
    %1532 = vmatprep.subr.mxu0 %v218
    %1533 = vmatpush1.msra.mxu0 %v217
    %1534 = vmatprep.subr.mxu0 %v221
    %1535 = vmatpush1.msra.mxu0 %v220
    %1536 = vmatprep.subr.mxu0 %v224
    %1537 = vmatpush1.msra.mxu0 %v223
    %1538 = vmatprep.subr.mxu0 %v227
    %1539 = vmatpush1.msra.mxu0 %v226
    %1540 = vmatprep.subr.mxu0 %v230
    %1541 = vmatpush1.msra.mxu0 %v229
    %1542 = vmatprep.subr.mxu0 0.0
    %1543 = vmatpush1.msra.mxu0 0.0
    %1544 = vmatprep.subr.mxu0 0.0
    %1545 = vmatpush1.msra.mxu0 0.0
    %1546 = vmatprep.subr.mxu0 0.0
    %1547 = vmatpush1.msra.mxu0 0.0
    %1548 = vmatprep.subr.mxu0 0.0
    %1549 = vmatpush1.msra.mxu0 0.0
    %1550 = vmatprep.subr.mxu0 0.0
    %1551 = vmatpush1.msra.mxu0 0.0
    %1552 = vmatprep.subr.mxu0 0.0
    %1553 = vmatpush1.msra.mxu0 0.0
    %1554 = vmatprep.subr.mxu0 0.0
    %1555 = vmatpush1.msra.mxu0 0.0
    %1556 = vmatprep.subr.mxu0 0.0
    %1557 = vmatpush1.msra.mxu0 0.0
    %1558 = vmatprep.subr.mxu0 0.0
    %1559 = vmatpush1.msra.mxu0 0.0
    %1560 = vmatprep.subr.mxu0 0.0
    %1561 = vmatpush1.msra.mxu0 0.0
    %1562 = vmatprep.subr.mxu0 0.0
    %1563 = vmatpush1.msra.mxu0 0.0
    %1564 = vmatprep.subr.mxu0 0.0
    %1565 = vmatpush1.msra.mxu0 0.0
    %1566 = vmatprep.subr.mxu0 0.0
    %1567 = vmatpush1.msra.mxu0 0.0
    %1568 = vmatprep.subr.mxu0 0.0
    %1569 = vmatpush1.msra.mxu0 0.0
    %1570 = vmatprep.subr.mxu0 0.0
    %1571 = vmatpush1.msra.mxu0 0.0
    %1572 = vmatprep.subr.mxu0 0.0
    %1573 = vmatpush1.msra.mxu0 0.0
    %1574 = vmatprep.mubr.f32.mxu0 0.0
    %1575 = vmatmul.mubr.f32.gmra.mrb[0].mxu0 %v1509
    %v1576 = vpop.f32.mrb[0].mxu0
    %v1577 = vadd.f32 %v237, %v1576
    %v1578 = vpop.f32.mrb[0].mxu0
    %v1579 = vadd.f32 %v241, %v1578
    %1580 = vdwg.mxu0
    %1581 = vmatprep.subr.mxu0 0.0
    %1582 = vmatpush1.msra.mxu0 %v186
    %1583 = vmatprep.subr.mxu0 0.0
    %1584 = vmatpush1.msra.mxu0 %v189
    %1585 = vmatprep.subr.mxu0 0.0
    %1586 = vmatpush1.msra.mxu0 %v192
    %1587 = vmatprep.subr.mxu0 0.0
    %1588 = vmatpush1.msra.mxu0 %v195
    %1589 = vmatprep.subr.mxu0 0.0
    %1590 = vmatpush1.msra.mxu0 %v198
    %1591 = vmatprep.subr.mxu0 0.0
    %1592 = vmatpush1.msra.mxu0 %v201
    %1593 = vmatprep.subr.mxu0 0.0
    %1594 = vmatpush1.msra.mxu0 %v204
    %1595 = vmatprep.subr.mxu0 0.0
    %1596 = vmatpush1.msra.mxu0 %v207
    %1597 = vmatprep.subr.mxu0 0.0
    %1598 = vmatpush1.msra.mxu0 %v210
    %1599 = vmatprep.subr.mxu0 0.0
    %1600 = vmatpush1.msra.mxu0 %v213
    %1601 = vmatprep.subr.mxu0 0.0
    %1602 = vmatpush1.msra.mxu0 %v216
    %1603 = vmatprep.subr.mxu0 0.0
    %1604 = vmatpush1.msra.mxu0 %v219
    %1605 = vmatprep.subr.mxu0 0.0
    %1606 = vmatpush1.msra.mxu0 %v222
    %1607 = vmatprep.subr.mxu0 0.0
    %1608 = vmatpush1.msra.mxu0 %v225
    %1609 = vmatprep.subr.mxu0 0.0
    %1610 = vmatpush1.msra.mxu0 %v228
    %1611 = vmatprep.subr.mxu0 0.0
    %1612 = vmatpush1.msra.mxu0 %v231
    %1613 = vmatprep.subr.mxu0 0.0
    %1614 = vmatpush1.msra.mxu0 0.0
    %1615 = vmatprep.subr.mxu0 0.0
    %1616 = vmatpush1.msra.mxu0 0.0
    %1617 = vmatprep.subr.mxu0 0.0
    %1618 = vmatpush1.msra.mxu0 0.0
    %1619 = vmatprep.subr.mxu0 0.0
    %1620 = vmatpush1.msra.mxu0 0.0
    %1621 = vmatprep.subr.mxu0 0.0
    %1622 = vmatpush1.msra.mxu0 0.0
    %1623 = vmatprep.subr.mxu0 0.0
    %1624 = vmatpush1.msra.mxu0 0.0
    %1625 = vmatprep.subr.mxu0 0.0
    %1626 = vmatpush1.msra.mxu0 0.0
    %1627 = vmatprep.subr.mxu0 0.0
    %1628 = vmatpush1.msra.mxu0 0.0
    %1629 = vmatprep.subr.mxu0 0.0
    %1630 = vmatpush1.msra.mxu0 0.0
    %1631 = vmatprep.subr.mxu0 0.0
    %1632 = vmatpush1.msra.mxu0 0.0
    %1633 = vmatprep.subr.mxu0 0.0
    %1634 = vmatpush1.msra.mxu0 0.0
    %1635 = vmatprep.subr.mxu0 0.0
    %1636 = vmatpush1.msra.mxu0 0.0
    %1637 = vmatprep.subr.mxu0 0.0
    %1638 = vmatpush1.msra.mxu0 0.0
    %1639 = vmatprep.subr.mxu0 0.0
    %1640 = vmatpush1.msra.mxu0 0.0
    %1641 = vmatprep.subr.mxu0 0.0
    %1642 = vmatpush1.msra.mxu0 0.0
    %1643 = vmatprep.subr.mxu0 0.0
    %1644 = vmatpush1.msra.mxu0 0.0
    %1645 = vmatprep.mubr.f32.mxu0 0.0
    %1646 = vmatmul.mubr.f32.gmra.mrb[0].mxu0 %v1509
    %v1647 = vpop.f32.mrb[0].mxu0
    %v1648 = vadd.f32 %v245, %v1647
    %v1649 = vpop.f32.mrb[0].mxu0
    %1650 = vdwg.mxu0
    %s1651 = scalar_lea.vmem [#allocation2], 144
    %v1652 = vld [vmem:[%s1651] sm:$0xff]
    %v1653 = vld [vmem:[%s1651 + $0x8] sm:$0xff]
    %v1654 = vld [vmem:[%s1651 + $0x10] sm:$0xff]
    %v1655 = vadd.f32 %v1652, %v1577
    %v1656 = vxor.u32 %v1655, 2147483648
    %v1657 = vmul.f32 %v1656, 1.442695
    %v1658 = vpow.pop %v1657
    %v1659 = vadd.f32 %v1658, 1.0
    %v1660 = vrcp.pop %v1659
    %v1661 = vmul.f32 1.0, %v1660
    %v1662 = vadd.f32 %v1653, %v1579
    %v1663 = vxor.u32 %v1662, 2147483648
    %v1664 = vmul.f32 %v1663, 1.442695
    %v1665 = vpow.pop %v1664
    %v1666 = vadd.f32 %v1665, 1.0
    %v1667 = vrcp.pop %v1666
    %v1668 = vmul.f32 1.0, %v1667
    %v1669 = vmul.f32 %v1661, %v1648
    %v1670 = vadd.f32 %v1654, %v1669
    %v1671 = vtanh.pop %v1670
    %v1672 = vsub.f32 1.0, %v1668
    %v1673 = vmul.f32 %v1672, %v1671
    %v1674 = vmul.f32 %v1668, %v1509
    %v1675 = vadd.f32 %v1673, %v1674
    %1676 = vmatprep.subr.mxu0 %v185
    %1677 = vmatpush1.msra.mxu0 %v184
    %1678 = vmatprep.subr.mxu0 %v188
    %1679 = vmatpush1.msra.mxu0 %v187
    %1680 = vmatprep.subr.mxu0 %v191
    %1681 = vmatpush1.msra.mxu0 %v190
    %1682 = vmatprep.subr.mxu0 %v194
    %1683 = vmatpush1.msra.mxu0 %v193
    %1684 = vmatprep.subr.mxu0 %v197
    %1685 = vmatpush1.msra.mxu0 %v196
    %1686 = vmatprep.subr.mxu0 %v200
    %1687 = vmatpush1.msra.mxu0 %v199
    %1688 = vmatprep.subr.mxu0 %v203
    %1689 = vmatpush1.msra.mxu0 %v202
    %1690 = vmatprep.subr.mxu0 %v206
    %1691 = vmatpush1.msra.mxu0 %v205
    %1692 = vmatprep.subr.mxu0 %v209
    %1693 = vmatpush1.msra.mxu0 %v208
    %1694 = vmatprep.subr.mxu0 %v212
    %1695 = vmatpush1.msra.mxu0 %v211
    %1696 = vmatprep.subr.mxu0 %v215
    %1697 = vmatpush1.msra.mxu0 %v214
    %1698 = vmatprep.subr.mxu0 %v218
    %1699 = vmatpush1.msra.mxu0 %v217
    %1700 = vmatprep.subr.mxu0 %v221
    %1701 = vmatpush1.msra.mxu0 %v220
    %1702 = vmatprep.subr.mxu0 %v224
    %1703 = vmatpush1.msra.mxu0 %v223
    %1704 = vmatprep.subr.mxu0 %v227
    %1705 = vmatpush1.msra.mxu0 %v226
    %1706 = vmatprep.subr.mxu0 %v230
    %1707 = vmatpush1.msra.mxu0 %v229
    %1708 = vmatprep.subr.mxu0 0.0
    %1709 = vmatpush1.msra.mxu0 0.0
    %1710 = vmatprep.subr.mxu0 0.0
    %1711 = vmatpush1.msra.mxu0 0.0
    %1712 = vmatprep.subr.mxu0 0.0
    %1713 = vmatpush1.msra.mxu0 0.0
    %1714 = vmatprep.subr.mxu0 0.0
    %1715 = vmatpush1.msra.mxu0 0.0
    %1716 = vmatprep.subr.mxu0 0.0
    %1717 = vmatpush1.msra.mxu0 0.0
    %1718 = vmatprep.subr.mxu0 0.0
    %1719 = vmatpush1.msra.mxu0 0.0
    %1720 = vmatprep.subr.mxu0 0.0
    %1721 = vmatpush1.msra.mxu0 0.0
    %1722 = vmatprep.subr.mxu0 0.0
    %1723 = vmatpush1.msra.mxu0 0.0
    %1724 = vmatprep.subr.mxu0 0.0
    %1725 = vmatpush1.msra.mxu0 0.0
    %1726 = vmatprep.subr.mxu0 0.0
    %1727 = vmatpush1.msra.mxu0 0.0
    %1728 = vmatprep.subr.mxu0 0.0
    %1729 = vmatpush1.msra.mxu0 0.0
    %1730 = vmatprep.subr.mxu0 0.0
    %1731 = vmatpush1.msra.mxu0 0.0
    %1732 = vmatprep.subr.mxu0 0.0
    %1733 = vmatpush1.msra.mxu0 0.0
    %1734 = vmatprep.subr.mxu0 0.0
    %1735 = vmatpush1.msra.mxu0 0.0
    %1736 = vmatprep.subr.mxu0 0.0
    %1737 = vmatpush1.msra.mxu0 0.0
    %1738 = vmatprep.subr.mxu0 0.0
    %1739 = vmatpush1.msra.mxu0 0.0
    %1740 = vmatprep.mubr.f32.mxu0 0.0
    %1741 = vmatmul.mubr.f32.gmra.mrb[0].mxu0 %v1675
    %v1742 = vpop.f32.mrb[0].mxu0
    %v1743 = vadd.f32 %v237, %v1742
    %v1744 = vpop.f32.mrb[0].mxu0
    %v1745 = vadd.f32 %v241, %v1744
    %1746 = vdwg.mxu0
    %1747 = vmatprep.subr.mxu0 0.0
    %1748 = vmatpush1.msra.mxu0 %v186
    %1749 = vmatprep.subr.mxu0 0.0
    %1750 = vmatpush1.msra.mxu0 %v189
    %1751 = vmatprep.subr.mxu0 0.0
    %1752 = vmatpush1.msra.mxu0 %v192
    %1753 = vmatprep.subr.mxu0 0.0
    %1754 = vmatpush1.msra.mxu0 %v195
    %1755 = vmatprep.subr.mxu0 0.0
    %1756 = vmatpush1.msra.mxu0 %v198
    %1757 = vmatprep.subr.mxu0 0.0
    %1758 = vmatpush1.msra.mxu0 %v201
    %1759 = vmatprep.subr.mxu0 0.0
    %1760 = vmatpush1.msra.mxu0 %v204
    %1761 = vmatprep.subr.mxu0 0.0
    %1762 = vmatpush1.msra.mxu0 %v207
    %1763 = vmatprep.subr.mxu0 0.0
    %1764 = vmatpush1.msra.mxu0 %v210
    %1765 = vmatprep.subr.mxu0 0.0
    %1766 = vmatpush1.msra.mxu0 %v213
    %1767 = vmatprep.subr.mxu0 0.0
    %1768 = vmatpush1.msra.mxu0 %v216
    %1769 = vmatprep.subr.mxu0 0.0
    %1770 = vmatpush1.msra.mxu0 %v219
    %1771 = vmatprep.subr.mxu0 0.0
    %1772 = vmatpush1.msra.mxu0 %v222
    %1773 = vmatprep.subr.mxu0 0.0
    %1774 = vmatpush1.msra.mxu0 %v225
    %1775 = vmatprep.subr.mxu0 0.0
    %1776 = vmatpush1.msra.mxu0 %v228
    %1777 = vmatprep.subr.mxu0 0.0
    %1778 = vmatpush1.msra.mxu0 %v231
    %1779 = vmatprep.subr.mxu0 0.0
    %1780 = vmatpush1.msra.mxu0 0.0
    %1781 = vmatprep.subr.mxu0 0.0
    %1782 = vmatpush1.msra.mxu0 0.0
    %1783 = vmatprep.subr.mxu0 0.0
    %1784 = vmatpush1.msra.mxu0 0.0
    %1785 = vmatprep.subr.mxu0 0.0
    %1786 = vmatpush1.msra.mxu0 0.0
    %1787 = vmatprep.subr.mxu0 0.0
    %1788 = vmatpush1.msra.mxu0 0.0
    %1789 = vmatprep.subr.mxu0 0.0
    %1790 = vmatpush1.msra.mxu0 0.0
    %1791 = vmatprep.subr.mxu0 0.0
    %1792 = vmatpush1.msra.mxu0 0.0
    %1793 = vmatprep.subr.mxu0 0.0
    %1794 = vmatpush1.msra.mxu0 0.0
    %1795 = vmatprep.subr.mxu0 0.0
    %1796 = vmatpush1.msra.mxu0 0.0
    %1797 = vmatprep.subr.mxu0 0.0
    %1798 = vmatpush1.msra.mxu0 0.0
    %1799 = vmatprep.subr.mxu0 0.0
    %1800 = vmatpush1.msra.mxu0 0.0
    %1801 = vmatprep.subr.mxu0 0.0
    %1802 = vmatpush1.msra.mxu0 0.0
    %1803 = vmatprep.subr.mxu0 0.0
    %1804 = vmatpush1.msra.mxu0 0.0
    %1805 = vmatprep.subr.mxu0 0.0
    %1806 = vmatpush1.msra.mxu0 0.0
    %1807 = vmatprep.subr.mxu0 0.0
    %1808 = vmatpush1.msra.mxu0 0.0
    %1809 = vmatprep.subr.mxu0 0.0
    %1810 = vmatpush1.msra.mxu0 0.0
    %1811 = vmatprep.mubr.f32.mxu0 0.0
    %1812 = vmatmul.mubr.f32.gmra.mrb[0].mxu0 %v1675
    %v1813 = vpop.f32.mrb[0].mxu0
    %v1814 = vadd.f32 %v245, %v1813
    %v1815 = vpop.f32.mrb[0].mxu0
    %1816 = vdwg.mxu0
    %s1817 = scalar_lea.vmem [#allocation2], 168
    %v1818 = vld [vmem:[%s1817] sm:$0xff]
    %v1819 = vld [vmem:[%s1817 + $0x8] sm:$0xff]
    %v1820 = vld [vmem:[%s1817 + $0x10] sm:$0xff]
    %v1821 = vadd.f32 %v1818, %v1743
    %v1822 = vxor.u32 %v1821, 2147483648
    %v1823 = vmul.f32 %v1822, 1.442695
    %v1824 = vpow.pop %v1823
    %v1825 = vadd.f32 %v1824, 1.0
    %v1826 = vrcp.pop %v1825
    %v1827 = vmul.f32 1.0, %v1826
    %v1828 = vadd.f32 %v1819, %v1745
    %v1829 = vxor.u32 %v1828, 2147483648
    %v1830 = vmul.f32 %v1829, 1.442695
    %v1831 = vpow.pop %v1830
    %v1832 = vadd.f32 %v1831, 1.0
    %v1833 = vrcp.pop %v1832
    %v1834 = vmul.f32 1.0, %v1833
    %v1835 = vmul.f32 %v1827, %v1814
    %v1836 = vadd.f32 %v1820, %v1835
    %v1837 = vtanh.pop %v1836
    %v1838 = vsub.f32 1.0, %v1834
    %v1839 = vmul.f32 %v1838, %v1837
    %v1840 = vmul.f32 %v1834, %v1675
    %v1841 = vadd.f32 %v1839, %v1840
    %v1842 = vld [vmem:[#allocation14] sm:$0xff]
    %v1843 = vld [vmem:[#allocation14 + $0x8] sm:$0xff]
    %v1844 = vld [vmem:[#allocation14 + $0x10] sm:$0xff]
    %v1845 = vld [vmem:[#allocation14 + $0x18] sm:$0xff]
    %v1846 = vld [vmem:[#allocation14 + $0x20] sm:$0xff]
    %v1847 = vld [vmem:[#allocation14 + $0x28] sm:$0xff]
    %v1848 = vld [vmem:[#allocation14 + $0x30] sm:$0xff]
    %v1849 = vld [vmem:[#allocation14 + $0x38] sm:$0xff]
    %v1850 = vld [vmem:[#allocation14 + $0x40] sm:$0xff]
    %v1851 = vld [vmem:[#allocation14 + $0x48] sm:$0xff]
    %v1852 = vld [vmem:[#allocation14 + $0x50] sm:$0xff]
    %v1853 = vld [vmem:[#allocation14 + $0x58] sm:$0xff]
    %v1854 = vld [vmem:[#allocation14 + $0x60] sm:$0xff]
    %v1855 = vld [vmem:[#allocation14 + $0x68] sm:$0xff]
    %v1856 = vld [vmem:[#allocation14 + $0x70] sm:$0xff]
    %v1857 = vld [vmem:[#allocation14 + $0x78] sm:$0xff]
    %v1858 = vld [vmem:[#allocation14 + $0x80] sm:$0xff]
    %v1859 = vld [vmem:[#allocation14 + $0x88] sm:$0xff]
    %v1860 = vld [vmem:[#allocation14 + $0x90] sm:$0xff]
    %v1861 = vld [vmem:[#allocation14 + $0x98] sm:$0xff]
    %v1862 = vld [vmem:[#allocation14 + $0xa0] sm:$0xff]
    %v1863 = vld [vmem:[#allocation14 + $0xa8] sm:$0xff]
    %v1864 = vld [vmem:[#allocation14 + $0xb0] sm:$0xff]
    %v1865 = vld [vmem:[#allocation14 + $0xb8] sm:$0xff]
    %v1866 = vld [vmem:[#allocation14 + $0xc0] sm:$0xff]
    %v1867 = vld [vmem:[#allocation14 + $0xc8] sm:$0xff]
    %v1868 = vld [vmem:[#allocation14 + $0xd0] sm:$0xff]
    %v1869 = vld [vmem:[#allocation14 + $0xd8] sm:$0xff]
    %v1870 = vld [vmem:[#allocation14 + $0xe0] sm:$0xff]
    %v1871 = vld [vmem:[#allocation14 + $0xe8] sm:$0xff]
    %v1872 = vld [vmem:[#allocation14 + $0xf0] sm:$0xff]
    %v1873 = vld [vmem:[#allocation14 + $0xf8] sm:$0xff]
    %v1874 = vld [vmem:[#allocation14 + $0x100] sm:$0xff]
    %v1875 = vld [vmem:[#allocation14 + $0x108] sm:$0xff]
    %v1876 = vld [vmem:[#allocation14 + $0x110] sm:$0xff]
    %v1877 = vld [vmem:[#allocation14 + $0x118] sm:$0xff]
    %v1878 = vld [vmem:[#allocation14 + $0x120] sm:$0xff]
    %v1879 = vld [vmem:[#allocation14 + $0x128] sm:$0xff]
    %v1880 = vld [vmem:[#allocation14 + $0x130] sm:$0xff]
    %v1881 = vld [vmem:[#allocation14 + $0x138] sm:$0xff]
    %v1882 = vld [vmem:[#allocation14 + $0x140] sm:$0xff]
    %v1883 = vld [vmem:[#allocation14 + $0x148] sm:$0xff]
    %v1884 = vld [vmem:[#allocation14 + $0x150] sm:$0xff]
    %v1885 = vld [vmem:[#allocation14 + $0x158] sm:$0xff]
    %v1886 = vld [vmem:[#allocation14 + $0x160] sm:$0xff]
    %v1887 = vld [vmem:[#allocation14 + $0x168] sm:$0xff]
    %v1888 = vld [vmem:[#allocation14 + $0x170] sm:$0xff]
    %v1889 = vld [vmem:[#allocation14 + $0x178] sm:$0xff]
    %v1890 = vld [vmem:[#allocation14 + $0x180] sm:$0xff]
    %v1891 = vld [vmem:[#allocation14 + $0x188] sm:$0xff]
    %v1892 = vld [vmem:[#allocation14 + $0x190] sm:$0xff]
    %v1893 = vld [vmem:[#allocation14 + $0x198] sm:$0xff]
    %v1894 = vld [vmem:[#allocation14 + $0x1a0] sm:$0xff]
    %v1895 = vld [vmem:[#allocation14 + $0x1a8] sm:$0xff]
    %v1896 = vld [vmem:[#allocation14 + $0x1b0] sm:$0xff]
    %v1897 = vld [vmem:[#allocation14 + $0x1b8] sm:$0xff]
    %v1898 = vld [vmem:[#allocation14 + $0x1c0] sm:$0xff]
    %v1899 = vld [vmem:[#allocation14 + $0x1c8] sm:$0xff]
    %v1900 = vld [vmem:[#allocation14 + $0x1d0] sm:$0xff]
    %v1901 = vld [vmem:[#allocation14 + $0x1d8] sm:$0xff]
    %v1902 = vld [vmem:[#allocation14 + $0x1e0] sm:$0xff]
    %v1903 = vld [vmem:[#allocation14 + $0x1e8] sm:$0xff]
    %v1904 = vld [vmem:[#allocation14 + $0x1f0] sm:$0xff]
    %v1905 = vld [vmem:[#allocation14 + $0x1f8] sm:$0xff]
    %v1906 = vld [vmem:[#allocation14 + $0x200] sm:$0xff]
    %v1907 = vld [vmem:[#allocation14 + $0x208] sm:$0xff]
    %v1908 = vld [vmem:[#allocation14 + $0x210] sm:$0xff]
    %v1909 = vld [vmem:[#allocation14 + $0x218] sm:$0xff]
    %v1910 = vld [vmem:[#allocation14 + $0x220] sm:$0xff]
    %v1911 = vld [vmem:[#allocation14 + $0x228] sm:$0xff]
    %v1912 = vld [vmem:[#allocation14 + $0x230] sm:$0xff]
    %v1913 = vld [vmem:[#allocation14 + $0x238] sm:$0xff]
    %v1914 = vld [vmem:[#allocation14 + $0x240] sm:$0xff]
    %v1915 = vld [vmem:[#allocation14 + $0x248] sm:$0xff]
    %v1916 = vld [vmem:[#allocation14 + $0x250] sm:$0xff]
    %v1917 = vld [vmem:[#allocation14 + $0x258] sm:$0xff]
    %v1918 = vld [vmem:[#allocation14 + $0x260] sm:$0xff]
    %v1919 = vld [vmem:[#allocation14 + $0x268] sm:$0xff]
    %v1920 = vld [vmem:[#allocation14 + $0x270] sm:$0xff]
    %v1921 = vld [vmem:[#allocation14 + $0x278] sm:$0xff]
    %v1922 = vld [vmem:[#allocation14 + $0x280] sm:$0xff]
    %v1923 = vld [vmem:[#allocation14 + $0x288] sm:$0xff]
    %v1924 = vld [vmem:[#allocation14 + $0x290] sm:$0xff]
    %v1925 = vld [vmem:[#allocation14 + $0x298] sm:$0xff]
    %v1926 = vld [vmem:[#allocation14 + $0x2a0] sm:$0xff]
    %v1927 = vld [vmem:[#allocation14 + $0x2a8] sm:$0xff]
    %v1928 = vld [vmem:[#allocation14 + $0x2b0] sm:$0xff]
    %v1929 = vld [vmem:[#allocation14 + $0x2b8] sm:$0xff]
    %v1930 = vld [vmem:[#allocation14 + $0x2c0] sm:$0xff]
    %v1931 = vld [vmem:[#allocation14 + $0x2c8] sm:$0xff]
    %v1932 = vld [vmem:[#allocation14 + $0x2d0] sm:$0xff]
    %v1933 = vld [vmem:[#allocation14 + $0x2d8] sm:$0xff]
    %v1934 = vld [vmem:[#allocation14 + $0x2e0] sm:$0xff]
    %v1935 = vld [vmem:[#allocation14 + $0x2e8] sm:$0xff]
    %v1936 = vld [vmem:[#allocation14 + $0x2f0] sm:$0xff]
    %v1937 = vld [vmem:[#allocation14 + $0x2f8] sm:$0xff]
    %v1938 = vld [vmem:[%s7] sm:$0x3f]
    %v1940 = vlaneseq
    %v1941 = vshrl.u32 %v1940, 7
    %v1942 = vsub.s32 0, %v1941
    %v1943 = vrot.slane %v1938, %v1942
    %v1944 = vlaneseq
    %v1945 = vshrl.u32 %v1944, 7
    %v1946 = vsub.s32 1, %v1945
    %v1947 = vrot.slane %v1938, %v1946
    %v1948 = vlaneseq
    %v1949 = vshrl.u32 %v1948, 7
    %v1950 = vsub.s32 2, %v1949
    %v1951 = vrot.slane %v1938, %v1950
    %v1952 = vlaneseq
    %v1953 = vshrl.u32 %v1952, 7
    %v1954 = vsub.s32 3, %v1953
    %v1955 = vrot.slane %v1938, %v1954
    %v1956 = vlaneseq
    %v1957 = vshrl.u32 %v1956, 7
    %v1958 = vsub.s32 4, %v1957
    %v1959 = vrot.slane %v1938, %v1958
    %v1960 = vlaneseq
    %v1961 = vshrl.u32 %v1960, 7
    %v1962 = vsub.s32 5, %v1961
    %v1963 = vrot.slane %v1938, %v1962
    %1970 = vmatprep.subr.mxu0 %v1843
    %1971 = vmatpush1.msra.mxu0 %v1842
    %1972 = vmatprep.subr.mxu0 %v1849
    %1973 = vmatpush1.msra.mxu0 %v1848
    %1974 = vmatprep.subr.mxu0 %v1855
    %1975 = vmatpush1.msra.mxu0 %v1854
    %1976 = vmatprep.subr.mxu0 %v1861
    %1977 = vmatpush1.msra.mxu0 %v1860
    %1978 = vmatprep.subr.mxu0 %v1867
    %1979 = vmatpush1.msra.mxu0 %v1866
    %1980 = vmatprep.subr.mxu0 %v1873
    %1981 = vmatpush1.msra.mxu0 %v1872
    %1982 = vmatprep.subr.mxu0 %v1879
    %1983 = vmatpush1.msra.mxu0 %v1878
    %1984 = vmatprep.subr.mxu0 %v1885
    %1985 = vmatpush1.msra.mxu0 %v1884
    %1986 = vmatprep.subr.mxu0 %v1891
    %1987 = vmatpush1.msra.mxu0 %v1890
    %1988 = vmatprep.subr.mxu0 %v1897
    %1989 = vmatpush1.msra.mxu0 %v1896
    %1990 = vmatprep.subr.mxu0 %v1903
    %1991 = vmatpush1.msra.mxu0 %v1902
    %1992 = vmatprep.subr.mxu0 %v1909
    %1993 = vmatpush1.msra.mxu0 %v1908
    %1994 = vmatprep.subr.mxu0 %v1915
    %1995 = vmatpush1.msra.mxu0 %v1914
    %1996 = vmatprep.subr.mxu0 %v1921
    %1997 = vmatpush1.msra.mxu0 %v1920
    %1998 = vmatprep.subr.mxu0 %v1927
    %1999 = vmatpush1.msra.mxu0 %v1926
    %2000 = vmatprep.subr.mxu0 %v1933
    %2001 = vmatpush1.msra.mxu0 %v1932
    %2002 = vmatprep.subr.mxu0 0.0
    %2003 = vmatpush1.msra.mxu0 0.0
    %2004 = vmatprep.subr.mxu0 0.0
    %2005 = vmatpush1.msra.mxu0 0.0
    %2006 = vmatprep.subr.mxu0 0.0
    %2007 = vmatpush1.msra.mxu0 0.0
    %2008 = vmatprep.subr.mxu0 0.0
    %2009 = vmatpush1.msra.mxu0 0.0
    %2010 = vmatprep.subr.mxu0 0.0
    %2011 = vmatpush1.msra.mxu0 0.0
    %2012 = vmatprep.subr.mxu0 0.0
    %2013 = vmatpush1.msra.mxu0 0.0
    %2014 = vmatprep.subr.mxu0 0.0
    %2015 = vmatpush1.msra.mxu0 0.0
    %2016 = vmatprep.subr.mxu0 0.0
    %2017 = vmatpush1.msra.mxu0 0.0
    %2018 = vmatprep.subr.mxu0 0.0
    %2019 = vmatpush1.msra.mxu0 0.0
    %2020 = vmatprep.subr.mxu0 0.0
    %2021 = vmatpush1.msra.mxu0 0.0
    %2022 = vmatprep.subr.mxu0 0.0
    %2023 = vmatpush1.msra.mxu0 0.0
    %2024 = vmatprep.subr.mxu0 0.0
    %2025 = vmatpush1.msra.mxu0 0.0
    %2026 = vmatprep.subr.mxu0 0.0
    %2027 = vmatpush1.msra.mxu0 0.0
    %2028 = vmatprep.subr.mxu0 0.0
    %2029 = vmatpush1.msra.mxu0 0.0
    %2030 = vmatprep.subr.mxu0 0.0
    %2031 = vmatpush1.msra.mxu0 0.0
    %2032 = vmatprep.subr.mxu0 0.0
    %2033 = vmatpush1.msra.mxu0 0.0
    %2034 = vmatprep.mubr.f32.mxu0 0.0
    %2035 = vmatmul.mubr.f32.gmra.mrb[0].mxu0 %v1841
    %v2036 = vpop.f32.mrb[0].mxu0
    %v2037 = vadd.f32 %v1943, %v2036
    %v2038 = vpop.f32.mrb[0].mxu0
    %v2039 = vadd.f32 %v1947, %v2038
    %2040 = vdwg.mxu0
    %2041 = vmatprep.subr.mxu0 %v1845
    %2042 = vmatpush1.msra.mxu0 %v1844
    %2043 = vmatprep.subr.mxu0 %v1851
    %2044 = vmatpush1.msra.mxu0 %v1850
    %2045 = vmatprep.subr.mxu0 %v1857
    %2046 = vmatpush1.msra.mxu0 %v1856
    %2047 = vmatprep.subr.mxu0 %v1863
    %2048 = vmatpush1.msra.mxu0 %v1862
    %2049 = vmatprep.subr.mxu0 %v1869
    %2050 = vmatpush1.msra.mxu0 %v1868
    %2051 = vmatprep.subr.mxu0 %v1875
    %2052 = vmatpush1.msra.mxu0 %v1874
    %2053 = vmatprep.subr.mxu0 %v1881
    %2054 = vmatpush1.msra.mxu0 %v1880
    %2055 = vmatprep.subr.mxu0 %v1887
    %2056 = vmatpush1.msra.mxu0 %v1886
    %2057 = vmatprep.subr.mxu0 %v1893
    %2058 = vmatpush1.msra.mxu0 %v1892
    %2059 = vmatprep.subr.mxu0 %v1899
    %2060 = vmatpush1.msra.mxu0 %v1898
    %2061 = vmatprep.subr.mxu0 %v1905
    %2062 = vmatpush1.msra.mxu0 %v1904
    %2063 = vmatprep.subr.mxu0 %v1911
    %2064 = vmatpush1.msra.mxu0 %v1910
    %2065 = vmatprep.subr.mxu0 %v1917
    %2066 = vmatpush1.msra.mxu0 %v1916
    %2067 = vmatprep.subr.mxu0 %v1923
    %2068 = vmatpush1.msra.mxu0 %v1922
    %2069 = vmatprep.subr.mxu0 %v1929
    %2070 = vmatpush1.msra.mxu0 %v1928
    %2071 = vmatprep.subr.mxu0 %v1935
    %2072 = vmatpush1.msra.mxu0 %v1934
    %2073 = vmatprep.subr.mxu0 0.0
    %2074 = vmatpush1.msra.mxu0 0.0
    %2075 = vmatprep.subr.mxu0 0.0
    %2076 = vmatpush1.msra.mxu0 0.0
    %2077 = vmatprep.subr.mxu0 0.0
    %2078 = vmatpush1.msra.mxu0 0.0
    %2079 = vmatprep.subr.mxu0 0.0
    %2080 = vmatpush1.msra.mxu0 0.0
    %2081 = vmatprep.subr.mxu0 0.0
    %2082 = vmatpush1.msra.mxu0 0.0
    %2083 = vmatprep.subr.mxu0 0.0
    %2084 = vmatpush1.msra.mxu0 0.0
    %2085 = vmatprep.subr.mxu0 0.0
    %2086 = vmatpush1.msra.mxu0 0.0
    %2087 = vmatprep.subr.mxu0 0.0
    %2088 = vmatpush1.msra.mxu0 0.0
    %2089 = vmatprep.subr.mxu0 0.0
    %2090 = vmatpush1.msra.mxu0 0.0
    %2091 = vmatprep.subr.mxu0 0.0
    %2092 = vmatpush1.msra.mxu0 0.0
    %2093 = vmatprep.subr.mxu0 0.0
    %2094 = vmatpush1.msra.mxu0 0.0
    %2095 = vmatprep.subr.mxu0 0.0
    %2096 = vmatpush1.msra.mxu0 0.0
    %2097 = vmatprep.subr.mxu0 0.0
    %2098 = vmatpush1.msra.mxu0 0.0
    %2099 = vmatprep.subr.mxu0 0.0
    %2100 = vmatpush1.msra.mxu0 0.0
    %2101 = vmatprep.subr.mxu0 0.0
    %2102 = vmatpush1.msra.mxu0 0.0
    %2103 = vmatprep.subr.mxu0 0.0
    %2104 = vmatpush1.msra.mxu0 0.0
    %2105 = vmatprep.mubr.f32.mxu0 0.0
    %2106 = vmatmul.mubr.f32.gmra.mrb[0].mxu0 %v1841
    %v2107 = vpop.f32.mrb[0].mxu0
    %v2108 = vadd.f32 %v1951, %v2107
    %v2109 = vpop.f32.mrb[0].mxu0
    %v2110 = vadd.f32 %v1955, %v2109
    %2111 = vdwg.mxu0
    %2112 = vmatprep.subr.mxu0 %v1847
    %2113 = vmatpush1.msra.mxu0 %v1846
    %2114 = vmatprep.subr.mxu0 %v1853
    %2115 = vmatpush1.msra.mxu0 %v1852
    %2116 = vmatprep.subr.mxu0 %v1859
    %2117 = vmatpush1.msra.mxu0 %v1858
    %2118 = vmatprep.subr.mxu0 %v1865
    %2119 = vmatpush1.msra.mxu0 %v1864
    %2120 = vmatprep.subr.mxu0 %v1871
    %2121 = vmatpush1.msra.mxu0 %v1870
    %2122 = vmatprep.subr.mxu0 %v1877
    %2123 = vmatpush1.msra.mxu0 %v1876
    %2124 = vmatprep.subr.mxu0 %v1883
    %2125 = vmatpush1.msra.mxu0 %v1882
    %2126 = vmatprep.subr.mxu0 %v1889
    %2127 = vmatpush1.msra.mxu0 %v1888
    %2128 = vmatprep.subr.mxu0 %v1895
    %2129 = vmatpush1.msra.mxu0 %v1894
    %2130 = vmatprep.subr.mxu0 %v1901
    %2131 = vmatpush1.msra.mxu0 %v1900
    %2132 = vmatprep.subr.mxu0 %v1907
    %2133 = vmatpush1.msra.mxu0 %v1906
    %2134 = vmatprep.subr.mxu0 %v1913
    %2135 = vmatpush1.msra.mxu0 %v1912
    %2136 = vmatprep.subr.mxu0 %v1919
    %2137 = vmatpush1.msra.mxu0 %v1918
    %2138 = vmatprep.subr.mxu0 %v1925
    %2139 = vmatpush1.msra.mxu0 %v1924
    %2140 = vmatprep.subr.mxu0 %v1931
    %2141 = vmatpush1.msra.mxu0 %v1930
    %2142 = vmatprep.subr.mxu0 %v1937
    %2143 = vmatpush1.msra.mxu0 %v1936
    %2144 = vmatprep.subr.mxu0 0.0
    %2145 = vmatpush1.msra.mxu0 0.0
    %2146 = vmatprep.subr.mxu0 0.0
    %2147 = vmatpush1.msra.mxu0 0.0
    %2148 = vmatprep.subr.mxu0 0.0
    %2149 = vmatpush1.msra.mxu0 0.0
    %2150 = vmatprep.subr.mxu0 0.0
    %2151 = vmatpush1.msra.mxu0 0.0
    %2152 = vmatprep.subr.mxu0 0.0
    %2153 = vmatpush1.msra.mxu0 0.0
    %2154 = vmatprep.subr.mxu0 0.0
    %2155 = vmatpush1.msra.mxu0 0.0
    %2156 = vmatprep.subr.mxu0 0.0
    %2157 = vmatpush1.msra.mxu0 0.0
    %2158 = vmatprep.subr.mxu0 0.0
    %2159 = vmatpush1.msra.mxu0 0.0
    %2160 = vmatprep.subr.mxu0 0.0
    %2161 = vmatpush1.msra.mxu0 0.0
    %2162 = vmatprep.subr.mxu0 0.0
    %2163 = vmatpush1.msra.mxu0 0.0
    %2164 = vmatprep.subr.mxu0 0.0
    %2165 = vmatpush1.msra.mxu0 0.0
    %2166 = vmatprep.subr.mxu0 0.0
    %2167 = vmatpush1.msra.mxu0 0.0
    %2168 = vmatprep.subr.mxu0 0.0
    %2169 = vmatpush1.msra.mxu0 0.0
    %2170 = vmatprep.subr.mxu0 0.0
    %2171 = vmatpush1.msra.mxu0 0.0
    %2172 = vmatprep.subr.mxu0 0.0
    %2173 = vmatpush1.msra.mxu0 0.0
    %2174 = vmatprep.subr.mxu0 0.0
    %2175 = vmatpush1.msra.mxu0 0.0
    %2176 = vmatprep.mubr.f32.mxu0 0.0
    %2177 = vmatmul.mubr.f32.gmra.mrb[0].mxu0 %v1841
    %v2178 = vpop.f32.mrb[0].mxu0
    %v2179 = vadd.f32 %v1959, %v2178
    %v2180 = vpop.f32.mrb[0].mxu0
    %v2181 = vadd.f32 %v1963, %v2180
    %2182 = vdwg.mxu0
    %v2183 = vadd.f32 %v2037, %v2110
    %v2184 = vxor.u32 %v2183, 2147483648
    %v2185 = vmul.f32 %v2184, 1.442695
    %v2186 = vpow.pop %v2185
    %v2187 = vadd.f32 %v2186, 1.0
    %v2188 = vrcp.pop %v2187
    %v2189 = vmul.f32 1.0, %v2188
    %v2190 = vadd.f32 %v2039, %v2179
    %v2191 = vxor.u32 %v2190, 2147483648
    %v2192 = vmul.f32 %v2191, 1.442695
    %v2193 = vpow.pop %v2192
    %v2194 = vadd.f32 %v2193, 1.0
    %v2195 = vrcp.pop %v2194
    %v2196 = vmul.f32 1.0, %v2195
    %v2197 = vmul.f32 %v2189, %v2181
    %v2198 = vadd.f32 %v2108, %v2197
    %v2199 = vtanh.pop %v2198
    %v2200 = vsub.f32 1.0, %v2196
    %v2201 = vmul.f32 %v2200, %v2199
    %v2202 = vmul.f32 %v2196, %v1841
    %v2203 = vadd.f32 %v2201, %v2202
    %2204 = vst [vmem:[#allocation5] sm:$0xff] %v2203
    %2205 = vmatprep.subr.mxu0 %v1843
    %2206 = vmatpush1.msra.mxu0 %v1842
    %2207 = vmatprep.subr.mxu0 %v1849
    %2208 = vmatpush1.msra.mxu0 %v1848
    %2209 = vmatprep.subr.mxu0 %v1855
    %2210 = vmatpush1.msra.mxu0 %v1854
    %2211 = vmatprep.subr.mxu0 %v1861
    %2212 = vmatpush1.msra.mxu0 %v1860
    %2213 = vmatprep.subr.mxu0 %v1867
    %2214 = vmatpush1.msra.mxu0 %v1866
    %2215 = vmatprep.subr.mxu0 %v1873
    %2216 = vmatpush1.msra.mxu0 %v1872
    %2217 = vmatprep.subr.mxu0 %v1879
    %2218 = vmatpush1.msra.mxu0 %v1878
    %2219 = vmatprep.subr.mxu0 %v1885
    %2220 = vmatpush1.msra.mxu0 %v1884
    %2221 = vmatprep.subr.mxu0 %v1891
    %2222 = vmatpush1.msra.mxu0 %v1890
    %2223 = vmatprep.subr.mxu0 %v1897
    %2224 = vmatpush1.msra.mxu0 %v1896
    %2225 = vmatprep.subr.mxu0 %v1903
    %2226 = vmatpush1.msra.mxu0 %v1902
    %2227 = vmatprep.subr.mxu0 %v1909
    %2228 = vmatpush1.msra.mxu0 %v1908
    %2229 = vmatprep.subr.mxu0 %v1915
    %2230 = vmatpush1.msra.mxu0 %v1914
    %2231 = vmatprep.subr.mxu0 %v1921
    %2232 = vmatpush1.msra.mxu0 %v1920
    %2233 = vmatprep.subr.mxu0 %v1927
    %2234 = vmatpush1.msra.mxu0 %v1926
    %2235 = vmatprep.subr.mxu0 %v1933
    %2236 = vmatpush1.msra.mxu0 %v1932
    %2237 = vmatprep.subr.mxu0 0.0
    %2238 = vmatpush1.msra.mxu0 0.0
    %2239 = vmatprep.subr.mxu0 0.0
    %2240 = vmatpush1.msra.mxu0 0.0
    %2241 = vmatprep.subr.mxu0 0.0
    %2242 = vmatpush1.msra.mxu0 0.0
    %2243 = vmatprep.subr.mxu0 0.0
    %2244 = vmatpush1.msra.mxu0 0.0
    %2245 = vmatprep.subr.mxu0 0.0
    %2246 = vmatpush1.msra.mxu0 0.0
    %2247 = vmatprep.subr.mxu0 0.0
    %2248 = vmatpush1.msra.mxu0 0.0
    %2249 = vmatprep.subr.mxu0 0.0
    %2250 = vmatpush1.msra.mxu0 0.0
    %2251 = vmatprep.subr.mxu0 0.0
    %2252 = vmatpush1.msra.mxu0 0.0
    %2253 = vmatprep.subr.mxu0 0.0
    %2254 = vmatpush1.msra.mxu0 0.0
    %2255 = vmatprep.subr.mxu0 0.0
    %2256 = vmatpush1.msra.mxu0 0.0
    %2257 = vmatprep.subr.mxu0 0.0
    %2258 = vmatpush1.msra.mxu0 0.0
    %2259 = vmatprep.subr.mxu0 0.0
    %2260 = vmatpush1.msra.mxu0 0.0
    %2261 = vmatprep.subr.mxu0 0.0
    %2262 = vmatpush1.msra.mxu0 0.0
    %2263 = vmatprep.subr.mxu0 0.0
    %2264 = vmatpush1.msra.mxu0 0.0
    %2265 = vmatprep.subr.mxu0 0.0
    %2266 = vmatpush1.msra.mxu0 0.0
    %2267 = vmatprep.subr.mxu0 0.0
    %2268 = vmatpush1.msra.mxu0 0.0
    %2269 = vmatprep.mubr.f32.mxu0 0.0
    %2270 = vmatmul.mubr.f32.gmra.mrb[0].mxu0 %v2203
    %v2271 = vpop.f32.mrb[0].mxu0
    %v2272 = vadd.f32 %v1943, %v2271
    %v2273 = vpop.f32.mrb[0].mxu0
    %v2274 = vadd.f32 %v1947, %v2273
    %2275 = vdwg.mxu0
    %2276 = vmatprep.subr.mxu0 %v1845
    %2277 = vmatpush1.msra.mxu0 %v1844
    %2278 = vmatprep.subr.mxu0 %v1851
    %2279 = vmatpush1.msra.mxu0 %v1850
    %2280 = vmatprep.subr.mxu0 %v1857
    %2281 = vmatpush1.msra.mxu0 %v1856
    %2282 = vmatprep.subr.mxu0 %v1863
    %2283 = vmatpush1.msra.mxu0 %v1862
    %2284 = vmatprep.subr.mxu0 %v1869
    %2285 = vmatpush1.msra.mxu0 %v1868
    %2286 = vmatprep.subr.mxu0 %v1875
    %2287 = vmatpush1.msra.mxu0 %v1874
    %2288 = vmatprep.subr.mxu0 %v1881
    %2289 = vmatpush1.msra.mxu0 %v1880
    %2290 = vmatprep.subr.mxu0 %v1887
    %2291 = vmatpush1.msra.mxu0 %v1886
    %2292 = vmatprep.subr.mxu0 %v1893
    %2293 = vmatpush1.msra.mxu0 %v1892
    %2294 = vmatprep.subr.mxu0 %v1899
    %2295 = vmatpush1.msra.mxu0 %v1898
    %2296 = vmatprep.subr.mxu0 %v1905
    %2297 = vmatpush1.msra.mxu0 %v1904
    %2298 = vmatprep.subr.mxu0 %v1911
    %2299 = vmatpush1.msra.mxu0 %v1910
    %2300 = vmatprep.subr.mxu0 %v1917
    %2301 = vmatpush1.msra.mxu0 %v1916
    %2302 = vmatprep.subr.mxu0 %v1923
    %2303 = vmatpush1.msra.mxu0 %v1922
    %2304 = vmatprep.subr.mxu0 %v1929
    %2305 = vmatpush1.msra.mxu0 %v1928
    %2306 = vmatprep.subr.mxu0 %v1935
    %2307 = vmatpush1.msra.mxu0 %v1934
    %2308 = vmatprep.subr.mxu0 0.0
    %2309 = vmatpush1.msra.mxu0 0.0
    %2310 = vmatprep.subr.mxu0 0.0
    %2311 = vmatpush1.msra.mxu0 0.0
    %2312 = vmatprep.subr.mxu0 0.0
    %2313 = vmatpush1.msra.mxu0 0.0
    %2314 = vmatprep.subr.mxu0 0.0
    %2315 = vmatpush1.msra.mxu0 0.0
    %2316 = vmatprep.subr.mxu0 0.0
    %2317 = vmatpush1.msra.mxu0 0.0
    %2318 = vmatprep.subr.mxu0 0.0
    %2319 = vmatpush1.msra.mxu0 0.0
    %2320 = vmatprep.subr.mxu0 0.0
    %2321 = vmatpush1.msra.mxu0 0.0
    %2322 = vmatprep.subr.mxu0 0.0
    %2323 = vmatpush1.msra.mxu0 0.0
    %2324 = vmatprep.subr.mxu0 0.0
    %2325 = vmatpush1.msra.mxu0 0.0
    %2326 = vmatprep.subr.mxu0 0.0
    %2327 = vmatpush1.msra.mxu0 0.0
    %2328 = vmatprep.subr.mxu0 0.0
    %2329 = vmatpush1.msra.mxu0 0.0
    %2330 = vmatprep.subr.mxu0 0.0
    %2331 = vmatpush1.msra.mxu0 0.0
    %2332 = vmatprep.subr.mxu0 0.0
    %2333 = vmatpush1.msra.mxu0 0.0
    %2334 = vmatprep.subr.mxu0 0.0
    %2335 = vmatpush1.msra.mxu0 0.0
    %2336 = vmatprep.subr.mxu0 0.0
    %2337 = vmatpush1.msra.mxu0 0.0
    %2338 = vmatprep.subr.mxu0 0.0
    %2339 = vmatpush1.msra.mxu0 0.0
    %2340 = vmatprep.mubr.f32.mxu0 0.0
    %2341 = vmatmul.mubr.f32.gmra.mrb[0].mxu0 %v2203
    %v2342 = vpop.f32.mrb[0].mxu0
    %v2343 = vadd.f32 %v1951, %v2342
    %v2344 = vpop.f32.mrb[0].mxu0
    %v2345 = vadd.f32 %v1955, %v2344
    %2346 = vdwg.mxu0
    %2347 = vmatprep.subr.mxu0 %v1847
    %2348 = vmatpush1.msra.mxu0 %v1846
    %2349 = vmatprep.subr.mxu0 %v1853
    %2350 = vmatpush1.msra.mxu0 %v1852
    %2351 = vmatprep.subr.mxu0 %v1859
    %2352 = vmatpush1.msra.mxu0 %v1858
    %2353 = vmatprep.subr.mxu0 %v1865
    %2354 = vmatpush1.msra.mxu0 %v1864
    %2355 = vmatprep.subr.mxu0 %v1871
    %2356 = vmatpush1.msra.mxu0 %v1870
    %2357 = vmatprep.subr.mxu0 %v1877
    %2358 = vmatpush1.msra.mxu0 %v1876
    %2359 = vmatprep.subr.mxu0 %v1883
    %2360 = vmatpush1.msra.mxu0 %v1882
    %2361 = vmatprep.subr.mxu0 %v1889
    %2362 = vmatpush1.msra.mxu0 %v1888
    %2363 = vmatprep.subr.mxu0 %v1895
    %2364 = vmatpush1.msra.mxu0 %v1894
    %2365 = vmatprep.subr.mxu0 %v1901
    %2366 = vmatpush1.msra.mxu0 %v1900
    %2367 = vmatprep.subr.mxu0 %v1907
    %2368 = vmatpush1.msra.mxu0 %v1906
    %2369 = vmatprep.subr.mxu0 %v1913
    %2370 = vmatpush1.msra.mxu0 %v1912
    %2371 = vmatprep.subr.mxu0 %v1919
    %2372 = vmatpush1.msra.mxu0 %v1918
    %2373 = vmatprep.subr.mxu0 %v1925
    %2374 = vmatpush1.msra.mxu0 %v1924
    %2375 = vmatprep.subr.mxu0 %v1931
    %2376 = vmatpush1.msra.mxu0 %v1930
    %2377 = vmatprep.subr.mxu0 %v1937
    %2378 = vmatpush1.msra.mxu0 %v1936
    %2379 = vmatprep.subr.mxu0 0.0
    %2380 = vmatpush1.msra.mxu0 0.0
    %2381 = vmatprep.subr.mxu0 0.0
    %2382 = vmatpush1.msra.mxu0 0.0
    %2383 = vmatprep.subr.mxu0 0.0
    %2384 = vmatpush1.msra.mxu0 0.0
    %2385 = vmatprep.subr.mxu0 0.0
    %2386 = vmatpush1.msra.mxu0 0.0
    %2387 = vmatprep.subr.mxu0 0.0
    %2388 = vmatpush1.msra.mxu0 0.0
    %2389 = vmatprep.subr.mxu0 0.0
    %2390 = vmatpush1.msra.mxu0 0.0
    %2391 = vmatprep.subr.mxu0 0.0
    %2392 = vmatpush1.msra.mxu0 0.0
    %2393 = vmatprep.subr.mxu0 0.0
    %2394 = vmatpush1.msra.mxu0 0.0
    %2395 = vmatprep.subr.mxu0 0.0
    %2396 = vmatpush1.msra.mxu0 0.0
    %2397 = vmatprep.subr.mxu0 0.0
    %2398 = vmatpush1.msra.mxu0 0.0
    %2399 = vmatprep.subr.mxu0 0.0
    %2400 = vmatpush1.msra.mxu0 0.0
    %2401 = vmatprep.subr.mxu0 0.0
    %2402 = vmatpush1.msra.mxu0 0.0
    %2403 = vmatprep.subr.mxu0 0.0
    %2404 = vmatpush1.msra.mxu0 0.0
    %2405 = vmatprep.subr.mxu0 0.0
    %2406 = vmatpush1.msra.mxu0 0.0
    %2407 = vmatprep.subr.mxu0 0.0
    %2408 = vmatpush1.msra.mxu0 0.0
    %2409 = vmatprep.subr.mxu0 0.0
    %2410 = vmatpush1.msra.mxu0 0.0
    %2411 = vmatprep.mubr.f32.mxu0 0.0
    %2412 = vmatmul.mubr.f32.gmra.mrb[0].mxu0 %v2203
    %v2413 = vpop.f32.mrb[0].mxu0
    %v2414 = vadd.f32 %v1959, %v2413
    %v2415 = vpop.f32.mrb[0].mxu0
    %v2416 = vadd.f32 %v1963, %v2415
    %2417 = vdwg.mxu0
    %v2418 = vadd.f32 %v2272, %v2345
    %v2419 = vxor.u32 %v2418, 2147483648
    %v2420 = vmul.f32 %v2419, 1.442695
    %v2421 = vpow.pop %v2420
    %v2422 = vadd.f32 %v2421, 1.0
    %v2423 = vrcp.pop %v2422
    %v2424 = vmul.f32 1.0, %v2423
    %v2425 = vadd.f32 %v2274, %v2414
    %v2426 = vxor.u32 %v2425, 2147483648
    %v2427 = vmul.f32 %v2426, 1.442695
    %v2428 = vpow.pop %v2427
    %v2429 = vadd.f32 %v2428, 1.0
    %v2430 = vrcp.pop %v2429
    %v2431 = vmul.f32 1.0, %v2430
    %v2432 = vmul.f32 %v2424, %v2416
    %v2433 = vadd.f32 %v2343, %v2432
    %v2434 = vtanh.pop %v2433
    %v2435 = vsub.f32 1.0, %v2431
    %v2436 = vmul.f32 %v2435, %v2434
    %v2437 = vmul.f32 %v2431, %v2203
    %v2438 = vadd.f32 %v2436, %v2437
    %s2439 = scalar_lea.vmem [#allocation5], 8
    %2440 = vst [vmem:[%s2439] sm:$0xff] %v2438
    %2441 = vmatprep.subr.mxu0 %v1843
    %2442 = vmatpush1.msra.mxu0 %v1842
    %2443 = vmatprep.subr.mxu0 %v1849
    %2444 = vmatpush1.msra.mxu0 %v1848
    %2445 = vmatprep.subr.mxu0 %v1855
    %2446 = vmatpush1.msra.mxu0 %v1854
    %2447 = vmatprep.subr.mxu0 %v1861
    %2448 = vmatpush1.msra.mxu0 %v1860
    %2449 = vmatprep.subr.mxu0 %v1867
    %2450 = vmatpush1.msra.mxu0 %v1866
    %2451 = vmatprep.subr.mxu0 %v1873
    %2452 = vmatpush1.msra.mxu0 %v1872
    %2453 = vmatprep.subr.mxu0 %v1879
    %2454 = vmatpush1.msra.mxu0 %v1878
    %2455 = vmatprep.subr.mxu0 %v1885
    %2456 = vmatpush1.msra.mxu0 %v1884
    %2457 = vmatprep.subr.mxu0 %v1891
    %2458 = vmatpush1.msra.mxu0 %v1890
    %2459 = vmatprep.subr.mxu0 %v1897
    %2460 = vmatpush1.msra.mxu0 %v1896
    %2461 = vmatprep.subr.mxu0 %v1903
    %2462 = vmatpush1.msra.mxu0 %v1902
    %2463 = vmatprep.subr.mxu0 %v1909
    %2464 = vmatpush1.msra.mxu0 %v1908
    %2465 = vmatprep.subr.mxu0 %v1915
    %2466 = vmatpush1.msra.mxu0 %v1914
    %2467 = vmatprep.subr.mxu0 %v1921
    %2468 = vmatpush1.msra.mxu0 %v1920
    %2469 = vmatprep.subr.mxu0 %v1927
    %2470 = vmatpush1.msra.mxu0 %v1926
    %2471 = vmatprep.subr.mxu0 %v1933
    %2472 = vmatpush1.msra.mxu0 %v1932
    %2473 = vmatprep.subr.mxu0 0.0
    %2474 = vmatpush1.msra.mxu0 0.0
    %2475 = vmatprep.subr.mxu0 0.0
    %2476 = vmatpush1.msra.mxu0 0.0
    %2477 = vmatprep.subr.mxu0 0.0
    %2478 = vmatpush1.msra.mxu0 0.0
    %2479 = vmatprep.subr.mxu0 0.0
    %2480 = vmatpush1.msra.mxu0 0.0
    %2481 = vmatprep.subr.mxu0 0.0
    %2482 = vmatpush1.msra.mxu0 0.0
    %2483 = vmatprep.subr.mxu0 0.0
    %2484 = vmatpush1.msra.mxu0 0.0
    %2485 = vmatprep.subr.mxu0 0.0
    %2486 = vmatpush1.msra.mxu0 0.0
    %2487 = vmatprep.subr.mxu0 0.0
    %2488 = vmatpush1.msra.mxu0 0.0
    %2489 = vmatprep.subr.mxu0 0.0
    %2490 = vmatpush1.msra.mxu0 0.0
    %2491 = vmatprep.subr.mxu0 0.0
    %2492 = vmatpush1.msra.mxu0 0.0
    %2493 = vmatprep.subr.mxu0 0.0
    %2494 = vmatpush1.msra.mxu0 0.0
    %2495 = vmatprep.subr.mxu0 0.0
    %2496 = vmatpush1.msra.mxu0 0.0
    %2497 = vmatprep.subr.mxu0 0.0
    %2498 = vmatpush1.msra.mxu0 0.0
    %2499 = vmatprep.subr.mxu0 0.0
    %2500 = vmatpush1.msra.mxu0 0.0
    %2501 = vmatprep.subr.mxu0 0.0
    %2502 = vmatpush1.msra.mxu0 0.0
    %2503 = vmatprep.subr.mxu0 0.0
    %2504 = vmatpush1.msra.mxu0 0.0
    %2505 = vmatprep.mubr.f32.mxu0 0.0
    %2506 = vmatmul.mubr.f32.gmra.mrb[0].mxu0 %v2438
    %v2507 = vpop.f32.mrb[0].mxu0
    %v2508 = vadd.f32 %v1943, %v2507
    %v2509 = vpop.f32.mrb[0].mxu0
    %v2510 = vadd.f32 %v1947, %v2509
    %2511 = vdwg.mxu0
    %2512 = vmatprep.subr.mxu0 %v1845
    %2513 = vmatpush1.msra.mxu0 %v1844
    %2514 = vmatprep.subr.mxu0 %v1851
    %2515 = vmatpush1.msra.mxu0 %v1850
    %2516 = vmatprep.subr.mxu0 %v1857
    %2517 = vmatpush1.msra.mxu0 %v1856
    %2518 = vmatprep.subr.mxu0 %v1863
    %2519 = vmatpush1.msra.mxu0 %v1862
    %2520 = vmatprep.subr.mxu0 %v1869
    %2521 = vmatpush1.msra.mxu0 %v1868
    %2522 = vmatprep.subr.mxu0 %v1875
    %2523 = vmatpush1.msra.mxu0 %v1874
    %2524 = vmatprep.subr.mxu0 %v1881
    %2525 = vmatpush1.msra.mxu0 %v1880
    %2526 = vmatprep.subr.mxu0 %v1887
    %2527 = vmatpush1.msra.mxu0 %v1886
    %2528 = vmatprep.subr.mxu0 %v1893
    %2529 = vmatpush1.msra.mxu0 %v1892
    %2530 = vmatprep.subr.mxu0 %v1899
    %2531 = vmatpush1.msra.mxu0 %v1898
    %2532 = vmatprep.subr.mxu0 %v1905
    %2533 = vmatpush1.msra.mxu0 %v1904
    %2534 = vmatprep.subr.mxu0 %v1911
    %2535 = vmatpush1.msra.mxu0 %v1910
    %2536 = vmatprep.subr.mxu0 %v1917
    %2537 = vmatpush1.msra.mxu0 %v1916
    %2538 = vmatprep.subr.mxu0 %v1923
    %2539 = vmatpush1.msra.mxu0 %v1922
    %2540 = vmatprep.subr.mxu0 %v1929
    %2541 = vmatpush1.msra.mxu0 %v1928
    %2542 = vmatprep.subr.mxu0 %v1935
    %2543 = vmatpush1.msra.mxu0 %v1934
    %2544 = vmatprep.subr.mxu0 0.0
    %2545 = vmatpush1.msra.mxu0 0.0
    %2546 = vmatprep.subr.mxu0 0.0
    %2547 = vmatpush1.msra.mxu0 0.0
    %2548 = vmatprep.subr.mxu0 0.0
    %2549 = vmatpush1.msra.mxu0 0.0
    %2550 = vmatprep.subr.mxu0 0.0
    %2551 = vmatpush1.msra.mxu0 0.0
    %2552 = vmatprep.subr.mxu0 0.0
    %2553 = vmatpush1.msra.mxu0 0.0
    %2554 = vmatprep.subr.mxu0 0.0
    %2555 = vmatpush1.msra.mxu0 0.0
    %2556 = vmatprep.subr.mxu0 0.0
    %2557 = vmatpush1.msra.mxu0 0.0
    %2558 = vmatprep.subr.mxu0 0.0
    %2559 = vmatpush1.msra.mxu0 0.0
    %2560 = vmatprep.subr.mxu0 0.0
    %2561 = vmatpush1.msra.mxu0 0.0
    %2562 = vmatprep.subr.mxu0 0.0
    %2563 = vmatpush1.msra.mxu0 0.0
    %2564 = vmatprep.subr.mxu0 0.0
    %2565 = vmatpush1.msra.mxu0 0.0
    %2566 = vmatprep.subr.mxu0 0.0
    %2567 = vmatpush1.msra.mxu0 0.0
    %2568 = vmatprep.subr.mxu0 0.0
    %2569 = vmatpush1.msra.mxu0 0.0
    %2570 = vmatprep.subr.mxu0 0.0
    %2571 = vmatpush1.msra.mxu0 0.0
    %2572 = vmatprep.subr.mxu0 0.0
    %2573 = vmatpush1.msra.mxu0 0.0
    %2574 = vmatprep.subr.mxu0 0.0
    %2575 = vmatpush1.msra.mxu0 0.0
    %2576 = vmatprep.mubr.f32.mxu0 0.0
    %2577 = vmatmul.mubr.f32.gmra.mrb[0].mxu0 %v2438
    %v2578 = vpop.f32.mrb[0].mxu0
    %v2579 = vadd.f32 %v1951, %v2578
    %v2580 = vpop.f32.mrb[0].mxu0
    %v2581 = vadd.f32 %v1955, %v2580
    %2582 = vdwg.mxu0
    %2583 = vmatprep.subr.mxu0 %v1847
    %2584 = vmatpush1.msra.mxu0 %v1846
    %2585 = vmatprep.subr.mxu0 %v1853
    %2586 = vmatpush1.msra.mxu0 %v1852
    %2587 = vmatprep.subr.mxu0 %v1859
    %2588 = vmatpush1.msra.mxu0 %v1858
    %2589 = vmatprep.subr.mxu0 %v1865
    %2590 = vmatpush1.msra.mxu0 %v1864
    %2591 = vmatprep.subr.mxu0 %v1871
    %2592 = vmatpush1.msra.mxu0 %v1870
    %2593 = vmatprep.subr.mxu0 %v1877
    %2594 = vmatpush1.msra.mxu0 %v1876
    %2595 = vmatprep.subr.mxu0 %v1883
    %2596 = vmatpush1.msra.mxu0 %v1882
    %2597 = vmatprep.subr.mxu0 %v1889
    %2598 = vmatpush1.msra.mxu0 %v1888
    %2599 = vmatprep.subr.mxu0 %v1895
    %2600 = vmatpush1.msra.mxu0 %v1894
    %2601 = vmatprep.subr.mxu0 %v1901
    %2602 = vmatpush1.msra.mxu0 %v1900
    %2603 = vmatprep.subr.mxu0 %v1907
    %2604 = vmatpush1.msra.mxu0 %v1906
    %2605 = vmatprep.subr.mxu0 %v1913
    %2606 = vmatpush1.msra.mxu0 %v1912
    %2607 = vmatprep.subr.mxu0 %v1919
    %2608 = vmatpush1.msra.mxu0 %v1918
    %2609 = vmatprep.subr.mxu0 %v1925
    %2610 = vmatpush1.msra.mxu0 %v1924
    %2611 = vmatprep.subr.mxu0 %v1931
    %2612 = vmatpush1.msra.mxu0 %v1930
    %2613 = vmatprep.subr.mxu0 %v1937
    %2614 = vmatpush1.msra.mxu0 %v1936
    %2615 = vmatprep.subr.mxu0 0.0
    %2616 = vmatpush1.msra.mxu0 0.0
    %2617 = vmatprep.subr.mxu0 0.0
    %2618 = vmatpush1.msra.mxu0 0.0
    %2619 = vmatprep.subr.mxu0 0.0
    %2620 = vmatpush1.msra.mxu0 0.0
    %2621 = vmatprep.subr.mxu0 0.0
    %2622 = vmatpush1.msra.mxu0 0.0
    %2623 = vmatprep.subr.mxu0 0.0
    %2624 = vmatpush1.msra.mxu0 0.0
    %2625 = vmatprep.subr.mxu0 0.0
    %2626 = vmatpush1.msra.mxu0 0.0
    %2627 = vmatprep.subr.mxu0 0.0
    %2628 = vmatpush1.msra.mxu0 0.0
    %2629 = vmatprep.subr.mxu0 0.0
    %2630 = vmatpush1.msra.mxu0 0.0
    %2631 = vmatprep.subr.mxu0 0.0
    %2632 = vmatpush1.msra.mxu0 0.0
    %2633 = vmatprep.subr.mxu0 0.0
    %2634 = vmatpush1.msra.mxu0 0.0
    %2635 = vmatprep.subr.mxu0 0.0
    %2636 = vmatpush1.msra.mxu0 0.0
    %2637 = vmatprep.subr.mxu0 0.0
    %2638 = vmatpush1.msra.mxu0 0.0
    %2639 = vmatprep.subr.mxu0 0.0
    %2640 = vmatpush1.msra.mxu0 0.0
    %2641 = vmatprep.subr.mxu0 0.0
    %2642 = vmatpush1.msra.mxu0 0.0
    %2643 = vmatprep.subr.mxu0 0.0
    %2644 = vmatpush1.msra.mxu0 0.0
    %2645 = vmatprep.subr.mxu0 0.0
    %2646 = vmatpush1.msra.mxu0 0.0
    %2647 = vmatprep.mubr.f32.mxu0 0.0
    %2648 = vmatmul.mubr.f32.gmra.mrb[0].mxu0 %v2438
    %v2649 = vpop.f32.mrb[0].mxu0
    %v2650 = vadd.f32 %v1959, %v2649
    %v2651 = vpop.f32.mrb[0].mxu0
    %v2652 = vadd.f32 %v1963, %v2651
    %2653 = vdwg.mxu0
    %v2654 = vadd.f32 %v2508, %v2581
    %v2655 = vxor.u32 %v2654, 2147483648
    %v2656 = vmul.f32 %v2655, 1.442695
    %v2657 = vpow.pop %v2656
    %v2658 = vadd.f32 %v2657, 1.0
    %v2659 = vrcp.pop %v2658
    %v2660 = vmul.f32 1.0, %v2659
    %v2661 = vadd.f32 %v2510, %v2650
    %v2662 = vxor.u32 %v2661, 2147483648
    %v2663 = vmul.f32 %v2662, 1.442695
    %v2664 = vpow.pop %v2663
    %v2665 = vadd.f32 %v2664, 1.0
    %v2666 = vrcp.pop %v2665
    %v2667 = vmul.f32 1.0, %v2666
    %v2668 = vmul.f32 %v2660, %v2652
    %v2669 = vadd.f32 %v2579, %v2668
    %v2670 = vtanh.pop %v2669
    %v2671 = vsub.f32 1.0, %v2667
    %v2672 = vmul.f32 %v2671, %v2670
    %v2673 = vmul.f32 %v2667, %v2438
    %v2674 = vadd.f32 %v2672, %v2673
    %s2675 = scalar_lea.vmem [#allocation5], 16
    %2676 = vst [vmem:[%s2675] sm:$0xff] %v2674
    %2677 = vmatprep.subr.mxu0 %v1843
    %2678 = vmatpush1.msra.mxu0 %v1842
    %2679 = vmatprep.subr.mxu0 %v1849
    %2680 = vmatpush1.msra.mxu0 %v1848
    %2681 = vmatprep.subr.mxu0 %v1855
    %2682 = vmatpush1.msra.mxu0 %v1854
    %2683 = vmatprep.subr.mxu0 %v1861
    %2684 = vmatpush1.msra.mxu0 %v1860
    %2685 = vmatprep.subr.mxu0 %v1867
    %2686 = vmatpush1.msra.mxu0 %v1866
    %2687 = vmatprep.subr.mxu0 %v1873
    %2688 = vmatpush1.msra.mxu0 %v1872
    %2689 = vmatprep.subr.mxu0 %v1879
    %2690 = vmatpush1.msra.mxu0 %v1878
    %2691 = vmatprep.subr.mxu0 %v1885
    %2692 = vmatpush1.msra.mxu0 %v1884
    %2693 = vmatprep.subr.mxu0 %v1891
    %2694 = vmatpush1.msra.mxu0 %v1890
    %2695 = vmatprep.subr.mxu0 %v1897
    %2696 = vmatpush1.msra.mxu0 %v1896
    %2697 = vmatprep.subr.mxu0 %v1903
    %2698 = vmatpush1.msra.mxu0 %v1902
    %2699 = vmatprep.subr.mxu0 %v1909
    %2700 = vmatpush1.msra.mxu0 %v1908
    %2701 = vmatprep.subr.mxu0 %v1915
    %2702 = vmatpush1.msra.mxu0 %v1914
    %2703 = vmatprep.subr.mxu0 %v1921
    %2704 = vmatpush1.msra.mxu0 %v1920
    %2705 = vmatprep.subr.mxu0 %v1927
    %2706 = vmatpush1.msra.mxu0 %v1926
    %2707 = vmatprep.subr.mxu0 %v1933
    %2708 = vmatpush1.msra.mxu0 %v1932
    %2709 = vmatprep.subr.mxu0 0.0
    %2710 = vmatpush1.msra.mxu0 0.0
    %2711 = vmatprep.subr.mxu0 0.0
    %2712 = vmatpush1.msra.mxu0 0.0
    %2713 = vmatprep.subr.mxu0 0.0
    %2714 = vmatpush1.msra.mxu0 0.0
    %2715 = vmatprep.subr.mxu0 0.0
    %2716 = vmatpush1.msra.mxu0 0.0
    %2717 = vmatprep.subr.mxu0 0.0
    %2718 = vmatpush1.msra.mxu0 0.0
    %2719 = vmatprep.subr.mxu0 0.0
    %2720 = vmatpush1.msra.mxu0 0.0
    %2721 = vmatprep.subr.mxu0 0.0
    %2722 = vmatpush1.msra.mxu0 0.0
    %2723 = vmatprep.subr.mxu0 0.0
    %2724 = vmatpush1.msra.mxu0 0.0
    %2725 = vmatprep.subr.mxu0 0.0
    %2726 = vmatpush1.msra.mxu0 0.0
    %2727 = vmatprep.subr.mxu0 0.0
    %2728 = vmatpush1.msra.mxu0 0.0
    %2729 = vmatprep.subr.mxu0 0.0
    %2730 = vmatpush1.msra.mxu0 0.0
    %2731 = vmatprep.subr.mxu0 0.0
    %2732 = vmatpush1.msra.mxu0 0.0
    %2733 = vmatprep.subr.mxu0 0.0
    %2734 = vmatpush1.msra.mxu0 0.0
    %2735 = vmatprep.subr.mxu0 0.0
    %2736 = vmatpush1.msra.mxu0 0.0
    %2737 = vmatprep.subr.mxu0 0.0
    %2738 = vmatpush1.msra.mxu0 0.0
    %2739 = vmatprep.subr.mxu0 0.0
    %2740 = vmatpush1.msra.mxu0 0.0
    %2741 = vmatprep.mubr.f32.mxu0 0.0
    %2742 = vmatmul.mubr.f32.gmra.mrb[0].mxu0 %v2674
    %v2743 = vpop.f32.mrb[0].mxu0
    %v2744 = vadd.f32 %v1943, %v2743
    %v2745 = vpop.f32.mrb[0].mxu0
    %v2746 = vadd.f32 %v1947, %v2745
    %2747 = vdwg.mxu0
    %2748 = vmatprep.subr.mxu0 %v1845
    %2749 = vmatpush1.msra.mxu0 %v1844
    %2750 = vmatprep.subr.mxu0 %v1851
    %2751 = vmatpush1.msra.mxu0 %v1850
    %2752 = vmatprep.subr.mxu0 %v1857
    %2753 = vmatpush1.msra.mxu0 %v1856
    %2754 = vmatprep.subr.mxu0 %v1863
    %2755 = vmatpush1.msra.mxu0 %v1862
    %2756 = vmatprep.subr.mxu0 %v1869
    %2757 = vmatpush1.msra.mxu0 %v1868
    %2758 = vmatprep.subr.mxu0 %v1875
    %2759 = vmatpush1.msra.mxu0 %v1874
    %2760 = vmatprep.subr.mxu0 %v1881
    %2761 = vmatpush1.msra.mxu0 %v1880
    %2762 = vmatprep.subr.mxu0 %v1887
    %2763 = vmatpush1.msra.mxu0 %v1886
    %2764 = vmatprep.subr.mxu0 %v1893
    %2765 = vmatpush1.msra.mxu0 %v1892
    %2766 = vmatprep.subr.mxu0 %v1899
    %2767 = vmatpush1.msra.mxu0 %v1898
    %2768 = vmatprep.subr.mxu0 %v1905
    %2769 = vmatpush1.msra.mxu0 %v1904
    %2770 = vmatprep.subr.mxu0 %v1911
    %2771 = vmatpush1.msra.mxu0 %v1910
    %2772 = vmatprep.subr.mxu0 %v1917
    %2773 = vmatpush1.msra.mxu0 %v1916
    %2774 = vmatprep.subr.mxu0 %v1923
    %2775 = vmatpush1.msra.mxu0 %v1922
    %2776 = vmatprep.subr.mxu0 %v1929
    %2777 = vmatpush1.msra.mxu0 %v1928
    %2778 = vmatprep.subr.mxu0 %v1935
    %2779 = vmatpush1.msra.mxu0 %v1934
    %2780 = vmatprep.subr.mxu0 0.0
    %2781 = vmatpush1.msra.mxu0 0.0
    %2782 = vmatprep.subr.mxu0 0.0
    %2783 = vmatpush1.msra.mxu0 0.0
    %2784 = vmatprep.subr.mxu0 0.0
    %2785 = vmatpush1.msra.mxu0 0.0
    %2786 = vmatprep.subr.mxu0 0.0
    %2787 = vmatpush1.msra.mxu0 0.0
    %2788 = vmatprep.subr.mxu0 0.0
    %2789 = vmatpush1.msra.mxu0 0.0
    %2790 = vmatprep.subr.mxu0 0.0
    %2791 = vmatpush1.msra.mxu0 0.0
    %2792 = vmatprep.subr.mxu0 0.0
    %2793 = vmatpush1.msra.mxu0 0.0
    %2794 = vmatprep.subr.mxu0 0.0
    %2795 = vmatpush1.msra.mxu0 0.0
    %2796 = vmatprep.subr.mxu0 0.0
    %2797 = vmatpush1.msra.mxu0 0.0
    %2798 = vmatprep.subr.mxu0 0.0
    %2799 = vmatpush1.msra.mxu0 0.0
    %2800 = vmatprep.subr.mxu0 0.0
    %2801 = vmatpush1.msra.mxu0 0.0
    %2802 = vmatprep.subr.mxu0 0.0
    %2803 = vmatpush1.msra.mxu0 0.0
    %2804 = vmatprep.subr.mxu0 0.0
    %2805 = vmatpush1.msra.mxu0 0.0
    %2806 = vmatprep.subr.mxu0 0.0
    %2807 = vmatpush1.msra.mxu0 0.0
    %2808 = vmatprep.subr.mxu0 0.0
    %2809 = vmatpush1.msra.mxu0 0.0
    %2810 = vmatprep.subr.mxu0 0.0
    %2811 = vmatpush1.msra.mxu0 0.0
    %2812 = vmatprep.mubr.f32.mxu0 0.0
    %2813 = vmatmul.mubr.f32.gmra.mrb[0].mxu0 %v2674
    %v2814 = vpop.f32.mrb[0].mxu0
    %v2815 = vadd.f32 %v1951, %v2814
    %v2816 = vpop.f32.mrb[0].mxu0
    %v2817 = vadd.f32 %v1955, %v2816
    %2818 = vdwg.mxu0
    %2819 = vmatprep.subr.mxu0 %v1847
    %2820 = vmatpush1.msra.mxu0 %v1846
    %2821 = vmatprep.subr.mxu0 %v1853
    %2822 = vmatpush1.msra.mxu0 %v1852
    %2823 = vmatprep.subr.mxu0 %v1859
    %2824 = vmatpush1.msra.mxu0 %v1858
    %2825 = vmatprep.subr.mxu0 %v1865
    %2826 = vmatpush1.msra.mxu0 %v1864
    %2827 = vmatprep.subr.mxu0 %v1871
    %2828 = vmatpush1.msra.mxu0 %v1870
    %2829 = vmatprep.subr.mxu0 %v1877
    %2830 = vmatpush1.msra.mxu0 %v1876
    %2831 = vmatprep.subr.mxu0 %v1883
    %2832 = vmatpush1.msra.mxu0 %v1882
    %2833 = vmatprep.subr.mxu0 %v1889
    %2834 = vmatpush1.msra.mxu0 %v1888
    %2835 = vmatprep.subr.mxu0 %v1895
    %2836 = vmatpush1.msra.mxu0 %v1894
    %2837 = vmatprep.subr.mxu0 %v1901
    %2838 = vmatpush1.msra.mxu0 %v1900
    %2839 = vmatprep.subr.mxu0 %v1907
    %2840 = vmatpush1.msra.mxu0 %v1906
    %2841 = vmatprep.subr.mxu0 %v1913
    %2842 = vmatpush1.msra.mxu0 %v1912
    %2843 = vmatprep.subr.mxu0 %v1919
    %2844 = vmatpush1.msra.mxu0 %v1918
    %2845 = vmatprep.subr.mxu0 %v1925
    %2846 = vmatpush1.msra.mxu0 %v1924
    %2847 = vmatprep.subr.mxu0 %v1931
    %2848 = vmatpush1.msra.mxu0 %v1930
    %2849 = vmatprep.subr.mxu0 %v1937
    %2850 = vmatpush1.msra.mxu0 %v1936
    %2851 = vmatprep.subr.mxu0 0.0
    %2852 = vmatpush1.msra.mxu0 0.0
    %2853 = vmatprep.subr.mxu0 0.0
    %2854 = vmatpush1.msra.mxu0 0.0
    %2855 = vmatprep.subr.mxu0 0.0
    %2856 = vmatpush1.msra.mxu0 0.0
    %2857 = vmatprep.subr.mxu0 0.0
    %2858 = vmatpush1.msra.mxu0 0.0
    %2859 = vmatprep.subr.mxu0 0.0
    %2860 = vmatpush1.msra.mxu0 0.0
    %2861 = vmatprep.subr.mxu0 0.0
    %2862 = vmatpush1.msra.mxu0 0.0
    %2863 = vmatprep.subr.mxu0 0.0
    %2864 = vmatpush1.msra.mxu0 0.0
    %2865 = vmatprep.subr.mxu0 0.0
    %2866 = vmatpush1.msra.mxu0 0.0
    %2867 = vmatprep.subr.mxu0 0.0
    %2868 = vmatpush1.msra.mxu0 0.0
    %2869 = vmatprep.subr.mxu0 0.0
    %2870 = vmatpush1.msra.mxu0 0.0
    %2871 = vmatprep.subr.mxu0 0.0
    %2872 = vmatpush1.msra.mxu0 0.0
    %2873 = vmatprep.subr.mxu0 0.0
    %2874 = vmatpush1.msra.mxu0 0.0
    %2875 = vmatprep.subr.mxu0 0.0
    %2876 = vmatpush1.msra.mxu0 0.0
    %2877 = vmatprep.subr.mxu0 0.0
    %2878 = vmatpush1.msra.mxu0 0.0
    %2879 = vmatprep.subr.mxu0 0.0
    %2880 = vmatpush1.msra.mxu0 0.0
    %2881 = vmatprep.subr.mxu0 0.0
    %2882 = vmatpush1.msra.mxu0 0.0
    %2883 = vmatprep.mubr.f32.mxu0 0.0
    %2884 = vmatmul.mubr.f32.gmra.mrb[0].mxu0 %v2674
    %v2885 = vpop.f32.mrb[0].mxu0
    %v2886 = vadd.f32 %v1959, %v2885
    %v2887 = vpop.f32.mrb[0].mxu0
    %v2888 = vadd.f32 %v1963, %v2887
    %2889 = vdwg.mxu0
    %v2890 = vadd.f32 %v2744, %v2817
    %v2891 = vxor.u32 %v2890, 2147483648
    %v2892 = vmul.f32 %v2891, 1.442695
    %v2893 = vpow.pop %v2892
    %v2894 = vadd.f32 %v2893, 1.0
    %v2895 = vrcp.pop %v2894
    %v2896 = vmul.f32 1.0, %v2895
    %v2897 = vadd.f32 %v2746, %v2886
    %v2898 = vxor.u32 %v2897, 2147483648
    %v2899 = vmul.f32 %v2898, 1.442695
    %v2900 = vpow.pop %v2899
    %v2901 = vadd.f32 %v2900, 1.0
    %v2902 = vrcp.pop %v2901
    %v2903 = vmul.f32 1.0, %v2902
    %v2904 = vmul.f32 %v2896, %v2888
    %v2905 = vadd.f32 %v2815, %v2904
    %v2906 = vtanh.pop %v2905
    %v2907 = vsub.f32 1.0, %v2903
    %v2908 = vmul.f32 %v2907, %v2906
    %v2909 = vmul.f32 %v2903, %v2674
    %v2910 = vadd.f32 %v2908, %v2909
    %s2911 = scalar_lea.vmem [#allocation5], 24
    %2912 = vst [vmem:[%s2911] sm:$0xff] %v2910
    %2913 = vmatprep.subr.mxu0 %v1843
    %2914 = vmatpush1.msra.mxu0 %v1842
    %2915 = vmatprep.subr.mxu0 %v1849
    %2916 = vmatpush1.msra.mxu0 %v1848
    %2917 = vmatprep.subr.mxu0 %v1855
    %2918 = vmatpush1.msra.mxu0 %v1854
    %2919 = vmatprep.subr.mxu0 %v1861
    %2920 = vmatpush1.msra.mxu0 %v1860
    %2921 = vmatprep.subr.mxu0 %v1867
    %2922 = vmatpush1.msra.mxu0 %v1866
    %2923 = vmatprep.subr.mxu0 %v1873
    %2924 = vmatpush1.msra.mxu0 %v1872
    %2925 = vmatprep.subr.mxu0 %v1879
    %2926 = vmatpush1.msra.mxu0 %v1878
    %2927 = vmatprep.subr.mxu0 %v1885
    %2928 = vmatpush1.msra.mxu0 %v1884
    %2929 = vmatprep.subr.mxu0 %v1891
    %2930 = vmatpush1.msra.mxu0 %v1890
    %2931 = vmatprep.subr.mxu0 %v1897
    %2932 = vmatpush1.msra.mxu0 %v1896
    %2933 = vmatprep.subr.mxu0 %v1903
    %2934 = vmatpush1.msra.mxu0 %v1902
    %2935 = vmatprep.subr.mxu0 %v1909
    %2936 = vmatpush1.msra.mxu0 %v1908
    %2937 = vmatprep.subr.mxu0 %v1915
    %2938 = vmatpush1.msra.mxu0 %v1914
    %2939 = vmatprep.subr.mxu0 %v1921
    %2940 = vmatpush1.msra.mxu0 %v1920
    %2941 = vmatprep.subr.mxu0 %v1927
    %2942 = vmatpush1.msra.mxu0 %v1926
    %2943 = vmatprep.subr.mxu0 %v1933
    %2944 = vmatpush1.msra.mxu0 %v1932
    %2945 = vmatprep.subr.mxu0 0.0
    %2946 = vmatpush1.msra.mxu0 0.0
    %2947 = vmatprep.subr.mxu0 0.0
    %2948 = vmatpush1.msra.mxu0 0.0
    %2949 = vmatprep.subr.mxu0 0.0
    %2950 = vmatpush1.msra.mxu0 0.0
    %2951 = vmatprep.subr.mxu0 0.0
    %2952 = vmatpush1.msra.mxu0 0.0
    %2953 = vmatprep.subr.mxu0 0.0
    %2954 = vmatpush1.msra.mxu0 0.0
    %2955 = vmatprep.subr.mxu0 0.0
    %2956 = vmatpush1.msra.mxu0 0.0
    %2957 = vmatprep.subr.mxu0 0.0
    %2958 = vmatpush1.msra.mxu0 0.0
    %2959 = vmatprep.subr.mxu0 0.0
    %2960 = vmatpush1.msra.mxu0 0.0
    %2961 = vmatprep.subr.mxu0 0.0
    %2962 = vmatpush1.msra.mxu0 0.0
    %2963 = vmatprep.subr.mxu0 0.0
    %2964 = vmatpush1.msra.mxu0 0.0
    %2965 = vmatprep.subr.mxu0 0.0
    %2966 = vmatpush1.msra.mxu0 0.0
    %2967 = vmatprep.subr.mxu0 0.0
    %2968 = vmatpush1.msra.mxu0 0.0
    %2969 = vmatprep.subr.mxu0 0.0
    %2970 = vmatpush1.msra.mxu0 0.0
    %2971 = vmatprep.subr.mxu0 0.0
    %2972 = vmatpush1.msra.mxu0 0.0
    %2973 = vmatprep.subr.mxu0 0.0
    %2974 = vmatpush1.msra.mxu0 0.0
    %2975 = vmatprep.subr.mxu0 0.0
    %2976 = vmatpush1.msra.mxu0 0.0
    %2977 = vmatprep.mubr.f32.mxu0 0.0
    %2978 = vmatmul.mubr.f32.gmra.mrb[0].mxu0 %v2910
    %v2979 = vpop.f32.mrb[0].mxu0
    %v2980 = vadd.f32 %v1943, %v2979
    %v2981 = vpop.f32.mrb[0].mxu0
    %v2982 = vadd.f32 %v1947, %v2981
    %2983 = vdwg.mxu0
    %2984 = vmatprep.subr.mxu0 %v1845
    %2985 = vmatpush1.msra.mxu0 %v1844
    %2986 = vmatprep.subr.mxu0 %v1851
    %2987 = vmatpush1.msra.mxu0 %v1850
    %2988 = vmatprep.subr.mxu0 %v1857
    %2989 = vmatpush1.msra.mxu0 %v1856
    %2990 = vmatprep.subr.mxu0 %v1863
    %2991 = vmatpush1.msra.mxu0 %v1862
    %2992 = vmatprep.subr.mxu0 %v1869
    %2993 = vmatpush1.msra.mxu0 %v1868
    %2994 = vmatprep.subr.mxu0 %v1875
    %2995 = vmatpush1.msra.mxu0 %v1874
    %2996 = vmatprep.subr.mxu0 %v1881
    %2997 = vmatpush1.msra.mxu0 %v1880
    %2998 = vmatprep.subr.mxu0 %v1887
    %2999 = vmatpush1.msra.mxu0 %v1886
    %3000 = vmatprep.subr.mxu0 %v1893
    %3001 = vmatpush1.msra.mxu0 %v1892
    %3002 = vmatprep.subr.mxu0 %v1899
    %3003 = vmatpush1.msra.mxu0 %v1898
    %3004 = vmatprep.subr.mxu0 %v1905
    %3005 = vmatpush1.msra.mxu0 %v1904
    %3006 = vmatprep.subr.mxu0 %v1911
    %3007 = vmatpush1.msra.mxu0 %v1910
    %3008 = vmatprep.subr.mxu0 %v1917
    %3009 = vmatpush1.msra.mxu0 %v1916
    %3010 = vmatprep.subr.mxu0 %v1923
    %3011 = vmatpush1.msra.mxu0 %v1922
    %3012 = vmatprep.subr.mxu0 %v1929
    %3013 = vmatpush1.msra.mxu0 %v1928
    %3014 = vmatprep.subr.mxu0 %v1935
    %3015 = vmatpush1.msra.mxu0 %v1934
    %3016 = vmatprep.subr.mxu0 0.0
    %3017 = vmatpush1.msra.mxu0 0.0
    %3018 = vmatprep.subr.mxu0 0.0
    %3019 = vmatpush1.msra.mxu0 0.0
    %3020 = vmatprep.subr.mxu0 0.0
    %3021 = vmatpush1.msra.mxu0 0.0
    %3022 = vmatprep.subr.mxu0 0.0
    %3023 = vmatpush1.msra.mxu0 0.0
    %3024 = vmatprep.subr.mxu0 0.0
    %3025 = vmatpush1.msra.mxu0 0.0
    %3026 = vmatprep.subr.mxu0 0.0
    %3027 = vmatpush1.msra.mxu0 0.0
    %3028 = vmatprep.subr.mxu0 0.0
    %3029 = vmatpush1.msra.mxu0 0.0
    %3030 = vmatprep.subr.mxu0 0.0
    %3031 = vmatpush1.msra.mxu0 0.0
    %3032 = vmatprep.subr.mxu0 0.0
    %3033 = vmatpush1.msra.mxu0 0.0
    %3034 = vmatprep.subr.mxu0 0.0
    %3035 = vmatpush1.msra.mxu0 0.0
    %3036 = vmatprep.subr.mxu0 0.0
    %3037 = vmatpush1.msra.mxu0 0.0
    %3038 = vmatprep.subr.mxu0 0.0
    %3039 = vmatpush1.msra.mxu0 0.0
    %3040 = vmatprep.subr.mxu0 0.0
    %3041 = vmatpush1.msra.mxu0 0.0
    %3042 = vmatprep.subr.mxu0 0.0
    %3043 = vmatpush1.msra.mxu0 0.0
    %3044 = vmatprep.subr.mxu0 0.0
    %3045 = vmatpush1.msra.mxu0 0.0
    %3046 = vmatprep.subr.mxu0 0.0
    %3047 = vmatpush1.msra.mxu0 0.0
    %3048 = vmatprep.mubr.f32.mxu0 0.0
    %3049 = vmatmul.mubr.f32.gmra.mrb[0].mxu0 %v2910
    %v3050 = vpop.f32.mrb[0].mxu0
    %v3051 = vadd.f32 %v1951, %v3050
    %v3052 = vpop.f32.mrb[0].mxu0
    %v3053 = vadd.f32 %v1955, %v3052
    %3054 = vdwg.mxu0
    %3055 = vmatprep.subr.mxu0 %v1847
    %3056 = vmatpush1.msra.mxu0 %v1846
    %3057 = vmatprep.subr.mxu0 %v1853
    %3058 = vmatpush1.msra.mxu0 %v1852
    %3059 = vmatprep.subr.mxu0 %v1859
    %3060 = vmatpush1.msra.mxu0 %v1858
    %3061 = vmatprep.subr.mxu0 %v1865
    %3062 = vmatpush1.msra.mxu0 %v1864
    %3063 = vmatprep.subr.mxu0 %v1871
    %3064 = vmatpush1.msra.mxu0 %v1870
    %3065 = vmatprep.subr.mxu0 %v1877
    %3066 = vmatpush1.msra.mxu0 %v1876
    %3067 = vmatprep.subr.mxu0 %v1883
    %3068 = vmatpush1.msra.mxu0 %v1882
    %3069 = vmatprep.subr.mxu0 %v1889
    %3070 = vmatpush1.msra.mxu0 %v1888
    %3071 = vmatprep.subr.mxu0 %v1895
    %3072 = vmatpush1.msra.mxu0 %v1894
    %3073 = vmatprep.subr.mxu0 %v1901
    %3074 = vmatpush1.msra.mxu0 %v1900
    %3075 = vmatprep.subr.mxu0 %v1907
    %3076 = vmatpush1.msra.mxu0 %v1906
    %3077 = vmatprep.subr.mxu0 %v1913
    %3078 = vmatpush1.msra.mxu0 %v1912
    %3079 = vmatprep.subr.mxu0 %v1919
    %3080 = vmatpush1.msra.mxu0 %v1918
    %3081 = vmatprep.subr.mxu0 %v1925
    %3082 = vmatpush1.msra.mxu0 %v1924
    %3083 = vmatprep.subr.mxu0 %v1931
    %3084 = vmatpush1.msra.mxu0 %v1930
    %3085 = vmatprep.subr.mxu0 %v1937
    %3086 = vmatpush1.msra.mxu0 %v1936
    %3087 = vmatprep.subr.mxu0 0.0
    %3088 = vmatpush1.msra.mxu0 0.0
    %3089 = vmatprep.subr.mxu0 0.0
    %3090 = vmatpush1.msra.mxu0 0.0
    %3091 = vmatprep.subr.mxu0 0.0
    %3092 = vmatpush1.msra.mxu0 0.0
    %3093 = vmatprep.subr.mxu0 0.0
    %3094 = vmatpush1.msra.mxu0 0.0
    %3095 = vmatprep.subr.mxu0 0.0
    %3096 = vmatpush1.msra.mxu0 0.0
    %3097 = vmatprep.subr.mxu0 0.0
    %3098 = vmatpush1.msra.mxu0 0.0
    %3099 = vmatprep.subr.mxu0 0.0
    %3100 = vmatpush1.msra.mxu0 0.0
    %3101 = vmatprep.subr.mxu0 0.0
    %3102 = vmatpush1.msra.mxu0 0.0
    %3103 = vmatprep.subr.mxu0 0.0
    %3104 = vmatpush1.msra.mxu0 0.0
    %3105 = vmatprep.subr.mxu0 0.0
    %3106 = vmatpush1.msra.mxu0 0.0
    %3107 = vmatprep.subr.mxu0 0.0
    %3108 = vmatpush1.msra.mxu0 0.0
    %3109 = vmatprep.subr.mxu0 0.0
    %3110 = vmatpush1.msra.mxu0 0.0
    %3111 = vmatprep.subr.mxu0 0.0
    %3112 = vmatpush1.msra.mxu0 0.0
    %3113 = vmatprep.subr.mxu0 0.0
    %3114 = vmatpush1.msra.mxu0 0.0
    %3115 = vmatprep.subr.mxu0 0.0
    %3116 = vmatpush1.msra.mxu0 0.0
    %3117 = vmatprep.subr.mxu0 0.0
    %3118 = vmatpush1.msra.mxu0 0.0
    %3119 = vmatprep.mubr.f32.mxu0 0.0
    %3120 = vmatmul.mubr.f32.gmra.mrb[0].mxu0 %v2910
    %v3121 = vpop.f32.mrb[0].mxu0
    %v3122 = vadd.f32 %v1959, %v3121
    %v3123 = vpop.f32.mrb[0].mxu0
    %v3124 = vadd.f32 %v1963, %v3123
    %3125 = vdwg.mxu0
    %v3126 = vadd.f32 %v2980, %v3053
    %v3127 = vxor.u32 %v3126, 2147483648
    %v3128 = vmul.f32 %v3127, 1.442695
    %v3129 = vpow.pop %v3128
    %v3130 = vadd.f32 %v3129, 1.0
    %v3131 = vrcp.pop %v3130
    %v3132 = vmul.f32 1.0, %v3131
    %v3133 = vadd.f32 %v2982, %v3122
    %v3134 = vxor.u32 %v3133, 2147483648
    %v3135 = vmul.f32 %v3134, 1.442695
    %v3136 = vpow.pop %v3135
    %v3137 = vadd.f32 %v3136, 1.0
    %v3138 = vrcp.pop %v3137
    %v3139 = vmul.f32 1.0, %v3138
    %v3140 = vmul.f32 %v3132, %v3124
    %v3141 = vadd.f32 %v3051, %v3140
    %v3142 = vtanh.pop %v3141
    %v3143 = vsub.f32 1.0, %v3139
    %v3144 = vmul.f32 %v3143, %v3142
    %v3145 = vmul.f32 %v3139, %v2910
    %v3146 = vadd.f32 %v3144, %v3145
    %s3147 = scalar_lea.vmem [#allocation5], 32
    %3148 = vst [vmem:[%s3147] sm:$0xff] %v3146
    %3149 = vmatprep.subr.mxu0 %v1843
    %3150 = vmatpush1.msra.mxu0 %v1842
    %3151 = vmatprep.subr.mxu0 %v1849
    %3152 = vmatpush1.msra.mxu0 %v1848
    %3153 = vmatprep.subr.mxu0 %v1855
    %3154 = vmatpush1.msra.mxu0 %v1854
    %3155 = vmatprep.subr.mxu0 %v1861
    %3156 = vmatpush1.msra.mxu0 %v1860
    %3157 = vmatprep.subr.mxu0 %v1867
    %3158 = vmatpush1.msra.mxu0 %v1866
    %3159 = vmatprep.subr.mxu0 %v1873
    %3160 = vmatpush1.msra.mxu0 %v1872
    %3161 = vmatprep.subr.mxu0 %v1879
    %3162 = vmatpush1.msra.mxu0 %v1878
    %3163 = vmatprep.subr.mxu0 %v1885
    %3164 = vmatpush1.msra.mxu0 %v1884
    %3165 = vmatprep.subr.mxu0 %v1891
    %3166 = vmatpush1.msra.mxu0 %v1890
    %3167 = vmatprep.subr.mxu0 %v1897
    %3168 = vmatpush1.msra.mxu0 %v1896
    %3169 = vmatprep.subr.mxu0 %v1903
    %3170 = vmatpush1.msra.mxu0 %v1902
    %3171 = vmatprep.subr.mxu0 %v1909
    %3172 = vmatpush1.msra.mxu0 %v1908
    %3173 = vmatprep.subr.mxu0 %v1915
    %3174 = vmatpush1.msra.mxu0 %v1914
    %3175 = vmatprep.subr.mxu0 %v1921
    %3176 = vmatpush1.msra.mxu0 %v1920
    %3177 = vmatprep.subr.mxu0 %v1927
    %3178 = vmatpush1.msra.mxu0 %v1926
    %3179 = vmatprep.subr.mxu0 %v1933
    %3180 = vmatpush1.msra.mxu0 %v1932
    %3181 = vmatprep.subr.mxu0 0.0
    %3182 = vmatpush1.msra.mxu0 0.0
    %3183 = vmatprep.subr.mxu0 0.0
    %3184 = vmatpush1.msra.mxu0 0.0
    %3185 = vmatprep.subr.mxu0 0.0
    %3186 = vmatpush1.msra.mxu0 0.0
    %3187 = vmatprep.subr.mxu0 0.0
    %3188 = vmatpush1.msra.mxu0 0.0
    %3189 = vmatprep.subr.mxu0 0.0
    %3190 = vmatpush1.msra.mxu0 0.0
    %3191 = vmatprep.subr.mxu0 0.0
    %3192 = vmatpush1.msra.mxu0 0.0
    %3193 = vmatprep.subr.mxu0 0.0
    %3194 = vmatpush1.msra.mxu0 0.0
    %3195 = vmatprep.subr.mxu0 0.0
    %3196 = vmatpush1.msra.mxu0 0.0
    %3197 = vmatprep.subr.mxu0 0.0
    %3198 = vmatpush1.msra.mxu0 0.0
    %3199 = vmatprep.subr.mxu0 0.0
    %3200 = vmatpush1.msra.mxu0 0.0
    %3201 = vmatprep.subr.mxu0 0.0
    %3202 = vmatpush1.msra.mxu0 0.0
    %3203 = vmatprep.subr.mxu0 0.0
    %3204 = vmatpush1.msra.mxu0 0.0
    %3205 = vmatprep.subr.mxu0 0.0
    %3206 = vmatpush1.msra.mxu0 0.0
    %3207 = vmatprep.subr.mxu0 0.0
    %3208 = vmatpush1.msra.mxu0 0.0
    %3209 = vmatprep.subr.mxu0 0.0
    %3210 = vmatpush1.msra.mxu0 0.0
    %3211 = vmatprep.subr.mxu0 0.0
    %3212 = vmatpush1.msra.mxu0 0.0
    %3213 = vmatprep.mubr.f32.mxu0 0.0
    %3214 = vmatmul.mubr.f32.gmra.mrb[0].mxu0 %v3146
    %v3215 = vpop.f32.mrb[0].mxu0
    %v3216 = vadd.f32 %v1943, %v3215
    %v3217 = vpop.f32.mrb[0].mxu0
    %v3218 = vadd.f32 %v1947, %v3217
    %3219 = vdwg.mxu0
    %3220 = vmatprep.subr.mxu0 %v1845
    %3221 = vmatpush1.msra.mxu0 %v1844
    %3222 = vmatprep.subr.mxu0 %v1851
    %3223 = vmatpush1.msra.mxu0 %v1850
    %3224 = vmatprep.subr.mxu0 %v1857
    %3225 = vmatpush1.msra.mxu0 %v1856
    %3226 = vmatprep.subr.mxu0 %v1863
    %3227 = vmatpush1.msra.mxu0 %v1862
    %3228 = vmatprep.subr.mxu0 %v1869
    %3229 = vmatpush1.msra.mxu0 %v1868
    %3230 = vmatprep.subr.mxu0 %v1875
    %3231 = vmatpush1.msra.mxu0 %v1874
    %3232 = vmatprep.subr.mxu0 %v1881
    %3233 = vmatpush1.msra.mxu0 %v1880
    %3234 = vmatprep.subr.mxu0 %v1887
    %3235 = vmatpush1.msra.mxu0 %v1886
    %3236 = vmatprep.subr.mxu0 %v1893
    %3237 = vmatpush1.msra.mxu0 %v1892
    %3238 = vmatprep.subr.mxu0 %v1899
    %3239 = vmatpush1.msra.mxu0 %v1898
    %3240 = vmatprep.subr.mxu0 %v1905
    %3241 = vmatpush1.msra.mxu0 %v1904
    %3242 = vmatprep.subr.mxu0 %v1911
    %3243 = vmatpush1.msra.mxu0 %v1910
    %3244 = vmatprep.subr.mxu0 %v1917
    %3245 = vmatpush1.msra.mxu0 %v1916
    %3246 = vmatprep.subr.mxu0 %v1923
    %3247 = vmatpush1.msra.mxu0 %v1922
    %3248 = vmatprep.subr.mxu0 %v1929
    %3249 = vmatpush1.msra.mxu0 %v1928
    %3250 = vmatprep.subr.mxu0 %v1935
    %3251 = vmatpush1.msra.mxu0 %v1934
    %3252 = vmatprep.subr.mxu0 0.0
    %3253 = vmatpush1.msra.mxu0 0.0
    %3254 = vmatprep.subr.mxu0 0.0
    %3255 = vmatpush1.msra.mxu0 0.0
    %3256 = vmatprep.subr.mxu0 0.0
    %3257 = vmatpush1.msra.mxu0 0.0
    %3258 = vmatprep.subr.mxu0 0.0
    %3259 = vmatpush1.msra.mxu0 0.0
    %3260 = vmatprep.subr.mxu0 0.0
    %3261 = vmatpush1.msra.mxu0 0.0
    %3262 = vmatprep.subr.mxu0 0.0
    %3263 = vmatpush1.msra.mxu0 0.0
    %3264 = vmatprep.subr.mxu0 0.0
    %3265 = vmatpush1.msra.mxu0 0.0
    %3266 = vmatprep.subr.mxu0 0.0
    %3267 = vmatpush1.msra.mxu0 0.0
    %3268 = vmatprep.subr.mxu0 0.0
    %3269 = vmatpush1.msra.mxu0 0.0
    %3270 = vmatprep.subr.mxu0 0.0
    %3271 = vmatpush1.msra.mxu0 0.0
    %3272 = vmatprep.subr.mxu0 0.0
    %3273 = vmatpush1.msra.mxu0 0.0
    %3274 = vmatprep.subr.mxu0 0.0
    %3275 = vmatpush1.msra.mxu0 0.0
    %3276 = vmatprep.subr.mxu0 0.0
    %3277 = vmatpush1.msra.mxu0 0.0
    %3278 = vmatprep.subr.mxu0 0.0
    %3279 = vmatpush1.msra.mxu0 0.0
    %3280 = vmatprep.subr.mxu0 0.0
    %3281 = vmatpush1.msra.mxu0 0.0
    %3282 = vmatprep.subr.mxu0 0.0
    %3283 = vmatpush1.msra.mxu0 0.0
    %3284 = vmatprep.mubr.f32.mxu0 0.0
    %3285 = vmatmul.mubr.f32.gmra.mrb[0].mxu0 %v3146
    %v3286 = vpop.f32.mrb[0].mxu0
    %v3287 = vadd.f32 %v1951, %v3286
    %v3288 = vpop.f32.mrb[0].mxu0
    %v3289 = vadd.f32 %v1955, %v3288
    %3290 = vdwg.mxu0
    %3291 = vmatprep.subr.mxu0 %v1847
    %3292 = vmatpush1.msra.mxu0 %v1846
    %3293 = vmatprep.subr.mxu0 %v1853
    %3294 = vmatpush1.msra.mxu0 %v1852
    %3295 = vmatprep.subr.mxu0 %v1859
    %3296 = vmatpush1.msra.mxu0 %v1858
    %3297 = vmatprep.subr.mxu0 %v1865
    %3298 = vmatpush1.msra.mxu0 %v1864
    %3299 = vmatprep.subr.mxu0 %v1871
    %3300 = vmatpush1.msra.mxu0 %v1870
    %3301 = vmatprep.subr.mxu0 %v1877
    %3302 = vmatpush1.msra.mxu0 %v1876
    %3303 = vmatprep.subr.mxu0 %v1883
    %3304 = vmatpush1.msra.mxu0 %v1882
    %3305 = vmatprep.subr.mxu0 %v1889
    %3306 = vmatpush1.msra.mxu0 %v1888
    %3307 = vmatprep.subr.mxu0 %v1895
    %3308 = vmatpush1.msra.mxu0 %v1894
    %3309 = vmatprep.subr.mxu0 %v1901
    %3310 = vmatpush1.msra.mxu0 %v1900
    %3311 = vmatprep.subr.mxu0 %v1907
    %3312 = vmatpush1.msra.mxu0 %v1906
    %3313 = vmatprep.subr.mxu0 %v1913
    %3314 = vmatpush1.msra.mxu0 %v1912
    %3315 = vmatprep.subr.mxu0 %v1919
    %3316 = vmatpush1.msra.mxu0 %v1918
    %3317 = vmatprep.subr.mxu0 %v1925
    %3318 = vmatpush1.msra.mxu0 %v1924
    %3319 = vmatprep.subr.mxu0 %v1931
    %3320 = vmatpush1.msra.mxu0 %v1930
    %3321 = vmatprep.subr.mxu0 %v1937
    %3322 = vmatpush1.msra.mxu0 %v1936
    %3323 = vmatprep.subr.mxu0 0.0
    %3324 = vmatpush1.msra.mxu0 0.0
    %3325 = vmatprep.subr.mxu0 0.0
    %3326 = vmatpush1.msra.mxu0 0.0
    %3327 = vmatprep.subr.mxu0 0.0
    %3328 = vmatpush1.msra.mxu0 0.0
    %3329 = vmatprep.subr.mxu0 0.0
    %3330 = vmatpush1.msra.mxu0 0.0
    %3331 = vmatprep.subr.mxu0 0.0
    %3332 = vmatpush1.msra.mxu0 0.0
    %3333 = vmatprep.subr.mxu0 0.0
    %3334 = vmatpush1.msra.mxu0 0.0
    %3335 = vmatprep.subr.mxu0 0.0
    %3336 = vmatpush1.msra.mxu0 0.0
    %3337 = vmatprep.subr.mxu0 0.0
    %3338 = vmatpush1.msra.mxu0 0.0
    %3339 = vmatprep.subr.mxu0 0.0
    %3340 = vmatpush1.msra.mxu0 0.0
    %3341 = vmatprep.subr.mxu0 0.0
    %3342 = vmatpush1.msra.mxu0 0.0
    %3343 = vmatprep.subr.mxu0 0.0
    %3344 = vmatpush1.msra.mxu0 0.0
    %3345 = vmatprep.subr.mxu0 0.0
    %3346 = vmatpush1.msra.mxu0 0.0
    %3347 = vmatprep.subr.mxu0 0.0
    %3348 = vmatpush1.msra.mxu0 0.0
    %3349 = vmatprep.subr.mxu0 0.0
    %3350 = vmatpush1.msra.mxu0 0.0
    %3351 = vmatprep.subr.mxu0 0.0
    %3352 = vmatpush1.msra.mxu0 0.0
    %3353 = vmatprep.subr.mxu0 0.0
    %3354 = vmatpush1.msra.mxu0 0.0
    %3355 = vmatprep.mubr.f32.mxu0 0.0
    %3356 = vmatmul.mubr.f32.gmra.mrb[0].mxu0 %v3146
    %v3357 = vpop.f32.mrb[0].mxu0
    %v3358 = vadd.f32 %v1959, %v3357
    %v3359 = vpop.f32.mrb[0].mxu0
    %v3360 = vadd.f32 %v1963, %v3359
    %3361 = vdwg.mxu0
    %v3362 = vadd.f32 %v3216, %v3289
    %v3363 = vxor.u32 %v3362, 2147483648
    %v3364 = vmul.f32 %v3363, 1.442695
    %v3365 = vpow.pop %v3364
    %v3366 = vadd.f32 %v3365, 1.0
    %v3367 = vrcp.pop %v3366
    %v3368 = vmul.f32 1.0, %v3367
    %v3369 = vadd.f32 %v3218, %v3358
    %v3370 = vxor.u32 %v3369, 2147483648
    %v3371 = vmul.f32 %v3370, 1.442695
    %v3372 = vpow.pop %v3371
    %v3373 = vadd.f32 %v3372, 1.0
    %v3374 = vrcp.pop %v3373
    %v3375 = vmul.f32 1.0, %v3374
    %v3376 = vmul.f32 %v3368, %v3360
    %v3377 = vadd.f32 %v3287, %v3376
    %v3378 = vtanh.pop %v3377
    %v3379 = vsub.f32 1.0, %v3375
    %v3380 = vmul.f32 %v3379, %v3378
    %v3381 = vmul.f32 %v3375, %v3146
    %v3382 = vadd.f32 %v3380, %v3381
    %s3383 = scalar_lea.vmem [#allocation5], 40
    %3384 = vst [vmem:[%s3383] sm:$0xff] %v3382
    %3385 = vmatprep.subr.mxu0 %v1843
    %3386 = vmatpush1.msra.mxu0 %v1842
    %3387 = vmatprep.subr.mxu0 %v1849
    %3388 = vmatpush1.msra.mxu0 %v1848
    %3389 = vmatprep.subr.mxu0 %v1855
    %3390 = vmatpush1.msra.mxu0 %v1854
    %3391 = vmatprep.subr.mxu0 %v1861
    %3392 = vmatpush1.msra.mxu0 %v1860
    %3393 = vmatprep.subr.mxu0 %v1867
    %3394 = vmatpush1.msra.mxu0 %v1866
    %3395 = vmatprep.subr.mxu0 %v1873
    %3396 = vmatpush1.msra.mxu0 %v1872
    %3397 = vmatprep.subr.mxu0 %v1879
    %3398 = vmatpush1.msra.mxu0 %v1878
    %3399 = vmatprep.subr.mxu0 %v1885
    %3400 = vmatpush1.msra.mxu0 %v1884
    %3401 = vmatprep.subr.mxu0 %v1891
    %3402 = vmatpush1.msra.mxu0 %v1890
    %3403 = vmatprep.subr.mxu0 %v1897
    %3404 = vmatpush1.msra.mxu0 %v1896
    %3405 = vmatprep.subr.mxu0 %v1903
    %3406 = vmatpush1.msra.mxu0 %v1902
    %3407 = vmatprep.subr.mxu0 %v1909
    %3408 = vmatpush1.msra.mxu0 %v1908
    %3409 = vmatprep.subr.mxu0 %v1915
    %3410 = vmatpush1.msra.mxu0 %v1914
    %3411 = vmatprep.subr.mxu0 %v1921
    %3412 = vmatpush1.msra.mxu0 %v1920
    %3413 = vmatprep.subr.mxu0 %v1927
    %3414 = vmatpush1.msra.mxu0 %v1926
    %3415 = vmatprep.subr.mxu0 %v1933
    %3416 = vmatpush1.msra.mxu0 %v1932
    %3417 = vmatprep.subr.mxu0 0.0
    %3418 = vmatpush1.msra.mxu0 0.0
    %3419 = vmatprep.subr.mxu0 0.0
    %3420 = vmatpush1.msra.mxu0 0.0
    %3421 = vmatprep.subr.mxu0 0.0
    %3422 = vmatpush1.msra.mxu0 0.0
    %3423 = vmatprep.subr.mxu0 0.0
    %3424 = vmatpush1.msra.mxu0 0.0
    %3425 = vmatprep.subr.mxu0 0.0
    %3426 = vmatpush1.msra.mxu0 0.0
    %3427 = vmatprep.subr.mxu0 0.0
    %3428 = vmatpush1.msra.mxu0 0.0
    %3429 = vmatprep.subr.mxu0 0.0
    %3430 = vmatpush1.msra.mxu0 0.0
    %3431 = vmatprep.subr.mxu0 0.0
    %3432 = vmatpush1.msra.mxu0 0.0
    %3433 = vmatprep.subr.mxu0 0.0
    %3434 = vmatpush1.msra.mxu0 0.0
    %3435 = vmatprep.subr.mxu0 0.0
    %3436 = vmatpush1.msra.mxu0 0.0
    %3437 = vmatprep.subr.mxu0 0.0
    %3438 = vmatpush1.msra.mxu0 0.0
    %3439 = vmatprep.subr.mxu0 0.0
    %3440 = vmatpush1.msra.mxu0 0.0
    %3441 = vmatprep.subr.mxu0 0.0
    %3442 = vmatpush1.msra.mxu0 0.0
    %3443 = vmatprep.subr.mxu0 0.0
    %3444 = vmatpush1.msra.mxu0 0.0
    %3445 = vmatprep.subr.mxu0 0.0
    %3446 = vmatpush1.msra.mxu0 0.0
    %3447 = vmatprep.subr.mxu0 0.0
    %3448 = vmatpush1.msra.mxu0 0.0
    %3449 = vmatprep.mubr.f32.mxu0 0.0
    %3450 = vmatmul.mubr.f32.gmra.mrb[0].mxu0 %v3382
    %v3451 = vpop.f32.mrb[0].mxu0
    %v3452 = vadd.f32 %v1943, %v3451
    %v3453 = vpop.f32.mrb[0].mxu0
    %v3454 = vadd.f32 %v1947, %v3453
    %3455 = vdwg.mxu0
    %3456 = vmatprep.subr.mxu0 %v1845
    %3457 = vmatpush1.msra.mxu0 %v1844
    %3458 = vmatprep.subr.mxu0 %v1851
    %3459 = vmatpush1.msra.mxu0 %v1850
    %3460 = vmatprep.subr.mxu0 %v1857
    %3461 = vmatpush1.msra.mxu0 %v1856
    %3462 = vmatprep.subr.mxu0 %v1863
    %3463 = vmatpush1.msra.mxu0 %v1862
    %3464 = vmatprep.subr.mxu0 %v1869
    %3465 = vmatpush1.msra.mxu0 %v1868
    %3466 = vmatprep.subr.mxu0 %v1875
    %3467 = vmatpush1.msra.mxu0 %v1874
    %3468 = vmatprep.subr.mxu0 %v1881
    %3469 = vmatpush1.msra.mxu0 %v1880
    %3470 = vmatprep.subr.mxu0 %v1887
    %3471 = vmatpush1.msra.mxu0 %v1886
    %3472 = vmatprep.subr.mxu0 %v1893
    %3473 = vmatpush1.msra.mxu0 %v1892
    %3474 = vmatprep.subr.mxu0 %v1899
    %3475 = vmatpush1.msra.mxu0 %v1898
    %3476 = vmatprep.subr.mxu0 %v1905
    %3477 = vmatpush1.msra.mxu0 %v1904
    %3478 = vmatprep.subr.mxu0 %v1911
    %3479 = vmatpush1.msra.mxu0 %v1910
    %3480 = vmatprep.subr.mxu0 %v1917
    %3481 = vmatpush1.msra.mxu0 %v1916
    %3482 = vmatprep.subr.mxu0 %v1923
    %3483 = vmatpush1.msra.mxu0 %v1922
    %3484 = vmatprep.subr.mxu0 %v1929
    %3485 = vmatpush1.msra.mxu0 %v1928
    %3486 = vmatprep.subr.mxu0 %v1935
    %3487 = vmatpush1.msra.mxu0 %v1934
    %3488 = vmatprep.subr.mxu0 0.0
    %3489 = vmatpush1.msra.mxu0 0.0
    %3490 = vmatprep.subr.mxu0 0.0
    %3491 = vmatpush1.msra.mxu0 0.0
    %3492 = vmatprep.subr.mxu0 0.0
    %3493 = vmatpush1.msra.mxu0 0.0
    %3494 = vmatprep.subr.mxu0 0.0
    %3495 = vmatpush1.msra.mxu0 0.0
    %3496 = vmatprep.subr.mxu0 0.0
    %3497 = vmatpush1.msra.mxu0 0.0
    %3498 = vmatprep.subr.mxu0 0.0
    %3499 = vmatpush1.msra.mxu0 0.0
    %3500 = vmatprep.subr.mxu0 0.0
    %3501 = vmatpush1.msra.mxu0 0.0
    %3502 = vmatprep.subr.mxu0 0.0
    %3503 = vmatpush1.msra.mxu0 0.0
    %3504 = vmatprep.subr.mxu0 0.0
    %3505 = vmatpush1.msra.mxu0 0.0
    %3506 = vmatprep.subr.mxu0 0.0
    %3507 = vmatpush1.msra.mxu0 0.0
    %3508 = vmatprep.subr.mxu0 0.0
    %3509 = vmatpush1.msra.mxu0 0.0
    %3510 = vmatprep.subr.mxu0 0.0
    %3511 = vmatpush1.msra.mxu0 0.0
    %3512 = vmatprep.subr.mxu0 0.0
    %3513 = vmatpush1.msra.mxu0 0.0
    %3514 = vmatprep.subr.mxu0 0.0
    %3515 = vmatpush1.msra.mxu0 0.0
    %3516 = vmatprep.subr.mxu0 0.0
    %3517 = vmatpush1.msra.mxu0 0.0
    %3518 = vmatprep.subr.mxu0 0.0
    %3519 = vmatpush1.msra.mxu0 0.0
    %3520 = vmatprep.mubr.f32.mxu0 0.0
    %3521 = vmatmul.mubr.f32.gmra.mrb[0].mxu0 %v3382
    %v3522 = vpop.f32.mrb[0].mxu0
    %v3523 = vadd.f32 %v1951, %v3522
    %v3524 = vpop.f32.mrb[0].mxu0
    %v3525 = vadd.f32 %v1955, %v3524
    %3526 = vdwg.mxu0
    %3527 = vmatprep.subr.mxu0 %v1847
    %3528 = vmatpush1.msra.mxu0 %v1846
    %3529 = vmatprep.subr.mxu0 %v1853
    %3530 = vmatpush1.msra.mxu0 %v1852
    %3531 = vmatprep.subr.mxu0 %v1859
    %3532 = vmatpush1.msra.mxu0 %v1858
    %3533 = vmatprep.subr.mxu0 %v1865
    %3534 = vmatpush1.msra.mxu0 %v1864
    %3535 = vmatprep.subr.mxu0 %v1871
    %3536 = vmatpush1.msra.mxu0 %v1870
    %3537 = vmatprep.subr.mxu0 %v1877
    %3538 = vmatpush1.msra.mxu0 %v1876
    %3539 = vmatprep.subr.mxu0 %v1883
    %3540 = vmatpush1.msra.mxu0 %v1882
    %3541 = vmatprep.subr.mxu0 %v1889
    %3542 = vmatpush1.msra.mxu0 %v1888
    %3543 = vmatprep.subr.mxu0 %v1895
    %3544 = vmatpush1.msra.mxu0 %v1894
    %3545 = vmatprep.subr.mxu0 %v1901
    %3546 = vmatpush1.msra.mxu0 %v1900
    %3547 = vmatprep.subr.mxu0 %v1907
    %3548 = vmatpush1.msra.mxu0 %v1906
    %3549 = vmatprep.subr.mxu0 %v1913
    %3550 = vmatpush1.msra.mxu0 %v1912
    %3551 = vmatprep.subr.mxu0 %v1919
    %3552 = vmatpush1.msra.mxu0 %v1918
    %3553 = vmatprep.subr.mxu0 %v1925
    %3554 = vmatpush1.msra.mxu0 %v1924
    %3555 = vmatprep.subr.mxu0 %v1931
    %3556 = vmatpush1.msra.mxu0 %v1930
    %3557 = vmatprep.subr.mxu0 %v1937
    %3558 = vmatpush1.msra.mxu0 %v1936
    %3559 = vmatprep.subr.mxu0 0.0
    %3560 = vmatpush1.msra.mxu0 0.0
    %3561 = vmatprep.subr.mxu0 0.0
    %3562 = vmatpush1.msra.mxu0 0.0
    %3563 = vmatprep.subr.mxu0 0.0
    %3564 = vmatpush1.msra.mxu0 0.0
    %3565 = vmatprep.subr.mxu0 0.0
    %3566 = vmatpush1.msra.mxu0 0.0
    %3567 = vmatprep.subr.mxu0 0.0
    %3568 = vmatpush1.msra.mxu0 0.0
    %3569 = vmatprep.subr.mxu0 0.0
    %3570 = vmatpush1.msra.mxu0 0.0
    %3571 = vmatprep.subr.mxu0 0.0
    %3572 = vmatpush1.msra.mxu0 0.0
    %3573 = vmatprep.subr.mxu0 0.0
    %3574 = vmatpush1.msra.mxu0 0.0
    %3575 = vmatprep.subr.mxu0 0.0
    %3576 = vmatpush1.msra.mxu0 0.0
    %3577 = vmatprep.subr.mxu0 0.0
    %3578 = vmatpush1.msra.mxu0 0.0
    %3579 = vmatprep.subr.mxu0 0.0
    %3580 = vmatpush1.msra.mxu0 0.0
    %3581 = vmatprep.subr.mxu0 0.0
    %3582 = vmatpush1.msra.mxu0 0.0
    %3583 = vmatprep.subr.mxu0 0.0
    %3584 = vmatpush1.msra.mxu0 0.0
    %3585 = vmatprep.subr.mxu0 0.0
    %3586 = vmatpush1.msra.mxu0 0.0
    %3587 = vmatprep.subr.mxu0 0.0
    %3588 = vmatpush1.msra.mxu0 0.0
    %3589 = vmatprep.subr.mxu0 0.0
    %3590 = vmatpush1.msra.mxu0 0.0
    %3591 = vmatprep.mubr.f32.mxu0 0.0
    %3592 = vmatmul.mubr.f32.gmra.mrb[0].mxu0 %v3382
    %v3593 = vpop.f32.mrb[0].mxu0
    %v3594 = vadd.f32 %v1959, %v3593
    %v3595 = vpop.f32.mrb[0].mxu0
    %v3596 = vadd.f32 %v1963, %v3595
    %3597 = vdwg.mxu0
    %v3598 = vadd.f32 %v3452, %v3525
    %v3599 = vxor.u32 %v3598, 2147483648
    %v3600 = vmul.f32 %v3599, 1.442695
    %v3601 = vpow.pop %v3600
    %v3602 = vadd.f32 %v3601, 1.0
    %v3603 = vrcp.pop %v3602
    %v3604 = vmul.f32 1.0, %v3603
    %v3605 = vadd.f32 %v3454, %v3594
    %v3606 = vxor.u32 %v3605, 2147483648
    %v3607 = vmul.f32 %v3606, 1.442695
    %v3608 = vpow.pop %v3607
    %v3609 = vadd.f32 %v3608, 1.0
    %v3610 = vrcp.pop %v3609
    %v3611 = vmul.f32 1.0, %v3610
    %v3612 = vmul.f32 %v3604, %v3596
    %v3613 = vadd.f32 %v3523, %v3612
    %v3614 = vtanh.pop %v3613
    %v3615 = vsub.f32 1.0, %v3611
    %v3616 = vmul.f32 %v3615, %v3614
    %v3617 = vmul.f32 %v3611, %v3382
    %v3618 = vadd.f32 %v3616, %v3617
    %s3619 = scalar_lea.vmem [#allocation5], 48
    %3620 = vst [vmem:[%s3619] sm:$0xff] %v3618
    %3621 = vmatprep.subr.mxu0 %v1843
    %3622 = vmatpush1.msra.mxu0 %v1842
    %3623 = vmatprep.subr.mxu0 %v1849
    %3624 = vmatpush1.msra.mxu0 %v1848
    %3625 = vmatprep.subr.mxu0 %v1855
    %3626 = vmatpush1.msra.mxu0 %v1854
    %3627 = vmatprep.subr.mxu0 %v1861
    %3628 = vmatpush1.msra.mxu0 %v1860
    %3629 = vmatprep.subr.mxu0 %v1867
    %3630 = vmatpush1.msra.mxu0 %v1866
    %3631 = vmatprep.subr.mxu0 %v1873
    %3632 = vmatpush1.msra.mxu0 %v1872
    %3633 = vmatprep.subr.mxu0 %v1879
    %3634 = vmatpush1.msra.mxu0 %v1878
    %3635 = vmatprep.subr.mxu0 %v1885
    %3636 = vmatpush1.msra.mxu0 %v1884
    %3637 = vmatprep.subr.mxu0 %v1891
    %3638 = vmatpush1.msra.mxu0 %v1890
    %3639 = vmatprep.subr.mxu0 %v1897
    %3640 = vmatpush1.msra.mxu0 %v1896
    %3641 = vmatprep.subr.mxu0 %v1903
    %3642 = vmatpush1.msra.mxu0 %v1902
    %3643 = vmatprep.subr.mxu0 %v1909
    %3644 = vmatpush1.msra.mxu0 %v1908
    %3645 = vmatprep.subr.mxu0 %v1915
    %3646 = vmatpush1.msra.mxu0 %v1914
    %3647 = vmatprep.subr.mxu0 %v1921
    %3648 = vmatpush1.msra.mxu0 %v1920
    %3649 = vmatprep.subr.mxu0 %v1927
    %3650 = vmatpush1.msra.mxu0 %v1926
    %3651 = vmatprep.subr.mxu0 %v1933
    %3652 = vmatpush1.msra.mxu0 %v1932
    %3653 = vmatprep.subr.mxu0 0.0
    %3654 = vmatpush1.msra.mxu0 0.0
    %3655 = vmatprep.subr.mxu0 0.0
    %3656 = vmatpush1.msra.mxu0 0.0
    %3657 = vmatprep.subr.mxu0 0.0
    %3658 = vmatpush1.msra.mxu0 0.0
    %3659 = vmatprep.subr.mxu0 0.0
    %3660 = vmatpush1.msra.mxu0 0.0
    %3661 = vmatprep.subr.mxu0 0.0
    %3662 = vmatpush1.msra.mxu0 0.0
    %3663 = vmatprep.subr.mxu0 0.0
    %3664 = vmatpush1.msra.mxu0 0.0
    %3665 = vmatprep.subr.mxu0 0.0
    %3666 = vmatpush1.msra.mxu0 0.0
    %3667 = vmatprep.subr.mxu0 0.0
    %3668 = vmatpush1.msra.mxu0 0.0
    %3669 = vmatprep.subr.mxu0 0.0
    %3670 = vmatpush1.msra.mxu0 0.0
    %3671 = vmatprep.subr.mxu0 0.0
    %3672 = vmatpush1.msra.mxu0 0.0
    %3673 = vmatprep.subr.mxu0 0.0
    %3674 = vmatpush1.msra.mxu0 0.0
    %3675 = vmatprep.subr.mxu0 0.0
    %3676 = vmatpush1.msra.mxu0 0.0
    %3677 = vmatprep.subr.mxu0 0.0
    %3678 = vmatpush1.msra.mxu0 0.0
    %3679 = vmatprep.subr.mxu0 0.0
    %3680 = vmatpush1.msra.mxu0 0.0
    %3681 = vmatprep.subr.mxu0 0.0
    %3682 = vmatpush1.msra.mxu0 0.0
    %3683 = vmatprep.subr.mxu0 0.0
    %3684 = vmatpush1.msra.mxu0 0.0
    %3685 = vmatprep.mubr.f32.mxu0 0.0
    %3686 = vmatmul.mubr.f32.gmra.mrb[0].mxu0 %v3618
    %v3687 = vpop.f32.mrb[0].mxu0
    %v3688 = vadd.f32 %v1943, %v3687
    %v3689 = vpop.f32.mrb[0].mxu0
    %v3690 = vadd.f32 %v1947, %v3689
    %3691 = vdwg.mxu0
    %3692 = vmatprep.subr.mxu0 %v1845
    %3693 = vmatpush1.msra.mxu0 %v1844
    %3694 = vmatprep.subr.mxu0 %v1851
    %3695 = vmatpush1.msra.mxu0 %v1850
    %3696 = vmatprep.subr.mxu0 %v1857
    %3697 = vmatpush1.msra.mxu0 %v1856
    %3698 = vmatprep.subr.mxu0 %v1863
    %3699 = vmatpush1.msra.mxu0 %v1862
    %3700 = vmatprep.subr.mxu0 %v1869
    %3701 = vmatpush1.msra.mxu0 %v1868
    %3702 = vmatprep.subr.mxu0 %v1875
    %3703 = vmatpush1.msra.mxu0 %v1874
    %3704 = vmatprep.subr.mxu0 %v1881
    %3705 = vmatpush1.msra.mxu0 %v1880
    %3706 = vmatprep.subr.mxu0 %v1887
    %3707 = vmatpush1.msra.mxu0 %v1886
    %3708 = vmatprep.subr.mxu0 %v1893
    %3709 = vmatpush1.msra.mxu0 %v1892
    %3710 = vmatprep.subr.mxu0 %v1899
    %3711 = vmatpush1.msra.mxu0 %v1898
    %3712 = vmatprep.subr.mxu0 %v1905
    %3713 = vmatpush1.msra.mxu0 %v1904
    %3714 = vmatprep.subr.mxu0 %v1911
    %3715 = vmatpush1.msra.mxu0 %v1910
    %3716 = vmatprep.subr.mxu0 %v1917
    %3717 = vmatpush1.msra.mxu0 %v1916
    %3718 = vmatprep.subr.mxu0 %v1923
    %3719 = vmatpush1.msra.mxu0 %v1922
    %3720 = vmatprep.subr.mxu0 %v1929
    %3721 = vmatpush1.msra.mxu0 %v1928
    %3722 = vmatprep.subr.mxu0 %v1935
    %3723 = vmatpush1.msra.mxu0 %v1934
    %3724 = vmatprep.subr.mxu0 0.0
    %3725 = vmatpush1.msra.mxu0 0.0
    %3726 = vmatprep.subr.mxu0 0.0
    %3727 = vmatpush1.msra.mxu0 0.0
    %3728 = vmatprep.subr.mxu0 0.0
    %3729 = vmatpush1.msra.mxu0 0.0
    %3730 = vmatprep.subr.mxu0 0.0
    %3731 = vmatpush1.msra.mxu0 0.0
    %3732 = vmatprep.subr.mxu0 0.0
    %3733 = vmatpush1.msra.mxu0 0.0
    %3734 = vmatprep.subr.mxu0 0.0
    %3735 = vmatpush1.msra.mxu0 0.0
    %3736 = vmatprep.subr.mxu0 0.0
    %3737 = vmatpush1.msra.mxu0 0.0
    %3738 = vmatprep.subr.mxu0 0.0
    %3739 = vmatpush1.msra.mxu0 0.0
    %3740 = vmatprep.subr.mxu0 0.0
    %3741 = vmatpush1.msra.mxu0 0.0
    %3742 = vmatprep.subr.mxu0 0.0
    %3743 = vmatpush1.msra.mxu0 0.0
    %3744 = vmatprep.subr.mxu0 0.0
    %3745 = vmatpush1.msra.mxu0 0.0
    %3746 = vmatprep.subr.mxu0 0.0
    %3747 = vmatpush1.msra.mxu0 0.0
    %3748 = vmatprep.subr.mxu0 0.0
    %3749 = vmatpush1.msra.mxu0 0.0
    %3750 = vmatprep.subr.mxu0 0.0
    %3751 = vmatpush1.msra.mxu0 0.0
    %3752 = vmatprep.subr.mxu0 0.0
    %3753 = vmatpush1.msra.mxu0 0.0
    %3754 = vmatprep.subr.mxu0 0.0
    %3755 = vmatpush1.msra.mxu0 0.0
    %3756 = vmatprep.mubr.f32.mxu0 0.0
    %3757 = vmatmul.mubr.f32.gmra.mrb[0].mxu0 %v3618
    %v3758 = vpop.f32.mrb[0].mxu0
    %v3759 = vadd.f32 %v1951, %v3758
    %v3760 = vpop.f32.mrb[0].mxu0
    %v3761 = vadd.f32 %v1955, %v3760
    %3762 = vdwg.mxu0
    %3763 = vmatprep.subr.mxu0 %v1847
    %3764 = vmatpush1.msra.mxu0 %v1846
    %3765 = vmatprep.subr.mxu0 %v1853
    %3766 = vmatpush1.msra.mxu0 %v1852
    %3767 = vmatprep.subr.mxu0 %v1859
    %3768 = vmatpush1.msra.mxu0 %v1858
    %3769 = vmatprep.subr.mxu0 %v1865
    %3770 = vmatpush1.msra.mxu0 %v1864
    %3771 = vmatprep.subr.mxu0 %v1871
    %3772 = vmatpush1.msra.mxu0 %v1870
    %3773 = vmatprep.subr.mxu0 %v1877
    %3774 = vmatpush1.msra.mxu0 %v1876
    %3775 = vmatprep.subr.mxu0 %v1883
    %3776 = vmatpush1.msra.mxu0 %v1882
    %3777 = vmatprep.subr.mxu0 %v1889
    %3778 = vmatpush1.msra.mxu0 %v1888
    %3779 = vmatprep.subr.mxu0 %v1895
    %3780 = vmatpush1.msra.mxu0 %v1894
    %3781 = vmatprep.subr.mxu0 %v1901
    %3782 = vmatpush1.msra.mxu0 %v1900
    %3783 = vmatprep.subr.mxu0 %v1907
    %3784 = vmatpush1.msra.mxu0 %v1906
    %3785 = vmatprep.subr.mxu0 %v1913
    %3786 = vmatpush1.msra.mxu0 %v1912
    %3787 = vmatprep.subr.mxu0 %v1919
    %3788 = vmatpush1.msra.mxu0 %v1918
    %3789 = vmatprep.subr.mxu0 %v1925
    %3790 = vmatpush1.msra.mxu0 %v1924
    %3791 = vmatprep.subr.mxu0 %v1931
    %3792 = vmatpush1.msra.mxu0 %v1930
    %3793 = vmatprep.subr.mxu0 %v1937
    %3794 = vmatpush1.msra.mxu0 %v1936
    %3795 = vmatprep.subr.mxu0 0.0
    %3796 = vmatpush1.msra.mxu0 0.0
    %3797 = vmatprep.subr.mxu0 0.0
    %3798 = vmatpush1.msra.mxu0 0.0
    %3799 = vmatprep.subr.mxu0 0.0
    %3800 = vmatpush1.msra.mxu0 0.0
    %3801 = vmatprep.subr.mxu0 0.0
    %3802 = vmatpush1.msra.mxu0 0.0
    %3803 = vmatprep.subr.mxu0 0.0
    %3804 = vmatpush1.msra.mxu0 0.0
    %3805 = vmatprep.subr.mxu0 0.0
    %3806 = vmatpush1.msra.mxu0 0.0
    %3807 = vmatprep.subr.mxu0 0.0
    %3808 = vmatpush1.msra.mxu0 0.0
    %3809 = vmatprep.subr.mxu0 0.0
    %3810 = vmatpush1.msra.mxu0 0.0
    %3811 = vmatprep.subr.mxu0 0.0
    %3812 = vmatpush1.msra.mxu0 0.0
    %3813 = vmatprep.subr.mxu0 0.0
    %3814 = vmatpush1.msra.mxu0 0.0
    %3815 = vmatprep.subr.mxu0 0.0
    %3816 = vmatpush1.msra.mxu0 0.0
    %3817 = vmatprep.subr.mxu0 0.0
    %3818 = vmatpush1.msra.mxu0 0.0
    %3819 = vmatprep.subr.mxu0 0.0
    %3820 = vmatpush1.msra.mxu0 0.0
    %3821 = vmatprep.subr.mxu0 0.0
    %3822 = vmatpush1.msra.mxu0 0.0
    %3823 = vmatprep.subr.mxu0 0.0
    %3824 = vmatpush1.msra.mxu0 0.0
    %3825 = vmatprep.subr.mxu0 0.0
    %3826 = vmatpush1.msra.mxu0 0.0
    %3827 = vmatprep.mubr.f32.mxu0 0.0
    %3828 = vmatmul.mubr.f32.gmra.mrb[0].mxu0 %v3618
    %v3829 = vpop.f32.mrb[0].mxu0
    %v3830 = vadd.f32 %v1959, %v3829
    %v3831 = vpop.f32.mrb[0].mxu0
    %v3832 = vadd.f32 %v1963, %v3831
    %3833 = vdwg.mxu0
    %v3834 = vadd.f32 %v3688, %v3761
    %v3835 = vxor.u32 %v3834, 2147483648
    %v3836 = vmul.f32 %v3835, 1.442695
    %v3837 = vpow.pop %v3836
    %v3838 = vadd.f32 %v3837, 1.0
    %v3839 = vrcp.pop %v3838
    %v3840 = vmul.f32 1.0, %v3839
    %v3841 = vadd.f32 %v3690, %v3830
    %v3842 = vxor.u32 %v3841, 2147483648
    %v3843 = vmul.f32 %v3842, 1.442695
    %v3844 = vpow.pop %v3843
    %v3845 = vadd.f32 %v3844, 1.0
    %v3846 = vrcp.pop %v3845
    %v3847 = vmul.f32 1.0, %v3846
    %v3848 = vmul.f32 %v3840, %v3832
    %v3849 = vadd.f32 %v3759, %v3848
    %v3850 = vtanh.pop %v3849
    %v3851 = vsub.f32 1.0, %v3847
    %v3852 = vmul.f32 %v3851, %v3850
    %v3853 = vmul.f32 %v3847, %v3618
    %v3854 = vadd.f32 %v3852, %v3853
    %s3855 = scalar_lea.vmem [#allocation5], 56
    %3856 = vst [vmem:[%s3855] sm:$0xff] %v3854
    %v3857 = vld [vmem:[#allocation5] sm:$0xff]
    %v3858 = vld [vmem:[#allocation5 + $0x8] sm:$0xff]
    %v3859 = vld [vmem:[#allocation5 + $0x10] sm:$0xff]
    %v3860 = vld [vmem:[#allocation5 + $0x18] sm:$0xff]
    %v3861 = vld [vmem:[#allocation5 + $0x20] sm:$0xff]
    %v3862 = vld [vmem:[#allocation5 + $0x28] sm:$0xff]
    %v3863 = vld [vmem:[#allocation5 + $0x30] sm:$0xff]
    %v3864 = vld [vmem:[#allocation5 + $0x38] sm:$0xff]
    %v3865 = vld [vmem:[#allocation15] sm:$0xff]
    %v3866 = vld [vmem:[#allocation15 + $0x8] sm:$0xff]
    %v3867 = vld [vmem:[#allocation15 + $0x10] sm:$0xff]
    %v3868 = vld [vmem:[#allocation15 + $0x18] sm:$0xff]
    %v3869 = vld [vmem:[#allocation15 + $0x20] sm:$0xff]
    %v3870 = vld [vmem:[#allocation15 + $0x28] sm:$0xff]
    %v3871 = vld [vmem:[#allocation15 + $0x30] sm:$0xff]
    %v3872 = vld [vmem:[#allocation15 + $0x38] sm:$0xff]
    %v3873 = vld [vmem:[#allocation15 + $0x40] sm:$0xff]
    %v3874 = vld [vmem:[#allocation15 + $0x48] sm:$0xff]
    %v3875 = vld [vmem:[#allocation15 + $0x50] sm:$0xff]
    %v3876 = vld [vmem:[#allocation15 + $0x58] sm:$0xff]
    %v3877 = vld [vmem:[#allocation15 + $0x60] sm:$0xff]
    %v3878 = vld [vmem:[#allocation15 + $0x68] sm:$0xff]
    %v3879 = vld [vmem:[#allocation15 + $0x70] sm:$0xff]
    %v3880 = vld [vmem:[#allocation15 + $0x78] sm:$0xff]
    %v3881 = vld [vmem:[%s9] sm:$0x1]
    %v3883 = vlaneseq
    %v3884 = vshrl.u32 %v3883, 7
    %v3885 = vsub.s32 0, %v3884
    %v3886 = vrot.slane %v3881, %v3885
    %3888 = vmatprep.subr.mxu0 0.0
    %3889 = vmatpush1.msra.mxu0 %v3865
    %3890 = vmatprep.subr.mxu0 0.0
    %3891 = vmatpush1.msra.mxu0 %v3866
    %3892 = vmatprep.subr.mxu0 0.0
    %3893 = vmatpush1.msra.mxu0 %v3867
    %3894 = vmatprep.subr.mxu0 0.0
    %3895 = vmatpush1.msra.mxu0 %v3868
    %3896 = vmatprep.subr.mxu0 0.0
    %3897 = vmatpush1.msra.mxu0 %v3869
    %3898 = vmatprep.subr.mxu0 0.0
    %3899 = vmatpush1.msra.mxu0 %v3870
    %3900 = vmatprep.subr.mxu0 0.0
    %3901 = vmatpush1.msra.mxu0 %v3871
    %3902 = vmatprep.subr.mxu0 0.0
    %3903 = vmatpush1.msra.mxu0 %v3872
    %3904 = vmatprep.subr.mxu0 0.0
    %3905 = vmatpush1.msra.mxu0 %v3873
    %3906 = vmatprep.subr.mxu0 0.0
    %3907 = vmatpush1.msra.mxu0 %v3874
    %3908 = vmatprep.subr.mxu0 0.0
    %3909 = vmatpush1.msra.mxu0 %v3875
    %3910 = vmatprep.subr.mxu0 0.0
    %3911 = vmatpush1.msra.mxu0 %v3876
    %3912 = vmatprep.subr.mxu0 0.0
    %3913 = vmatpush1.msra.mxu0 %v3877
    %3914 = vmatprep.subr.mxu0 0.0
    %3915 = vmatpush1.msra.mxu0 %v3878
    %3916 = vmatprep.subr.mxu0 0.0
    %3917 = vmatpush1.msra.mxu0 %v3879
    %3918 = vmatprep.subr.mxu0 0.0
    %3919 = vmatpush1.msra.mxu0 %v3880
    %3920 = vmatprep.subr.mxu0 0.0
    %3921 = vmatpush1.msra.mxu0 0.0
    %3922 = vmatprep.subr.mxu0 0.0
    %3923 = vmatpush1.msra.mxu0 0.0
    %3924 = vmatprep.subr.mxu0 0.0
    %3925 = vmatpush1.msra.mxu0 0.0
    %3926 = vmatprep.subr.mxu0 0.0
    %3927 = vmatpush1.msra.mxu0 0.0
    %3928 = vmatprep.subr.mxu0 0.0
    %3929 = vmatpush1.msra.mxu0 0.0
    %3930 = vmatprep.subr.mxu0 0.0
    %3931 = vmatpush1.msra.mxu0 0.0
    %3932 = vmatprep.subr.mxu0 0.0
    %3933 = vmatpush1.msra.mxu0 0.0
    %3934 = vmatprep.subr.mxu0 0.0
    %3935 = vmatpush1.msra.mxu0 0.0
    %3936 = vmatprep.subr.mxu0 0.0
    %3937 = vmatpush1.msra.mxu0 0.0
    %3938 = vmatprep.subr.mxu0 0.0
    %3939 = vmatpush1.msra.mxu0 0.0
    %3940 = vmatprep.subr.mxu0 0.0
    %3941 = vmatpush1.msra.mxu0 0.0
    %3942 = vmatprep.subr.mxu0 0.0
    %3943 = vmatpush1.msra.mxu0 0.0
    %3944 = vmatprep.subr.mxu0 0.0
    %3945 = vmatpush1.msra.mxu0 0.0
    %3946 = vmatprep.subr.mxu0 0.0
    %3947 = vmatpush1.msra.mxu0 0.0
    %3948 = vmatprep.subr.mxu0 0.0
    %3949 = vmatpush1.msra.mxu0 0.0
    %3950 = vmatprep.subr.mxu0 0.0
    %3951 = vmatpush1.msra.mxu0 0.0
    %3952 = vmatprep.mubr.f32.mxu0 0.0
    %3953 = vmatmul.mubr.f32.gmra.mrb[0].mxu0 %v3857
    %v3954 = vpop.f32.mrb[0].mxu0
    %v3955 = vadd.f32 %v3886, %v3954
    %v3956 = vpop.f32.mrb[0].mxu0
    %3957 = vmatprep.mubr.f32.mxu0 0.0
    %3958 = vmatmul.mubr.f32.gmra.mrb[0].mxu0 %v3858
    %v3959 = vpop.f32.mrb[0].mxu0
    %v3960 = vadd.f32 %v3886, %v3959
    %v3961 = vpop.f32.mrb[0].mxu0
    %3962 = vmatprep.mubr.f32.mxu0 0.0
    %3963 = vmatmul.mubr.f32.gmra.mrb[0].mxu0 %v3859
    %v3964 = vpop.f32.mrb[0].mxu0
    %v3965 = vadd.f32 %v3886, %v3964
    %v3966 = vpop.f32.mrb[0].mxu0
    %3967 = vmatprep.mubr.f32.mxu0 0.0
    %3968 = vmatmul.mubr.f32.gmra.mrb[0].mxu0 %v3860
    %v3969 = vpop.f32.mrb[0].mxu0
    %v3970 = vadd.f32 %v3886, %v3969
    %v3971 = vpop.f32.mrb[0].mxu0
    %3972 = vmatprep.mubr.f32.mxu0 0.0
    %3973 = vmatmul.mubr.f32.gmra.mrb[0].mxu0 %v3861
    %v3974 = vpop.f32.mrb[0].mxu0
    %v3975 = vadd.f32 %v3886, %v3974
    %v3976 = vpop.f32.mrb[0].mxu0
    %3977 = vmatprep.mubr.f32.mxu0 0.0
    %3978 = vmatmul.mubr.f32.gmra.mrb[0].mxu0 %v3862
    %v3979 = vpop.f32.mrb[0].mxu0
    %v3980 = vadd.f32 %v3886, %v3979
    %v3981 = vpop.f32.mrb[0].mxu0
    %3982 = vmatprep.mubr.f32.mxu0 0.0
    %3983 = vmatmul.mubr.f32.gmra.mrb[0].mxu0 %v3863
    %v3984 = vpop.f32.mrb[0].mxu0
    %v3985 = vadd.f32 %v3886, %v3984
    %v3986 = vpop.f32.mrb[0].mxu0
    %3987 = vmatprep.mubr.f32.mxu0 0.0
    %3988 = vmatmul.mubr.f32.gmra.mrb[0].mxu0 %v3864
    %v3989 = vpop.f32.mrb[0].mxu0
    %v3990 = vadd.f32 %v3886, %v3989
    %v3991 = vpop.f32.mrb[0].mxu0
    %3992 = vdwg.mxu0
    %3993 = vst [vmem:[#allocation18] sm:$0xff] %v3955
    %3994 = vst [vmem:[#allocation18 + $0x8] sm:$0xff] %v3960
    %3995 = vst [vmem:[#allocation18 + $0x10] sm:$0xff] %v3965
    %3996 = vst [vmem:[#allocation18 + $0x18] sm:$0xff] %v3970
    %3997 = vst [vmem:[#allocation18 + $0x20] sm:$0xff] %v3975
    %3998 = vst [vmem:[#allocation18 + $0x28] sm:$0xff] %v3980
    %3999 = vst [vmem:[#allocation18 + $0x30] sm:$0xff] %v3985
    %4000 = vst [vmem:[#allocation18 + $0x38] sm:$0xff] %v3990
    // Predicated region
    $region78: #{tpu_custom_call.1} parent=1 // pred_check
      _
    $region79: #{tpu_custom_call.1} parent=1 // pred_check_branch
      %4002 = sbr.rel (0) target = $region81
    $region80: #{tpu_custom_call.1} parent=1 // pred_region
      %s4004 = ssub.s32 1024, 1024
      %4005 = vsyncadd [#allocation8], %s4004
      %s4006 = sshll.u32 [#allocation18], 4
      %s4007 = int_to_ptr.vmem [resolvable:$true] %s4006
      %4012 = dma.vmem_to_hbm [thread:$0]  %s4007, 1024, %s12, [#allocation8], 128, 128, 8
    $region81: #{tpu_custom_call.1} parent=1 // pred_fallthru
      _
    // Predicated region
    $region82: #{tpu_custom_call.1} parent=1 // pred_check
      _
    $region83: #{tpu_custom_call.1} parent=1 // pred_check_branch
      %4014 = sbr.rel (0) target = $region85
    $region84: #{tpu_custom_call.1} parent=1 // pred_region
      %4015 = dma.done [#allocation8], 1024
    $region85: #{tpu_custom_call.1} parent=1 // pred_fallthru
      _
    %4016 = vsyncpa [#allocation7], 1
    %4017 = vsyncpa [#allocation10], 1
    %4018 = vsyncpa [#allocation13], 1
    %4019 = vsyncpa [#allocation16], 1
    %4020 = vsyncpa [#allocation8], 1

</llo_original>
